<compile_context>
chip_gen: v5e
topology: v5e:2x2
jax: 0.10.0
libtpu: 0.0.40
codegen_flags: <defaults>
</compile_context>

<pallas_src>
import functools

import jax
import jax.numpy as jnp
from jax.experimental import pallas as pl
from jax.experimental.pallas import tpu as pltpu


def _round_up(x, m):
    return ((x + m - 1) // m) * m


def _device_kind():
    try:
        return jax.devices()[0].device_kind.lower()
    except Exception:
        return ""


def _is_v5(kind=None):
    kind = _device_kind() if kind is None else kind
    return "v5" in kind


def _num_tensorcores(kind=None):
    kind = _device_kind() if kind is None else kind
    return 2 if ("v7" in kind or "7x" in kind) else 1


# ----------------------------------------------------------------------------
# Shared epilogue: lane-masked softmax over actor lanes, value passes through.
# ----------------------------------------------------------------------------
def _softmax_value_slab(z, action_dim):
    lane = jax.lax.broadcasted_iota(jnp.int32, z.shape, 1)
    actor_lane = lane < action_dim
    logits = jnp.where(actor_lane, z, jnp.float32(-1e30))
    m = jnp.max(logits, axis=-1, keepdims=True)
    e = jnp.exp(logits - m)                       # exactly 0 on masked lanes
    s = jnp.sum(e, axis=-1, keepdims=True)
    probs = e / s                                 # exact f32 division
    # Lanes [0, A) = probs, lane A = critic value, remaining lanes = 0.
    return jnp.where(actor_lane, probs, z)


# ----------------------------------------------------------------------------
# Kernel A (v6e / v7x): fused block-diagonal layer 2 and 3.
# ----------------------------------------------------------------------------
def ppo_kernel_fused(s_ref, w1_ref, b1_ref, w2_ref, b2_ref, w3_ref, b3_ref,
                     out_ref, *, action_dim):
    x = s_ref[...].astype(jnp.bfloat16)
    h = jnp.dot(x, w1_ref[...], preferred_element_type=jnp.float32) + b1_ref[...]
    h = jnp.maximum(h, 0.0)
    h = jnp.dot(h.astype(jnp.bfloat16), w2_ref[...],
                preferred_element_type=jnp.float32) + b2_ref[...]
    h = jnp.maximum(h, 0.0)
    z = jnp.dot(h.astype(jnp.bfloat16), w3_ref[...],
                preferred_element_type=jnp.float32) + b3_ref[...]
    out_ref[...] = _softmax_value_slab(z, action_dim).astype(out_ref.dtype)


# ----------------------------------------------------------------------------
# Kernel B (v5e): actor/critic streams kept as separate HxH matmuls so the
# 128x128 MXU never multiplies by the zero blocks of the block-diagonal.
# ----------------------------------------------------------------------------
def ppo_kernel_split(s_ref, w1_ref, b1_ref, aw2_ref, ab2_ref, cw2_ref, cb2_ref,
                     aw3_ref, cw3_ref, b3_ref, out_ref, *, action_dim,
                     hidden_dim):
    H = hidden_dim
    x = s_ref[...].astype(jnp.bfloat16)
    h = jnp.dot(x, w1_ref[...], preferred_element_type=jnp.float32) + b1_ref[...]
    h = jnp.maximum(h, 0.0)
    ha = jnp.maximum(
        jnp.dot(h[:, :H].astype(jnp.bfloat16), aw2_ref[...],
                preferred_element_type=jnp.float32) + ab2_ref[...], 0.0)
    hc = jnp.maximum(
        jnp.dot(h[:, H:].astype(jnp.bfloat16), cw2_ref[...],
                preferred_element_type=jnp.float32) + cb2_ref[...], 0.0)
    z = (jnp.dot(ha.astype(jnp.bfloat16), aw3_ref[...],
                 preferred_element_type=jnp.float32)
         + jnp.dot(hc.astype(jnp.bfloat16), cw3_ref[...],
                   preferred_element_type=jnp.float32)
         + b3_ref[...])
    out_ref[...] = _softmax_value_slab(z, action_dim).astype(out_ref.dtype)


# ----------------------------------------------------------------------------
# Wrappers
# ----------------------------------------------------------------------------
def _resident_spec(arr):
    # Constant index_map -> stays VMEM resident across grid steps (no re-DMA).
    return pl.BlockSpec(arr.shape, lambda b: (0, 0))


def ppo_agent_forward_slab(state, fused, action_dim, *, batch_tile=512,
                           split_layer2=None, min_tiles=None):
    """Returns the raw lane-dense (B, 128) bf16 slab:
    lanes [0, A) = action probs, lane A = state value, rest = 0."""
    B, state_dim = state.shape
    hidden = fused["ab2"].shape[1]
    out_pad = fused["b3"].shape[1]

    kind = _device_kind()
    if split_layer2 is None:
        split_layer2 = _is_v5(kind)
    if min_tiles is None:
        min_tiles = _num_tensorcores(kind)

    # Big tiles (fewer grid steps), but keep >= min_tiles steps on v7x so both
    # TensorCores get a share of the "parallel" batch axis.
    bt = min(batch_tile, _round_up(B, 8))
    if min_tiles > 1 and pl.cdiv(B, bt) < min_tiles and B > 8:
        bt = max(8, _round_up(pl.cdiv(B, min_tiles), 8))
    num_tiles = pl.cdiv(B, bt)          # ragged last tile handled by Pallas

    if split_layer2:
        kernel = functools.partial(ppo_kernel_split, action_dim=action_dim,
                                   hidden_dim=hidden)
        w_args = (fused["w1"], fused["b1"], fused["aw2"], fused["ab2"],
                  fused["cw2"], fused["cb2"], fused["aw3"], fused["cw3"],
                  fused["b3"])
        l2_flops = 2 * 2 * hidden * hidden
    else:
        kernel = functools.partial(ppo_kernel_fused, action_dim=action_dim)
        w_args = (fused["w1"], fused["b1"], fused["w2"], fused["b2"],
                  fused["w3"], fused["b3"])
        l2_flops = 2 * (2 * hidden) * (2 * hidden)

    in_specs = [pl.BlockSpec((bt, state_dim), lambda b: (b, 0))]
    in_specs += [_resident_spec(a) for a in w_args]
    out_spec = pl.BlockSpec((bt, out_pad), lambda b: (b, 0))

    flops_per_row = 2 * state_dim * (2 * hidden) + l2_flops \
        + 2 * (2 * hidden) * out_pad
    cost = pl.CostEstimate(
        flops=flops_per_row * B,
        transcendentals=B * out_pad,
        bytes_accessed=state.nbytes + sum(int(a.nbytes) for a in w_args)
        + B * out_pad * 2,
    )

    out = pl.pallas_call(
        kernel,
        out_shape=jax.ShapeDtypeStruct((B, out_pad), jnp.bfloat16),
        grid=(num_tiles,),
        in_specs=in_specs,
        out_specs=out_spec,
        compiler_params=pltpu.CompilerParams(
            dimension_semantics=("parallel",),
            vmem_limit_bytes=32 * 1024 * 1024),
        cost_estimate=cost,
    )(state, *w_args)
    return out


def ppo_agent_forward(state, fused, action_dim, **kwargs):
    """PyTorch-module-equivalent forward: returns (action_probs, state_value).
    Rollout-scale consumers should prefer ppo_agent_forward_slab and index the
    slab directly instead of materializing these slices."""
    B = state.shape[0]
    slab = ppo_agent_forward_slab(state, fused, action_dim, **kwargs)
    probs = slab[:B, :action_dim].astype(jnp.float32)
    value = slab[:B, action_dim:action_dim + 1].astype(jnp.float32)
    return probs, value


# ----------------------------------------------------------------------------
# Parameter construction (PyTorch-style layout) and fusion
# ----------------------------------------------------------------------------
def init_params(key, state_dim, action_dim, hidden_dim):
    """nn.Linear-default init (uniform +-1/sqrt(fan_in)); weights [in, out]."""
    def linear(k, fan_in, fan_out):
        kw, kb = jax.random.split(k)
        bound = 1.0 / jnp.sqrt(jnp.float32(fan_in))
        w = jax.random.uniform(kw, (fan_in, fan_out), jnp.float32, -bound, bound)
        b = jax.random.uniform(kb, (1, fan_out), jnp.float32, -bound, bound)
        return w, b

    keys = jax.random.split(key, 6)
    aw1, ab1 = linear(keys[0], state_dim, hidden_dim)
    aw2, ab2 = linear(keys[1], hidden_dim, hidden_dim)
    aw3, ab3 = linear(keys[2], hidden_dim, action_dim)
    cw1, cb1 = linear(keys[3], state_dim, hidden_dim)
    cw2, cb2 = linear(keys[4], hidden_dim, hidden_dim)
    cw3, cb3 = linear(keys[5], hidden_dim, 1)
    return dict(aw1=aw1, ab1=ab1, aw2=aw2, ab2=ab2, aw3=aw3, ab3=ab3,
                cw1=cw1, cb1=cb1, cw2=cw2, cb2=cb2, cw3=cw3, cb3=cb3)


def fuse_params(p):
    """Concatenate / block-diagonalize actor+critic weights.  Weights -> bf16
    (MXU inputs), biases stay f32 (added post-accumulation)."""
    H = p["aw1"].shape[1]
    A = p["aw3"].shape[1]
    out_pad = _round_up(A + 1, 128)      # lane-dense output width

    w1 = jnp.concatenate([p["aw1"], p["cw1"]], axis=1)            # (S, 2H)
    b1 = jnp.concatenate([p["ab1"], p["cb1"]], axis=1)            # (1, 2H)

    zero = jnp.zeros((H, H), jnp.float32)
    w2 = jnp.block([[p["aw2"], zero], [zero, p["cw2"]]])          # (2H, 2H)
    b2 = jnp.concatenate([p["ab2"], p["cb2"]], axis=1)            # (1, 2H)

    aw3 = jnp.zeros((H, out_pad), jnp.float32).at[:, :A].set(p["aw3"])
    cw3 = jnp.zeros((H, out_pad), jnp.float32).at[:, A].set(p["cw3"][:, 0])
    w3 = jnp.concatenate([aw3, cw3], axis=0)                      # (2H, out_pad)
    b3 = (jnp.zeros((1, out_pad), jnp.float32)
          .at[:, :A].set(p["ab3"]).at[:, A].set(p["cb3"][0, 0]))

    bf = lambda a: a.astype(jnp.bfloat16)
    return dict(
        w1=bf(w1), b1=b1,
        w2=bf(w2), b2=b2, w3=bf(w3), b3=b3,                       # fused path
        aw2=bf(p["aw2"]), ab2=p["ab2"], cw2=bf(p["cw2"]), cb2=p["cb2"],
        aw3=bf(aw3), cw3=bf(cw3),                                 # split path
    )


def reference_forward(state, p):
    """Pure-JAX f32 reference matching the PyTorch module semantics."""
    h = jnp.maximum(state @ p["aw1"] + p["ab1"], 0.0)
    h = jnp.maximum(h @ p["aw2"] + p["ab2"], 0.0)
    logits = h @ p["aw3"] + p["ab3"]
    probs = jax.nn.softmax(logits, axis=-1)
    c = jnp.maximum(state @ p["cw1"] + p["cb1"], 0.0)
    c = jnp.maximum(c @ p["cw2"] + p["cb2"], 0.0)
    value = c @ p["cw3"] + p["cb3"]
    return probs, value


if __name__ == "__main__":
    key = jax.random.PRNGKey(0)
    k_state, k_params = jax.random.split(key)

    # Batch deliberately NOT a multiple of batch_tile: exercises the ragged
    # last tile (no jnp.pad pre-pass) and gives a 2-step "parallel" grid.
    batch = 1000
    state_dim = 16
    action_dim = 8
    hidden_dim = 128   # PPOAgent default

    state = jax.random.normal(k_state, (batch, state_dim), jnp.float32)
    params = init_params(k_params, state_dim, action_dim, hidden_dim)
    fused = fuse_params(params)

    # Auto-selected layer-2 variant (fused block-diag on v6e/v7x, split on v5e).
    probs, value = ppo_agent_forward(state, fused, action_dim, batch_tile=512)
    jax.block_until_ready((probs, value))

    ref_probs, ref_value = reference_forward(state, params)

    assert probs.shape == (batch, action_dim)
    assert value.shape == (batch, 1)
    # Tolerances account for bf16 weights / MXU inputs and bf16 output slab.
    assert jnp.allclose(probs, ref_probs, atol=2e-2, rtol=2e-2), \
        float(jnp.max(jnp.abs(probs - ref_probs)))
    assert jnp.allclose(value, ref_value, atol=5e-2, rtol=5e-2), \
        float(jnp.max(jnp.abs(value - ref_value)))
    assert jnp.allclose(jnp.sum(probs, axis=-1), 1.0, atol=1e-2)

    # Also exercise the other layer-2 variant (both must compile and agree).
    probs2, value2 = ppo_agent_forward(
        state, fused, action_dim, batch_tile=512,
        split_layer2=not _is_v5())
    jax.block_until_ready((probs2, value2))
    assert jnp.allclose(probs2, probs, atol=1e-2, rtol=1e-2)
    assert jnp.allclose(value2, value, atol=2e-2, rtol=2e-2)

    print("KERNEL_OK")
</pallas_src>

<mosaic_0001>
module attributes {stable_mosaic.version = 11 : i64} {
  func.func @ppo_kernel_fused(%arg0: i32, %arg1: memref<512x16xf32, #tpu.memory_space<vmem>>, %arg2: memref<16x256xbf16, #tpu.memory_space<vmem>>, %arg3: memref<1x256xf32, #tpu.memory_space<vmem>>, %arg4: memref<256x256xbf16, #tpu.memory_space<vmem>>, %arg5: memref<1x256xf32, #tpu.memory_space<vmem>>, %arg6: memref<256x128xbf16, #tpu.memory_space<vmem>>, %arg7: memref<1x128xf32, #tpu.memory_space<vmem>>, %arg8: memref<512x128xbf16, #tpu.memory_space<vmem>>) attributes {dimension_semantics = [#tpu.dimension_semantics<parallel>], iteration_bounds = array<i64: 2>, scalar_prefetch = 0 : i64, scratch_operands = 0 : i64, tpu.core_type = #tpu.core_type<tc>, window_params = [{transform_indices = @transform_0, window_bounds = array<i64: 512, 16>}, {pipeline_mode = #tpu.pipeline_mode<synchronous>, transform_indices = @transform_1, window_bounds = array<i64: 16, 256>}, {pipeline_mode = #tpu.pipeline_mode<synchronous>, transform_indices = @transform_2, window_bounds = array<i64: 1, 256>}, {pipeline_mode = #tpu.pipeline_mode<synchronous>, transform_indices = @transform_3, window_bounds = array<i64: 256, 256>}, {pipeline_mode = #tpu.pipeline_mode<synchronous>, transform_indices = @transform_4, window_bounds = array<i64: 1, 256>}, {pipeline_mode = #tpu.pipeline_mode<synchronous>, transform_indices = @transform_5, window_bounds = array<i64: 256, 128>}, {pipeline_mode = #tpu.pipeline_mode<synchronous>, transform_indices = @transform_6, window_bounds = array<i64: 1, 128>}, {transform_indices = @transform_7, window_bounds = array<i64: 512, 128>}]} {
    %c0 = arith.constant 0 : index
    %c0_0 = arith.constant 0 : index
    %0 = vector.load %arg1[%c0, %c0_0] : memref<512x16xf32, #tpu.memory_space<vmem>>, vector<512x16xf32>
    %1 = arith.truncf %0 : vector<512x16xf32> to vector<512x16xbf16>
    %c0_1 = arith.constant 0 : index
    %c0_2 = arith.constant 0 : index
    %2 = vector.load %arg2[%c0_1, %c0_2] : memref<16x256xbf16, #tpu.memory_space<vmem>>, vector<16x256xbf16>
    %cst = arith.constant dense<0.000000e+00> : vector<512x256xf32>
    %3 = tpu.matmul %1, %2, %cst {dimension_numbers = #tpu.dot_dimension_numbers<[1], [0], [0], [1], [0, 0, 1, 1], [], []>} : vector<512x16xbf16>, vector<16x256xbf16>, vector<512x256xf32> -> vector<512x256xf32>
    %c0_3 = arith.constant 0 : index
    %c0_4 = arith.constant 0 : index
    %4 = vector.load %arg3[%c0_3, %c0_4] : memref<1x256xf32, #tpu.memory_space<vmem>>, vector<1x256xf32>
    %5 = vector.broadcast %4 : vector<1x256xf32> to vector<512x256xf32>
    %6 = arith.addf %3, %5 : vector<512x256xf32>
    %cst_5 = arith.constant 0.000000e+00 : f32
    %7 = vector.broadcast %cst_5 : f32 to vector<512x256xf32>
    %8 = arith.maximumf %6, %7 : vector<512x256xf32>
    %9 = arith.truncf %8 : vector<512x256xf32> to vector<512x256xbf16>
    %c0_6 = arith.constant 0 : index
    %c0_7 = arith.constant 0 : index
    %10 = vector.load %arg4[%c0_6, %c0_7] : memref<256x256xbf16, #tpu.memory_space<vmem>>, vector<256x256xbf16>
    %cst_8 = arith.constant dense<0.000000e+00> : vector<512x256xf32>
    %11 = tpu.matmul %9, %10, %cst_8 {dimension_numbers = #tpu.dot_dimension_numbers<[1], [0], [0], [1], [0, 0, 1, 1], [], []>} : vector<512x256xbf16>, vector<256x256xbf16>, vector<512x256xf32> -> vector<512x256xf32>
    %c0_9 = arith.constant 0 : index
    %c0_10 = arith.constant 0 : index
    %12 = vector.load %arg5[%c0_9, %c0_10] : memref<1x256xf32, #tpu.memory_space<vmem>>, vector<1x256xf32>
    %13 = vector.broadcast %12 : vector<1x256xf32> to vector<512x256xf32>
    %14 = arith.addf %11, %13 : vector<512x256xf32>
    %cst_11 = arith.constant 0.000000e+00 : f32
    %15 = vector.broadcast %cst_11 : f32 to vector<512x256xf32>
    %16 = arith.maximumf %14, %15 : vector<512x256xf32>
    %17 = arith.truncf %16 : vector<512x256xf32> to vector<512x256xbf16>
    %c0_12 = arith.constant 0 : index
    %c0_13 = arith.constant 0 : index
    %18 = vector.load %arg6[%c0_12, %c0_13] : memref<256x128xbf16, #tpu.memory_space<vmem>>, vector<256x128xbf16>
    %cst_14 = arith.constant dense<0.000000e+00> : vector<512x128xf32>
    %19 = tpu.matmul %17, %18, %cst_14 {dimension_numbers = #tpu.dot_dimension_numbers<[1], [0], [0], [1], [0, 0, 1, 1], [], []>} : vector<512x256xbf16>, vector<256x128xbf16>, vector<512x128xf32> -> vector<512x128xf32>
    %c0_15 = arith.constant 0 : index
    %c0_16 = arith.constant 0 : index
    %20 = vector.load %arg7[%c0_15, %c0_16] : memref<1x128xf32, #tpu.memory_space<vmem>>, vector<1x128xf32>
    %21 = vector.broadcast %20 : vector<1x128xf32> to vector<512x128xf32>
    %22 = arith.addf %19, %21 : vector<512x128xf32>
    %23 = tpu.iota {dimensions = array<i32: 1>} : vector<512x128xi32>
    %c8_i32 = arith.constant 8 : i32
    %24 = vector.broadcast %c8_i32 : i32 to vector<512x128xi32>
    %25 = arith.cmpi slt, %23, %24 : vector<512x128xi32>
    %cst_17 = arith.constant -1.000000e+30 : f32
    %26 = vector.broadcast %cst_17 : f32 to vector<512x128xf32>
    %27 = arith.select %25, %22, %26 : vector<512x128xi1>, vector<512x128xf32>
    %cst_18 = arith.constant dense<0xFF800000> : vector<512xf32>
    %28 = vector.multi_reduction <maximumf>, %27, %cst_18 [1] : vector<512x128xf32> to vector<512xf32>
    %29 = vector.shape_cast %28 : vector<512xf32> to vector<512x1xf32>
    %30 = vector.broadcast %29 : vector<512x1xf32> to vector<512x128xf32>
    %31 = arith.subf %27, %30 : vector<512x128xf32>
    %32 = math.exp %31 : vector<512x128xf32>
    %cst_19 = arith.constant dense<0.000000e+00> : vector<512xf32>
    %33 = vector.multi_reduction <add>, %32, %cst_19 [1] : vector<512x128xf32> to vector<512xf32>
    %34 = vector.shape_cast %33 : vector<512xf32> to vector<512x1xf32>
    %35 = vector.broadcast %34 : vector<512x1xf32> to vector<512x128xf32>
    %36 = arith.divf %32, %35 : vector<512x128xf32>
    %37 = arith.select %25, %36, %22 : vector<512x128xi1>, vector<512x128xf32>
    %38 = arith.truncf %37 : vector<512x128xf32> to vector<512x128xbf16>
    %c0_20 = arith.constant 0 : index
    %c0_21 = arith.constant 0 : index
    %39 = vector.load %arg8[%c0_20, %c0_21] : memref<512x128xbf16, #tpu.memory_space<vmem>>, vector<512x128xbf16>
    tpu.vector_store %arg8[%c0_20, %c0_21], %38 {strides = array<i32>} : memref<512x128xbf16, #tpu.memory_space<vmem>>, vector<512x128xbf16>,
    return
  }
  func.func @transform_0(%arg0: i32) -> (i32, i32) {
    %c0_i32 = arith.constant 0 : i32
    %c0_i32_0 = arith.constant 0 : i32
    return %arg0, %c0_i32 : i32, i32
  }
  func.func @transform_1(%arg0: i32) -> (i32, i32) {
    %c0_i32 = arith.constant 0 : i32
    %c0_i32_0 = arith.constant 0 : i32
    %c0_i32_1 = arith.constant 0 : i32
    return %c0_i32, %c0_i32_0 : i32, i32
  }
  func.func @transform_2(%arg0: i32) -> (i32, i32) {
    %c0_i32 = arith.constant 0 : i32
    %c0_i32_0 = arith.constant 0 : i32
    %c0_i32_1 = arith.constant 0 : i32
    return %c0_i32, %c0_i32_0 : i32, i32
  }
  func.func @transform_3(%arg0: i32) -> (i32, i32) {
    %c0_i32 = arith.constant 0 : i32
    %c0_i32_0 = arith.constant 0 : i32
    %c0_i32_1 = arith.constant 0 : i32
    return %c0_i32, %c0_i32_0 : i32, i32
  }
  func.func @transform_4(%arg0: i32) -> (i32, i32) {
    %c0_i32 = arith.constant 0 : i32
    %c0_i32_0 = arith.constant 0 : i32
    %c0_i32_1 = arith.constant 0 : i32
    return %c0_i32, %c0_i32_0 : i32, i32
  }
  func.func @transform_5(%arg0: i32) -> (i32, i32) {
    %c0_i32 = arith.constant 0 : i32
    %c0_i32_0 = arith.constant 0 : i32
    %c0_i32_1 = arith.constant 0 : i32
    return %c0_i32, %c0_i32_0 : i32, i32
  }
  func.func @transform_6(%arg0: i32) -> (i32, i32) {
    %c0_i32 = arith.constant 0 : i32
    %c0_i32_0 = arith.constant 0 : i32
    %c0_i32_1 = arith.constant 0 : i32
    return %c0_i32, %c0_i32_0 : i32, i32
  }
  func.func @transform_7(%arg0: i32) -> (i32, i32) {
    %c0_i32 = arith.constant 0 : i32
    %c0_i32_0 = arith.constant 0 : i32
    return %arg0, %c0_i32 : i32, i32
  }
}

</mosaic_0001>

<llo_original>
// kernel: tpu_custom_call.1
$region0: #{tpu_custom_call.1}
  #allocation0 [shape = 'u32[]', space=smem, size = 0x4, offset = 0x4, fixed_abs, tag = 'smem constant byte address 0x4 - core index']
  #allocation1 [shape = 'u32[72,128]{1,0:T(1,128)}', space=vmem, size = 0x9000, scoped, tag = 'internal scratch']
  %s0 = inlined_call_operand.vmem [shape: f32[1000,16], index: 0, kind: input, shape index: {}]
  %s1 = inlined_call_operand.vmem [shape: bf16[16,256], index: 1, kind: input, shape index: {}]
  %s2 = inlined_call_operand.vmem [shape: f32[1,256], index: 2, kind: input, shape index: {}]
  %s3 = inlined_call_operand.vmem [shape: bf16[256,256], index: 3, kind: input, shape index: {}]
  %s4 = inlined_call_operand.vmem [shape: f32[1,256], index: 4, kind: input, shape index: {}]
  %s5 = inlined_call_operand.vmem [shape: bf16[256,128], index: 5, kind: input, shape index: {}]
  %s6 = inlined_call_operand.vmem [shape: f32[1,128], index: 6, kind: input, shape index: {}]
  %s7 = inlined_call_operand.hbm [shape: bf16[1000,128], index: 7, kind: output, shape index: {}]
  %s8 = sld [smem:[#allocation0]]
  $region61: #{tpu_custom_call.1} parent=0
    _
  %s10 = ssub.s32 1, %s8
  %s11 = scalar_select 0, %s10, %s8
  $region1: #{tpu_custom_call.1} parent=0
    #allocation2 [shape = 'u8[262144]{0}', space=vmem, size = 0x40000, scoped, tag = 'output window, operand 0']
    #allocation3 [shape = 's32[2]{0}', space=sflag, size = 0x8, scoped, tag = 'scoped memory for tpu_custom_call.1']
    %12 = vsyncpa [#allocation3], 0
    %s13 = scalar_lea.sflag [#allocation3], 1
    %14 = vsyncpa %s13, 0
    loop: start=0, step=1, limit=4
    $region2: #{tpu_custom_call.1} parent=1 // loop_pre_header
      _
    $region3: #{tpu_custom_call.1} parent=1 // loop_header
      %s16 = sphi 0, %s20
      %p17 = scmp.ge.s32.totalorder %s16, 4
      %s26 = sphi 0, %s28
      %s29 = sphi 0, %s26
      %s30 = sphi 0, %s29
      %s46 = sphi 0, %s30
      %s50 = sphi 0, %s50
      %s52 = sphi 0, %s50
      %s53 = sphi 0, %s52
      %s67 = sphi 0, %s53
      %s71 = sphi 0, %s71
      %s73 = sphi 0, %s71
      %s74 = sphi 0, %s73
      %s88 = sphi 0, %s74
      %s92 = sphi 0, %s92
      %s94 = sphi 0, %s92
      %s95 = sphi 0, %s94
      %s109 = sphi 0, %s95
      %s113 = sphi 0, %s113
      %s115 = sphi 0, %s113
      %s116 = sphi 0, %s115
      %s130 = sphi 0, %s116
      %s134 = sphi 0, %s134
      %s136 = sphi 0, %s134
      %s137 = sphi 0, %s136
      %s151 = sphi 0, %s137
      %s155 = sphi 0, %s155
      %s157 = sphi 0, %s155
      %s158 = sphi 0, %s157
      %s172 = sphi 0, %s158
      %s178 = sphi 0, %s180
      %s181 = sphi 0, %s178
      %s182 = sphi 0, %s181
      %s198 = sphi 0, %s182
    $region4: #{tpu_custom_call.1} parent=1 // loop_header_branch
      %19 = sbr.rel (%p17) target = $region8
    $region5: #{tpu_custom_call.1} parent=1 // loop_body
      %s21 = ssub.s32 %s16, 1
      %s22 = ssub.s32 %s16, 2
      %s23 = sadd.s32 %s16, 1
      %s24 = ssub.s32 %s16, %s23
      %p25 = scmp.eq.s32.totalorder %s24, 0
      %s27 = sadd.s32 %s26, 1
      %s28 = scalar_select %p25, %s26, %s27
      %p31 = pneg %p25
      %p32 = scmp.eq.s32.totalorder %s16, 1
      %p33 = por %p31, %p32
      %p34 = scmp.ne.s32.totalorder %s26, %s29
      %p35 = scmp.eq.s32.totalorder %s16, 0
      %p36 = por %p34, %p35
      %p37 = scmp.ne.s32.totalorder %s26, %s29
      %p38 = scmp.eq.s32.totalorder %s21, 1
      %p39 = por %p37, %p38
      %p40 = scmp.ne.s32.totalorder %s29, %s30
      %p41 = scmp.eq.s32.totalorder %s21, 0
      %p42 = por %p40, %p41
      %p43 = scmp.ne.s32.totalorder %s29, %s30
      %p44 = scmp.eq.s32.totalorder %s22, 1
      %p45 = por %p43, %p44
      %p47 = scmp.ne.s32.totalorder %s30, %s46
      %p48 = scmp.eq.s32.totalorder %s22, 0
      %p49 = por %p47, %p48
      %s51 = sadd.s32 %s50, 1
      %p54 = scmp.eq.s32.totalorder %s16, 1
      %p55 = scmp.ne.s32.totalorder %s50, %s52
      %p56 = scmp.eq.s32.totalorder %s16, 0
      %p57 = por %p55, %p56
      %p58 = scmp.ne.s32.totalorder %s50, %s52
      %p59 = scmp.eq.s32.totalorder %s21, 1
      %p60 = por %p58, %p59
      %p61 = scmp.ne.s32.totalorder %s52, %s53
      %p62 = scmp.eq.s32.totalorder %s21, 0
      %p63 = por %p61, %p62
      %p64 = scmp.ne.s32.totalorder %s52, %s53
      %p65 = scmp.eq.s32.totalorder %s22, 1
      %p66 = por %p64, %p65
      %p68 = scmp.ne.s32.totalorder %s53, %s67
      %p69 = scmp.eq.s32.totalorder %s22, 0
      %p70 = por %p68, %p69
      %s72 = sadd.s32 %s71, 1
      %p75 = scmp.eq.s32.totalorder %s16, 1
      %p76 = scmp.ne.s32.totalorder %s71, %s73
      %p77 = scmp.eq.s32.totalorder %s16, 0
      %p78 = por %p76, %p77
      %p79 = scmp.ne.s32.totalorder %s71, %s73
      %p80 = scmp.eq.s32.totalorder %s21, 1
      %p81 = por %p79, %p80
      %p82 = scmp.ne.s32.totalorder %s73, %s74
      %p83 = scmp.eq.s32.totalorder %s21, 0
      %p84 = por %p82, %p83
      %p85 = scmp.ne.s32.totalorder %s73, %s74
      %p86 = scmp.eq.s32.totalorder %s22, 1
      %p87 = por %p85, %p86
      %p89 = scmp.ne.s32.totalorder %s74, %s88
      %p90 = scmp.eq.s32.totalorder %s22, 0
      %p91 = por %p89, %p90
      %s93 = sadd.s32 %s92, 1
      %p96 = scmp.eq.s32.totalorder %s16, 1
      %p97 = scmp.ne.s32.totalorder %s92, %s94
      %p98 = scmp.eq.s32.totalorder %s16, 0
      %p99 = por %p97, %p98
      %p100 = scmp.ne.s32.totalorder %s92, %s94
      %p101 = scmp.eq.s32.totalorder %s21, 1
      %p102 = por %p100, %p101
      %p103 = scmp.ne.s32.totalorder %s94, %s95
      %p104 = scmp.eq.s32.totalorder %s21, 0
      %p105 = por %p103, %p104
      %p106 = scmp.ne.s32.totalorder %s94, %s95
      %p107 = scmp.eq.s32.totalorder %s22, 1
      %p108 = por %p106, %p107
      %p110 = scmp.ne.s32.totalorder %s95, %s109
      %p111 = scmp.eq.s32.totalorder %s22, 0
      %p112 = por %p110, %p111
      %s114 = sadd.s32 %s113, 1
      %p117 = scmp.eq.s32.totalorder %s16, 1
      %p118 = scmp.ne.s32.totalorder %s113, %s115
      %p119 = scmp.eq.s32.totalorder %s16, 0
      %p120 = por %p118, %p119
      %p121 = scmp.ne.s32.totalorder %s113, %s115
      %p122 = scmp.eq.s32.totalorder %s21, 1
      %p123 = por %p121, %p122
      %p124 = scmp.ne.s32.totalorder %s115, %s116
      %p125 = scmp.eq.s32.totalorder %s21, 0
      %p126 = por %p124, %p125
      %p127 = scmp.ne.s32.totalorder %s115, %s116
      %p128 = scmp.eq.s32.totalorder %s22, 1
      %p129 = por %p127, %p128
      %p131 = scmp.ne.s32.totalorder %s116, %s130
      %p132 = scmp.eq.s32.totalorder %s22, 0
      %p133 = por %p131, %p132
      %s135 = sadd.s32 %s134, 1
      %p138 = scmp.eq.s32.totalorder %s16, 1
      %p139 = scmp.ne.s32.totalorder %s134, %s136
      %p140 = scmp.eq.s32.totalorder %s16, 0
      %p141 = por %p139, %p140
      %p142 = scmp.ne.s32.totalorder %s134, %s136
      %p143 = scmp.eq.s32.totalorder %s21, 1
      %p144 = por %p142, %p143
      %p145 = scmp.ne.s32.totalorder %s136, %s137
      %p146 = scmp.eq.s32.totalorder %s21, 0
      %p147 = por %p145, %p146
      %p148 = scmp.ne.s32.totalorder %s136, %s137
      %p149 = scmp.eq.s32.totalorder %s22, 1
      %p150 = por %p148, %p149
      %p152 = scmp.ne.s32.totalorder %s137, %s151
      %p153 = scmp.eq.s32.totalorder %s22, 0
      %p154 = por %p152, %p153
      %s156 = sadd.s32 %s155, 1
      %p159 = scmp.eq.s32.totalorder %s16, 1
      %p160 = scmp.ne.s32.totalorder %s155, %s157
      %p161 = scmp.eq.s32.totalorder %s16, 0
      %p162 = por %p160, %p161
      %p163 = scmp.ne.s32.totalorder %s155, %s157
      %p164 = scmp.eq.s32.totalorder %s21, 1
      %p165 = por %p163, %p164
      %p166 = scmp.ne.s32.totalorder %s157, %s158
      %p167 = scmp.eq.s32.totalorder %s21, 0
      %p168 = por %p166, %p167
      %p169 = scmp.ne.s32.totalorder %s157, %s158
      %p170 = scmp.eq.s32.totalorder %s22, 1
      %p171 = por %p169, %p170
      %p173 = scmp.ne.s32.totalorder %s158, %s172
      %p174 = scmp.eq.s32.totalorder %s22, 0
      %p175 = por %p173, %p174
      %s176 = ssub.s32 %s16, %s23
      %p177 = scmp.eq.s32.totalorder %s176, 0
      %s179 = sadd.s32 %s178, 1
      %s180 = scalar_select %p177, %s178, %s179
      %p183 = pneg %p177
      %p184 = scmp.eq.s32.totalorder %s16, 1
      %p185 = por %p183, %p184
      %p186 = scmp.ne.s32.totalorder %s178, %s181
      %p187 = scmp.eq.s32.totalorder %s16, 0
      %p188 = por %p186, %p187
      %p189 = scmp.ne.s32.totalorder %s178, %s181
      %p190 = scmp.eq.s32.totalorder %s21, 1
      %p191 = por %p189, %p190
      %p192 = scmp.ne.s32.totalorder %s181, %s182
      %p193 = scmp.eq.s32.totalorder %s21, 0
      %p194 = por %p192, %p193
      %p195 = scmp.ne.s32.totalorder %s181, %s182
      %p196 = scmp.eq.s32.totalorder %s22, 1
      %p197 = por %p195, %p196
      %p199 = scmp.ne.s32.totalorder %s182, %s198
      %p200 = scmp.eq.s32.totalorder %s22, 0
      %p201 = por %p199, %p200
      %p202 = scmp.le.s32.totalorder 1, %s16
      %p203 = scmp.lt.s32.totalorder %s16, 3
      %p204 = pnand %p202, %p203
      %p205 = pneg %p204
      // Predicated region
      $region9: #{tpu_custom_call.1} parent=5 // pred_check
        _
      $region10: #{tpu_custom_call.1} parent=5 // pred_check_branch
        %207 = sbr.rel (%p204) target = $region12
      $region11: #{tpu_custom_call.1} parent=5 // pred_region
        %s208 = ssub.s32 %s16, 1
        // Predicated region
        $region13: #{tpu_custom_call.1} parent=11 // pred_check
          %p209 = pneg %p63
        $region14: #{tpu_custom_call.1} parent=11 // pred_check_branch
          %211 = sbr.rel (%p209) target = $region16
        $region15: #{tpu_custom_call.1} parent=11 // pred_region
          _
        $region16: #{tpu_custom_call.1} parent=11 // pred_fallthru
          _
        // Predicated region
        $region17: #{tpu_custom_call.1} parent=11 // pred_check
          %p212 = pneg %p84
        $region18: #{tpu_custom_call.1} parent=11 // pred_check_branch
          %214 = sbr.rel (%p212) target = $region20
        $region19: #{tpu_custom_call.1} parent=11 // pred_region
          _
        $region20: #{tpu_custom_call.1} parent=11 // pred_fallthru
          _
        // Predicated region
        $region21: #{tpu_custom_call.1} parent=11 // pred_check
          %p215 = pneg %p105
        $region22: #{tpu_custom_call.1} parent=11 // pred_check_branch
          %217 = sbr.rel (%p215) target = $region24
        $region23: #{tpu_custom_call.1} parent=11 // pred_region
          _
        $region24: #{tpu_custom_call.1} parent=11 // pred_fallthru
          _
        // Predicated region
        $region25: #{tpu_custom_call.1} parent=11 // pred_check
          %p218 = pneg %p126
        $region26: #{tpu_custom_call.1} parent=11 // pred_check_branch
          %220 = sbr.rel (%p218) target = $region28
        $region27: #{tpu_custom_call.1} parent=11 // pred_region
          _
        $region28: #{tpu_custom_call.1} parent=11 // pred_fallthru
          _
        // Predicated region
        $region29: #{tpu_custom_call.1} parent=11 // pred_check
          %p221 = pneg %p147
        $region30: #{tpu_custom_call.1} parent=11 // pred_check_branch
          %223 = sbr.rel (%p221) target = $region32
        $region31: #{tpu_custom_call.1} parent=11 // pred_region
          _
        $region32: #{tpu_custom_call.1} parent=11 // pred_fallthru
          _
        // Predicated region
        $region33: #{tpu_custom_call.1} parent=11 // pred_check
          %p224 = pneg %p168
        $region34: #{tpu_custom_call.1} parent=11 // pred_check_branch
          %226 = sbr.rel (%p224) target = $region36
        $region35: #{tpu_custom_call.1} parent=11 // pred_region
          _
        $region36: #{tpu_custom_call.1} parent=11 // pred_fallthru
          _
      $region12: #{tpu_custom_call.1} parent=5 // pred_fallthru
        _
      %p227 = scmp.lt.s32.totalorder %s16, 2
      // Predicated region
      $region37: #{tpu_custom_call.1} parent=5 // pred_check
        %p228 = pneg %p227
      $region38: #{tpu_custom_call.1} parent=5 // pred_check_branch
        %230 = sbr.rel (%p228) target = $region40
      $region39: #{tpu_custom_call.1} parent=5 // pred_region
        // Predicated region
        $region41: #{tpu_custom_call.1} parent=39 // pred_check
          %p231 = pneg %p36
        $region42: #{tpu_custom_call.1} parent=39 // pred_check_branch
          %233 = sbr.rel (%p231) target = $region44
        $region43: #{tpu_custom_call.1} parent=39 // pred_region
          %s234 = smul.u32 64, %s16
          %s235 = ssub.s32 125, %s234
          %p236 = scmp.lt.s32.totalorder %s235, 64
          %s237 = scalar_select %p236, %s235, 64
          %s238 = smul.u32 8, %s237
          %p239 = scmp.lt.s32.totalorder %s234, 124
          %s240 = scalar_select %p239, %s234, 124
          %s241 = smul.addr %s240, 8
          %s242 = scalar_lea.vmem %s0, %s241
          %s243 = smul.u32 64, %s16
          %s244 = ssub.s32 125, %s243
          %p245 = scmp.lt.s32.totalorder %s244, 64
          %s246 = scalar_select %p245, %s244, 64
          %s247 = smul.u32 8, %s246
        $region44: #{tpu_custom_call.1} parent=39 // pred_fallthru
          _
      $region40: #{tpu_custom_call.1} parent=5 // pred_fallthru
        _
      %p248 = scmp.le.s32.totalorder 1, %s16
      %p249 = scmp.lt.s32.totalorder %s16, 3
      %p250 = pnand %p248, %p249
      %p251 = pneg %p250
      // Predicated region
      $region45: #{tpu_custom_call.1} parent=5 // pred_check
        _
      $region46: #{tpu_custom_call.1} parent=5 // pred_check_branch
        %253 = sbr.rel (%p250) target = $region48
      $region47: #{tpu_custom_call.1} parent=5 // pred_region
        %s254 = ssub.s32 %s16, 1
        %s255 = smul.u32 64, %s21
        %s256 = ssub.s32 125, %s255
        %p257 = scmp.lt.s32.totalorder %s256, 64
        %s258 = scalar_select %p257, %s256, 64
        %s259 = smul.u32 8, %s258
        %p260 = scmp.lt.s32.totalorder %s255, 124
        %s261 = scalar_select %p260, %s255, 124
        %s262 = smul.addr %s261, 8
        %s263 = scalar_lea.vmem %s0, %s262
        %p264 = pneg %p42
        %p265 = pneg %p39
        %p266 = pneg %p63
        %p267 = pneg %p60
        %p268 = pneg %p84
        %p269 = pneg %p81
        %p270 = pneg %p105
        %p271 = pneg %p102
        %p272 = pneg %p126
        %p273 = pneg %p123
        %p274 = pneg %p147
        %p275 = pneg %p144
        %p276 = pneg %p168
        %p277 = pneg %p165
        %p278 = pneg %p194
        %p279 = pneg %p191
        %s280 = sand.u32 %s181, 1
        %s281 = scalar_lea.sflag [#allocation3], %s280
        %s282 = sand.u32 %s181, 1
        %s283 = smul.addr %s282, 256
        %s284 = scalar_lea.vmem [#allocation2], %s283
        %s285 = smul.u32 64, %s21
        %s286 = ssub.s32 125, %s285
        %p287 = scmp.lt.s32.totalorder %s286, 64
        %s288 = scalar_select %p287, %s286, 64
        %s289 = smul.u32 8, %s288
        %p290 = scmp.lt.s32.totalorder %s285, 124
        %s291 = scalar_select %p290, %s285, 124
        %s292 = smul.addr %s291, 8
        %s293 = scalar_lea.vmem %s0, %s292
        %s294 = smul.u32 64, %s21
        %s295 = ssub.s32 125, %s294
        %p296 = scmp.lt.s32.totalorder %s295, 64
        %s297 = scalar_select %p296, %s295, 64
        %s298 = smul.u32 8, %s297
        %s299 = smul.u32 64, %s21
        %s300 = ssub.s32 125, %s299
        %p301 = scmp.lt.s32.totalorder %s300, 64
        %s302 = scalar_select %p301, %s300, 64
        %s303 = smul.u32 4, %s302
        %v305 = vld [vmem:[%s293] sm:$0xff]
        %v306 = vld [vmem:[%s293 + $0x8] sm:$0xff]
        %v307 = vld [vmem:[%s293 + $0x10] sm:$0xff]
        %v308 = vld [vmem:[%s293 + $0x18] sm:$0xff]
        %v309 = vld [vmem:[%s293 + $0x20] sm:$0xff]
        %v310 = vld [vmem:[%s293 + $0x28] sm:$0xff]
        %v311 = vld [vmem:[%s293 + $0x30] sm:$0xff]
        %v312 = vld [vmem:[%s293 + $0x38] sm:$0xff]
        %v313 = vld [vmem:[%s293 + $0x40] sm:$0xff]
        %v314 = vld [vmem:[%s293 + $0x48] sm:$0xff]
        %v315 = vld [vmem:[%s293 + $0x50] sm:$0xff]
        %v316 = vld [vmem:[%s293 + $0x58] sm:$0xff]
        %v317 = vld [vmem:[%s293 + $0x60] sm:$0xff]
        %v318 = vld [vmem:[%s293 + $0x68] sm:$0xff]
        %v319 = vld [vmem:[%s293 + $0x70] sm:$0xff]
        %v320 = vld [vmem:[%s293 + $0x78] sm:$0xff]
        %v321 = vld [vmem:[%s293 + $0x80] sm:$0xff]
        %v322 = vld [vmem:[%s293 + $0x88] sm:$0xff]
        %v323 = vld [vmem:[%s293 + $0x90] sm:$0xff]
        %v324 = vld [vmem:[%s293 + $0x98] sm:$0xff]
        %v325 = vld [vmem:[%s293 + $0xa0] sm:$0xff]
        %v326 = vld [vmem:[%s293 + $0xa8] sm:$0xff]
        %v327 = vld [vmem:[%s293 + $0xb0] sm:$0xff]
        %v328 = vld [vmem:[%s293 + $0xb8] sm:$0xff]
        %v329 = vld [vmem:[%s293 + $0xc0] sm:$0xff]
        %v330 = vld [vmem:[%s293 + $0xc8] sm:$0xff]
        %v331 = vld [vmem:[%s293 + $0xd0] sm:$0xff]
        %v332 = vld [vmem:[%s293 + $0xd8] sm:$0xff]
        %v333 = vld [vmem:[%s293 + $0xe0] sm:$0xff]
        %v334 = vld [vmem:[%s293 + $0xe8] sm:$0xff]
        %v335 = vld [vmem:[%s293 + $0xf0] sm:$0xff]
        %v336 = vld [vmem:[%s293 + $0xf8] sm:$0xff]
        %v337 = vld [vmem:[%s293 + $0x100] sm:$0xff]
        %v338 = vld [vmem:[%s293 + $0x108] sm:$0xff]
        %v339 = vld [vmem:[%s293 + $0x110] sm:$0xff]
        %v340 = vld [vmem:[%s293 + $0x118] sm:$0xff]
        %v341 = vld [vmem:[%s293 + $0x120] sm:$0xff]
        %v342 = vld [vmem:[%s293 + $0x128] sm:$0xff]
        %v343 = vld [vmem:[%s293 + $0x130] sm:$0xff]
        %v344 = vld [vmem:[%s293 + $0x138] sm:$0xff]
        %v345 = vld [vmem:[%s293 + $0x140] sm:$0xff]
        %v346 = vld [vmem:[%s293 + $0x148] sm:$0xff]
        %v347 = vld [vmem:[%s293 + $0x150] sm:$0xff]
        %v348 = vld [vmem:[%s293 + $0x158] sm:$0xff]
        %v349 = vld [vmem:[%s293 + $0x160] sm:$0xff]
        %v350 = vld [vmem:[%s293 + $0x168] sm:$0xff]
        %v351 = vld [vmem:[%s293 + $0x170] sm:$0xff]
        %v352 = vld [vmem:[%s293 + $0x178] sm:$0xff]
        %v353 = vld [vmem:[%s293 + $0x180] sm:$0xff]
        %v354 = vld [vmem:[%s293 + $0x188] sm:$0xff]
        %v355 = vld [vmem:[%s293 + $0x190] sm:$0xff]
        %v356 = vld [vmem:[%s293 + $0x198] sm:$0xff]
        %v357 = vld [vmem:[%s293 + $0x1a0] sm:$0xff]
        %v358 = vld [vmem:[%s293 + $0x1a8] sm:$0xff]
        %v359 = vld [vmem:[%s293 + $0x1b0] sm:$0xff]
        %v360 = vld [vmem:[%s293 + $0x1b8] sm:$0xff]
        %v361 = vld [vmem:[%s293 + $0x1c0] sm:$0xff]
        %v362 = vld [vmem:[%s293 + $0x1c8] sm:$0xff]
        %v363 = vld [vmem:[%s293 + $0x1d0] sm:$0xff]
        %v364 = vld [vmem:[%s293 + $0x1d8] sm:$0xff]
        %v365 = vld [vmem:[%s293 + $0x1e0] sm:$0xff]
        %v366 = vld [vmem:[%s293 + $0x1e8] sm:$0xff]
        %v367 = vld [vmem:[%s293 + $0x1f0] sm:$0xff]
        %v368 = vld [vmem:[%s293 + $0x1f8] sm:$0xff]
        %v369 = vpack.c.bf16 %v306, %v305
        %v370 = vpack.c.bf16 %v308, %v307
        %v371 = vpack.c.bf16 %v310, %v309
        %v372 = vpack.c.bf16 %v312, %v311
        %v373 = vpack.c.bf16 %v314, %v313
        %v374 = vpack.c.bf16 %v316, %v315
        %v375 = vpack.c.bf16 %v318, %v317
        %v376 = vpack.c.bf16 %v320, %v319
        %v377 = vpack.c.bf16 %v322, %v321
        %v378 = vpack.c.bf16 %v324, %v323
        %v379 = vpack.c.bf16 %v326, %v325
        %v380 = vpack.c.bf16 %v328, %v327
        %v381 = vpack.c.bf16 %v330, %v329
        %v382 = vpack.c.bf16 %v332, %v331
        %v383 = vpack.c.bf16 %v334, %v333
        %v384 = vpack.c.bf16 %v336, %v335
        %v385 = vpack.c.bf16 %v338, %v337
        %v386 = vpack.c.bf16 %v340, %v339
        %v387 = vpack.c.bf16 %v342, %v341
        %v388 = vpack.c.bf16 %v344, %v343
        %v389 = vpack.c.bf16 %v346, %v345
        %v390 = vpack.c.bf16 %v348, %v347
        %v391 = vpack.c.bf16 %v350, %v349
        %v392 = vpack.c.bf16 %v352, %v351
        %v393 = vpack.c.bf16 %v354, %v353
        %v394 = vpack.c.bf16 %v356, %v355
        %v395 = vpack.c.bf16 %v358, %v357
        %v396 = vpack.c.bf16 %v360, %v359
        %v397 = vpack.c.bf16 %v362, %v361
        %v398 = vpack.c.bf16 %v364, %v363
        %v399 = vpack.c.bf16 %v366, %v365
        %v400 = vpack.c.bf16 %v368, %v367
        %v401 = vld [vmem:[%s1] sm:$0xff]
        %v402 = vld [vmem:[%s1 + $0x8] sm:$0xff]
        %v403 = vld [vmem:[%s2] sm:$0x3]
        %v405 = vperm.slane %v403, 0
        %v406 = vperm.slane %v403, 1
        %v411 = vunpack.c.l.b16 %v401
        %v412 = vunpack.c.h.b16 %v401
        %v413 = vunpack.c.l.b16 %v402
        %v414 = vunpack.c.h.b16 %v402
        %v415 = vpack.c.b16 %v413, %v411
        %v416 = vpack.c.b16 %v414, %v412
        %vm419 = vcmask 130048
        %v421 = vsel %vm419, %v369, 0
        %v424 = vsel %vm419, %v370, 0
        %v427 = vsel %vm419, %v371, 0
        %v430 = vsel %vm419, %v372, 0
        %v433 = vsel %vm419, %v373, 0
        %v436 = vsel %vm419, %v374, 0
        %v439 = vsel %vm419, %v375, 0
        %v442 = vsel %vm419, %v376, 0
        %v445 = vsel %vm419, %v377, 0
        %v448 = vsel %vm419, %v378, 0
        %v451 = vsel %vm419, %v379, 0
        %v454 = vsel %vm419, %v380, 0
        %v457 = vsel %vm419, %v381, 0
        %v460 = vsel %vm419, %v382, 0
        %v463 = vsel %vm419, %v383, 0
        %v466 = vsel %vm419, %v384, 0
        %v469 = vsel %vm419, %v385, 0
        %v472 = vsel %vm419, %v386, 0
        %v475 = vsel %vm419, %v387, 0
        %v478 = vsel %vm419, %v388, 0
        %v481 = vsel %vm419, %v389, 0
        %v484 = vsel %vm419, %v390, 0
        %v487 = vsel %vm419, %v391, 0
        %v490 = vsel %vm419, %v392, 0
        %v493 = vsel %vm419, %v393, 0
        %v496 = vsel %vm419, %v394, 0
        %v499 = vsel %vm419, %v395, 0
        %v502 = vsel %vm419, %v396, 0
        %v505 = vsel %vm419, %v397, 0
        %v508 = vsel %vm419, %v398, 0
        %v511 = vsel %vm419, %v399, 0
        %v514 = vsel %vm419, %v400, 0
        %516 = vmatpush.bf16.msra.mxu0 0
        %517 = vmatpush.bf16.msra.mxu0 0
        %518 = vmatpush.bf16.msra.mxu0 0
        %519 = vmatpush.bf16.msra.mxu0 0
        %520 = vmatpush.bf16.msra.mxu0 0
        %521 = vmatpush.bf16.msra.mxu0 0
        %522 = vmatpush.bf16.msra.mxu0 0
        %523 = vmatpush.bf16.msra.mxu0 %v415
        %524 = vmatmul.bf16.gmra.mxu0 %v421
        %v525 = vpop.f32.mrf.mxu0
        %v526 = vadd.f32 %v405, %v525
        %v527 = vpop.f32.mrf.mxu0
        %v528 = vadd.f32 %v405, %v527
        %529 = vmatmul.bf16.gmra.mxu0 %v424
        %v530 = vpop.f32.mrf.mxu0
        %v531 = vadd.f32 %v405, %v530
        %v532 = vpop.f32.mrf.mxu0
        %v533 = vadd.f32 %v405, %v532
        %534 = vmatmul.bf16.gmra.mxu0 %v427
        %v535 = vpop.f32.mrf.mxu0
        %v536 = vadd.f32 %v405, %v535
        %v537 = vpop.f32.mrf.mxu0
        %v538 = vadd.f32 %v405, %v537
        %539 = vmatmul.bf16.gmra.mxu0 %v430
        %v540 = vpop.f32.mrf.mxu0
        %v541 = vadd.f32 %v405, %v540
        %v542 = vpop.f32.mrf.mxu0
        %v543 = vadd.f32 %v405, %v542
        %544 = vmatmul.bf16.gmra.mxu0 %v433
        %v545 = vpop.f32.mrf.mxu0
        %v546 = vadd.f32 %v405, %v545
        %v547 = vpop.f32.mrf.mxu0
        %v548 = vadd.f32 %v405, %v547
        %549 = vmatmul.bf16.gmra.mxu0 %v436
        %v550 = vpop.f32.mrf.mxu0
        %v551 = vadd.f32 %v405, %v550
        %v552 = vpop.f32.mrf.mxu0
        %v553 = vadd.f32 %v405, %v552
        %554 = vmatmul.bf16.gmra.mxu0 %v439
        %v555 = vpop.f32.mrf.mxu0
        %v556 = vadd.f32 %v405, %v555
        %v557 = vpop.f32.mrf.mxu0
        %v558 = vadd.f32 %v405, %v557
        %559 = vmatmul.bf16.gmra.mxu0 %v442
        %v560 = vpop.f32.mrf.mxu0
        %v561 = vadd.f32 %v405, %v560
        %v562 = vpop.f32.mrf.mxu0
        %v563 = vadd.f32 %v405, %v562
        %564 = vmatmul.bf16.gmra.mxu0 %v445
        %v565 = vpop.f32.mrf.mxu0
        %v566 = vadd.f32 %v405, %v565
        %v567 = vpop.f32.mrf.mxu0
        %v568 = vadd.f32 %v405, %v567
        %569 = vmatmul.bf16.gmra.mxu0 %v448
        %v570 = vpop.f32.mrf.mxu0
        %v571 = vadd.f32 %v405, %v570
        %v572 = vpop.f32.mrf.mxu0
        %v573 = vadd.f32 %v405, %v572
        %574 = vmatmul.bf16.gmra.mxu0 %v451
        %v575 = vpop.f32.mrf.mxu0
        %v576 = vadd.f32 %v405, %v575
        %v577 = vpop.f32.mrf.mxu0
        %v578 = vadd.f32 %v405, %v577
        %579 = vmatmul.bf16.gmra.mxu0 %v454
        %v580 = vpop.f32.mrf.mxu0
        %v581 = vadd.f32 %v405, %v580
        %v582 = vpop.f32.mrf.mxu0
        %v583 = vadd.f32 %v405, %v582
        %584 = vmatmul.bf16.gmra.mxu0 %v457
        %v585 = vpop.f32.mrf.mxu0
        %v586 = vadd.f32 %v405, %v585
        %v587 = vpop.f32.mrf.mxu0
        %v588 = vadd.f32 %v405, %v587
        %589 = vmatmul.bf16.gmra.mxu0 %v460
        %v590 = vpop.f32.mrf.mxu0
        %v591 = vadd.f32 %v405, %v590
        %v592 = vpop.f32.mrf.mxu0
        %v593 = vadd.f32 %v405, %v592
        %594 = vmatmul.bf16.gmra.mxu0 %v463
        %v595 = vpop.f32.mrf.mxu0
        %v596 = vadd.f32 %v405, %v595
        %v597 = vpop.f32.mrf.mxu0
        %v598 = vadd.f32 %v405, %v597
        %599 = vmatmul.bf16.gmra.mxu0 %v466
        %v600 = vpop.f32.mrf.mxu0
        %v601 = vadd.f32 %v405, %v600
        %v602 = vpop.f32.mrf.mxu0
        %v603 = vadd.f32 %v405, %v602
        %604 = vmatmul.bf16.gmra.mxu0 %v469
        %v605 = vpop.f32.mrf.mxu0
        %v606 = vadd.f32 %v405, %v605
        %v607 = vpop.f32.mrf.mxu0
        %v608 = vadd.f32 %v405, %v607
        %609 = vmatmul.bf16.gmra.mxu0 %v472
        %v610 = vpop.f32.mrf.mxu0
        %v611 = vadd.f32 %v405, %v610
        %v612 = vpop.f32.mrf.mxu0
        %v613 = vadd.f32 %v405, %v612
        %614 = vmatmul.bf16.gmra.mxu0 %v475
        %v615 = vpop.f32.mrf.mxu0
        %v616 = vadd.f32 %v405, %v615
        %v617 = vpop.f32.mrf.mxu0
        %v618 = vadd.f32 %v405, %v617
        %619 = vmatmul.bf16.gmra.mxu0 %v478
        %v620 = vpop.f32.mrf.mxu0
        %v621 = vadd.f32 %v405, %v620
        %v622 = vpop.f32.mrf.mxu0
        %v623 = vadd.f32 %v405, %v622
        %624 = vmatmul.bf16.gmra.mxu0 %v481
        %v625 = vpop.f32.mrf.mxu0
        %v626 = vadd.f32 %v405, %v625
        %v627 = vpop.f32.mrf.mxu0
        %v628 = vadd.f32 %v405, %v627
        %629 = vmatmul.bf16.gmra.mxu0 %v484
        %v630 = vpop.f32.mrf.mxu0
        %v631 = vadd.f32 %v405, %v630
        %v632 = vpop.f32.mrf.mxu0
        %v633 = vadd.f32 %v405, %v632
        %634 = vmatmul.bf16.gmra.mxu0 %v487
        %v635 = vpop.f32.mrf.mxu0
        %v636 = vadd.f32 %v405, %v635
        %v637 = vpop.f32.mrf.mxu0
        %v638 = vadd.f32 %v405, %v637
        %639 = vmatmul.bf16.gmra.mxu0 %v490
        %v640 = vpop.f32.mrf.mxu0
        %v641 = vadd.f32 %v405, %v640
        %v642 = vpop.f32.mrf.mxu0
        %v643 = vadd.f32 %v405, %v642
        %644 = vmatmul.bf16.gmra.mxu0 %v493
        %v645 = vpop.f32.mrf.mxu0
        %v646 = vadd.f32 %v405, %v645
        %v647 = vpop.f32.mrf.mxu0
        %v648 = vadd.f32 %v405, %v647
        %649 = vmatmul.bf16.gmra.mxu0 %v496
        %v650 = vpop.f32.mrf.mxu0
        %v651 = vadd.f32 %v405, %v650
        %v652 = vpop.f32.mrf.mxu0
        %v653 = vadd.f32 %v405, %v652
        %654 = vmatmul.bf16.gmra.mxu0 %v499
        %v655 = vpop.f32.mrf.mxu0
        %v656 = vadd.f32 %v405, %v655
        %v657 = vpop.f32.mrf.mxu0
        %v658 = vadd.f32 %v405, %v657
        %659 = vmatmul.bf16.gmra.mxu0 %v502
        %v660 = vpop.f32.mrf.mxu0
        %v661 = vadd.f32 %v405, %v660
        %v662 = vpop.f32.mrf.mxu0
        %v663 = vadd.f32 %v405, %v662
        %664 = vmatmul.bf16.gmra.mxu0 %v505
        %v665 = vpop.f32.mrf.mxu0
        %v666 = vadd.f32 %v405, %v665
        %v667 = vpop.f32.mrf.mxu0
        %v668 = vadd.f32 %v405, %v667
        %669 = vmatmul.bf16.gmra.mxu0 %v508
        %v670 = vpop.f32.mrf.mxu0
        %v671 = vadd.f32 %v405, %v670
        %v672 = vpop.f32.mrf.mxu0
        %v673 = vadd.f32 %v405, %v672
        %674 = vmatmul.bf16.gmra.mxu0 %v511
        %v675 = vpop.f32.mrf.mxu0
        %v676 = vadd.f32 %v405, %v675
        %v677 = vpop.f32.mrf.mxu0
        %v678 = vadd.f32 %v405, %v677
        %679 = vmatmul.bf16.gmra.mxu0 %v514
        %v680 = vpop.f32.mrf.mxu0
        %v681 = vadd.f32 %v405, %v680
        %v682 = vpop.f32.mrf.mxu0
        %v683 = vadd.f32 %v405, %v682
        %684 = vdwg.mxu0
        %685 = vmatpush.bf16.msra.mxu0 0
        %686 = vmatpush.bf16.msra.mxu0 0
        %687 = vmatpush.bf16.msra.mxu0 0
        %688 = vmatpush.bf16.msra.mxu0 0
        %689 = vmatpush.bf16.msra.mxu0 0
        %690 = vmatpush.bf16.msra.mxu0 0
        %691 = vmatpush.bf16.msra.mxu0 0
        %692 = vmatpush.bf16.msra.mxu0 %v416
        %693 = vmatmul.bf16.gmra.mxu0 %v421
        %v694 = vpop.f32.mrf.mxu0
        %v695 = vadd.f32 %v406, %v694
        %v696 = vpop.f32.mrf.mxu0
        %v697 = vadd.f32 %v406, %v696
        %698 = vmatmul.bf16.gmra.mxu0 %v424
        %v699 = vpop.f32.mrf.mxu0
        %v700 = vadd.f32 %v406, %v699
        %v701 = vpop.f32.mrf.mxu0
        %v702 = vadd.f32 %v406, %v701
        %703 = vmatmul.bf16.gmra.mxu0 %v427
        %v704 = vpop.f32.mrf.mxu0
        %v705 = vadd.f32 %v406, %v704
        %v706 = vpop.f32.mrf.mxu0
        %v707 = vadd.f32 %v406, %v706
        %708 = vmatmul.bf16.gmra.mxu0 %v430
        %v709 = vpop.f32.mrf.mxu0
        %v710 = vadd.f32 %v406, %v709
        %v711 = vpop.f32.mrf.mxu0
        %v712 = vadd.f32 %v406, %v711
        %713 = vmatmul.bf16.gmra.mxu0 %v433
        %v714 = vpop.f32.mrf.mxu0
        %v715 = vadd.f32 %v406, %v714
        %v716 = vpop.f32.mrf.mxu0
        %v717 = vadd.f32 %v406, %v716
        %718 = vmatmul.bf16.gmra.mxu0 %v436
        %v719 = vpop.f32.mrf.mxu0
        %v720 = vadd.f32 %v406, %v719
        %v721 = vpop.f32.mrf.mxu0
        %v722 = vadd.f32 %v406, %v721
        %723 = vmatmul.bf16.gmra.mxu0 %v439
        %v724 = vpop.f32.mrf.mxu0
        %v725 = vadd.f32 %v406, %v724
        %v726 = vpop.f32.mrf.mxu0
        %v727 = vadd.f32 %v406, %v726
        %728 = vmatmul.bf16.gmra.mxu0 %v442
        %v729 = vpop.f32.mrf.mxu0
        %v730 = vadd.f32 %v406, %v729
        %v731 = vpop.f32.mrf.mxu0
        %v732 = vadd.f32 %v406, %v731
        %733 = vmatmul.bf16.gmra.mxu0 %v445
        %v734 = vpop.f32.mrf.mxu0
        %v735 = vadd.f32 %v406, %v734
        %v736 = vpop.f32.mrf.mxu0
        %v737 = vadd.f32 %v406, %v736
        %738 = vmatmul.bf16.gmra.mxu0 %v448
        %v739 = vpop.f32.mrf.mxu0
        %v740 = vadd.f32 %v406, %v739
        %v741 = vpop.f32.mrf.mxu0
        %v742 = vadd.f32 %v406, %v741
        %743 = vmatmul.bf16.gmra.mxu0 %v451
        %v744 = vpop.f32.mrf.mxu0
        %v745 = vadd.f32 %v406, %v744
        %v746 = vpop.f32.mrf.mxu0
        %v747 = vadd.f32 %v406, %v746
        %748 = vmatmul.bf16.gmra.mxu0 %v454
        %v749 = vpop.f32.mrf.mxu0
        %v750 = vadd.f32 %v406, %v749
        %v751 = vpop.f32.mrf.mxu0
        %v752 = vadd.f32 %v406, %v751
        %753 = vmatmul.bf16.gmra.mxu0 %v457
        %v754 = vpop.f32.mrf.mxu0
        %v755 = vadd.f32 %v406, %v754
        %v756 = vpop.f32.mrf.mxu0
        %v757 = vadd.f32 %v406, %v756
        %758 = vmatmul.bf16.gmra.mxu0 %v460
        %v759 = vpop.f32.mrf.mxu0
        %v760 = vadd.f32 %v406, %v759
        %v761 = vpop.f32.mrf.mxu0
        %v762 = vadd.f32 %v406, %v761
        %763 = vmatmul.bf16.gmra.mxu0 %v463
        %v764 = vpop.f32.mrf.mxu0
        %v765 = vadd.f32 %v406, %v764
        %v766 = vpop.f32.mrf.mxu0
        %v767 = vadd.f32 %v406, %v766
        %768 = vmatmul.bf16.gmra.mxu0 %v466
        %v769 = vpop.f32.mrf.mxu0
        %v770 = vadd.f32 %v406, %v769
        %v771 = vpop.f32.mrf.mxu0
        %v772 = vadd.f32 %v406, %v771
        %773 = vmatmul.bf16.gmra.mxu0 %v469
        %v774 = vpop.f32.mrf.mxu0
        %v775 = vadd.f32 %v406, %v774
        %v776 = vpop.f32.mrf.mxu0
        %v777 = vadd.f32 %v406, %v776
        %778 = vmatmul.bf16.gmra.mxu0 %v472
        %v779 = vpop.f32.mrf.mxu0
        %v780 = vadd.f32 %v406, %v779
        %v781 = vpop.f32.mrf.mxu0
        %v782 = vadd.f32 %v406, %v781
        %783 = vmatmul.bf16.gmra.mxu0 %v475
        %v784 = vpop.f32.mrf.mxu0
        %v785 = vadd.f32 %v406, %v784
        %v786 = vpop.f32.mrf.mxu0
        %v787 = vadd.f32 %v406, %v786
        %788 = vmatmul.bf16.gmra.mxu0 %v478
        %v789 = vpop.f32.mrf.mxu0
        %v790 = vadd.f32 %v406, %v789
        %v791 = vpop.f32.mrf.mxu0
        %v792 = vadd.f32 %v406, %v791
        %793 = vmatmul.bf16.gmra.mxu0 %v481
        %v794 = vpop.f32.mrf.mxu0
        %v795 = vadd.f32 %v406, %v794
        %v796 = vpop.f32.mrf.mxu0
        %v797 = vadd.f32 %v406, %v796
        %798 = vmatmul.bf16.gmra.mxu0 %v484
        %v799 = vpop.f32.mrf.mxu0
        %v800 = vadd.f32 %v406, %v799
        %v801 = vpop.f32.mrf.mxu0
        %v802 = vadd.f32 %v406, %v801
        %803 = vmatmul.bf16.gmra.mxu0 %v487
        %v804 = vpop.f32.mrf.mxu0
        %v805 = vadd.f32 %v406, %v804
        %v806 = vpop.f32.mrf.mxu0
        %v807 = vadd.f32 %v406, %v806
        %808 = vmatmul.bf16.gmra.mxu0 %v490
        %v809 = vpop.f32.mrf.mxu0
        %v810 = vadd.f32 %v406, %v809
        %v811 = vpop.f32.mrf.mxu0
        %v812 = vadd.f32 %v406, %v811
        %813 = vmatmul.bf16.gmra.mxu0 %v493
        %v814 = vpop.f32.mrf.mxu0
        %v815 = vadd.f32 %v406, %v814
        %v816 = vpop.f32.mrf.mxu0
        %v817 = vadd.f32 %v406, %v816
        %818 = vmatmul.bf16.gmra.mxu0 %v496
        %v819 = vpop.f32.mrf.mxu0
        %v820 = vadd.f32 %v406, %v819
        %v821 = vpop.f32.mrf.mxu0
        %v822 = vadd.f32 %v406, %v821
        %823 = vmatmul.bf16.gmra.mxu0 %v499
        %v824 = vpop.f32.mrf.mxu0
        %v825 = vadd.f32 %v406, %v824
        %v826 = vpop.f32.mrf.mxu0
        %v827 = vadd.f32 %v406, %v826
        %828 = vmatmul.bf16.gmra.mxu0 %v502
        %v829 = vpop.f32.mrf.mxu0
        %v830 = vadd.f32 %v406, %v829
        %v831 = vpop.f32.mrf.mxu0
        %v832 = vadd.f32 %v406, %v831
        %833 = vmatmul.bf16.gmra.mxu0 %v505
        %v834 = vpop.f32.mrf.mxu0
        %v835 = vadd.f32 %v406, %v834
        %v836 = vpop.f32.mrf.mxu0
        %v837 = vadd.f32 %v406, %v836
        %838 = vmatmul.bf16.gmra.mxu0 %v508
        %v839 = vpop.f32.mrf.mxu0
        %v840 = vadd.f32 %v406, %v839
        %v841 = vpop.f32.mrf.mxu0
        %v842 = vadd.f32 %v406, %v841
        %843 = vmatmul.bf16.gmra.mxu0 %v511
        %v844 = vpop.f32.mrf.mxu0
        %v845 = vadd.f32 %v406, %v844
        %v846 = vpop.f32.mrf.mxu0
        %v847 = vadd.f32 %v406, %v846
        %848 = vmatmul.bf16.gmra.mxu0 %v514
        %v849 = vpop.f32.mrf.mxu0
        %v850 = vadd.f32 %v406, %v849
        %v851 = vpop.f32.mrf.mxu0
        %v852 = vadd.f32 %v406, %v851
        %853 = vdwg.mxu0
        %v854 = vmax.f32 %v526, 0.0
        %v855 = vmax.f32 %v695, 0.0
        %v856 = vmax.f32 %v528, 0.0
        %v857 = vmax.f32 %v697, 0.0
        %v858 = vmax.f32 %v531, 0.0
        %v859 = vmax.f32 %v700, 0.0
        %v860 = vmax.f32 %v533, 0.0
        %v861 = vmax.f32 %v702, 0.0
        %v862 = vmax.f32 %v536, 0.0
        %v863 = vmax.f32 %v705, 0.0
        %v864 = vmax.f32 %v538, 0.0
        %v865 = vmax.f32 %v707, 0.0
        %v866 = vmax.f32 %v541, 0.0
        %v867 = vmax.f32 %v710, 0.0
        %v868 = vmax.f32 %v543, 0.0
        %v869 = vmax.f32 %v712, 0.0
        %v870 = vmax.f32 %v546, 0.0
        %v871 = vmax.f32 %v715, 0.0
        %v872 = vmax.f32 %v548, 0.0
        %v873 = vmax.f32 %v717, 0.0
        %v874 = vmax.f32 %v551, 0.0
        %v875 = vmax.f32 %v720, 0.0
        %v876 = vmax.f32 %v553, 0.0
        %v877 = vmax.f32 %v722, 0.0
        %v878 = vmax.f32 %v556, 0.0
        %v879 = vmax.f32 %v725, 0.0
        %v880 = vmax.f32 %v558, 0.0
        %v881 = vmax.f32 %v727, 0.0
        %v882 = vmax.f32 %v561, 0.0
        %v883 = vmax.f32 %v730, 0.0
        %v884 = vmax.f32 %v563, 0.0
        %v885 = vmax.f32 %v732, 0.0
        %v886 = vmax.f32 %v566, 0.0
        %v887 = vmax.f32 %v735, 0.0
        %v888 = vmax.f32 %v568, 0.0
        %v889 = vmax.f32 %v737, 0.0
        %v890 = vmax.f32 %v571, 0.0
        %v891 = vmax.f32 %v740, 0.0
        %v892 = vmax.f32 %v573, 0.0
        %v893 = vmax.f32 %v742, 0.0
        %v894 = vmax.f32 %v576, 0.0
        %v895 = vmax.f32 %v745, 0.0
        %v896 = vmax.f32 %v578, 0.0
        %v897 = vmax.f32 %v747, 0.0
        %v898 = vmax.f32 %v581, 0.0
        %v899 = vmax.f32 %v750, 0.0
        %v900 = vmax.f32 %v583, 0.0
        %v901 = vmax.f32 %v752, 0.0
        %v902 = vmax.f32 %v586, 0.0
        %v903 = vmax.f32 %v755, 0.0
        %v904 = vmax.f32 %v588, 0.0
        %v905 = vmax.f32 %v757, 0.0
        %v906 = vmax.f32 %v591, 0.0
        %v907 = vmax.f32 %v760, 0.0
        %v908 = vmax.f32 %v593, 0.0
        %v909 = vmax.f32 %v762, 0.0
        %v910 = vmax.f32 %v596, 0.0
        %v911 = vmax.f32 %v765, 0.0
        %v912 = vmax.f32 %v598, 0.0
        %v913 = vmax.f32 %v767, 0.0
        %v914 = vmax.f32 %v601, 0.0
        %v915 = vmax.f32 %v770, 0.0
        %v916 = vmax.f32 %v603, 0.0
        %v917 = vmax.f32 %v772, 0.0
        %v918 = vmax.f32 %v606, 0.0
        %v919 = vmax.f32 %v775, 0.0
        %v920 = vmax.f32 %v608, 0.0
        %v921 = vmax.f32 %v777, 0.0
        %v922 = vmax.f32 %v611, 0.0
        %v923 = vmax.f32 %v780, 0.0
        %v924 = vmax.f32 %v613, 0.0
        %v925 = vmax.f32 %v782, 0.0
        %v926 = vmax.f32 %v616, 0.0
        %v927 = vmax.f32 %v785, 0.0
        %v928 = vmax.f32 %v618, 0.0
        %v929 = vmax.f32 %v787, 0.0
        %v930 = vmax.f32 %v621, 0.0
        %v931 = vmax.f32 %v790, 0.0
        %v932 = vmax.f32 %v623, 0.0
        %v933 = vmax.f32 %v792, 0.0
        %v934 = vmax.f32 %v626, 0.0
        %v935 = vmax.f32 %v795, 0.0
        %v936 = vmax.f32 %v628, 0.0
        %v937 = vmax.f32 %v797, 0.0
        %v938 = vmax.f32 %v631, 0.0
        %v939 = vmax.f32 %v800, 0.0
        %v940 = vmax.f32 %v633, 0.0
        %v941 = vmax.f32 %v802, 0.0
        %v942 = vmax.f32 %v636, 0.0
        %v943 = vmax.f32 %v805, 0.0
        %v944 = vmax.f32 %v638, 0.0
        %v945 = vmax.f32 %v807, 0.0
        %v946 = vmax.f32 %v641, 0.0
        %v947 = vmax.f32 %v810, 0.0
        %v948 = vmax.f32 %v643, 0.0
        %v949 = vmax.f32 %v812, 0.0
        %v950 = vmax.f32 %v646, 0.0
        %v951 = vmax.f32 %v815, 0.0
        %v952 = vmax.f32 %v648, 0.0
        %v953 = vmax.f32 %v817, 0.0
        %v954 = vmax.f32 %v651, 0.0
        %v955 = vmax.f32 %v820, 0.0
        %v956 = vmax.f32 %v653, 0.0
        %v957 = vmax.f32 %v822, 0.0
        %v958 = vmax.f32 %v656, 0.0
        %v959 = vmax.f32 %v825, 0.0
        %v960 = vmax.f32 %v658, 0.0
        %v961 = vmax.f32 %v827, 0.0
        %v962 = vmax.f32 %v661, 0.0
        %v963 = vmax.f32 %v830, 0.0
        %v964 = vmax.f32 %v663, 0.0
        %v965 = vmax.f32 %v832, 0.0
        %v966 = vmax.f32 %v666, 0.0
        %v967 = vmax.f32 %v835, 0.0
        %v968 = vmax.f32 %v668, 0.0
        %v969 = vmax.f32 %v837, 0.0
        %v970 = vmax.f32 %v671, 0.0
        %v971 = vmax.f32 %v840, 0.0
        %v972 = vmax.f32 %v673, 0.0
        %v973 = vmax.f32 %v842, 0.0
        %v974 = vmax.f32 %v676, 0.0
        %v975 = vmax.f32 %v845, 0.0
        %v976 = vmax.f32 %v678, 0.0
        %v977 = vmax.f32 %v847, 0.0
        %v978 = vmax.f32 %v681, 0.0
        %v979 = vmax.f32 %v850, 0.0
        %v980 = vmax.f32 %v683, 0.0
        %v981 = vmax.f32 %v852, 0.0
        %v982 = vpack.c.bf16 %v856, %v854
        %v983 = vpack.c.bf16 %v857, %v855
        %v984 = vpack.c.bf16 %v860, %v858
        %v985 = vpack.c.bf16 %v861, %v859
        %v986 = vpack.c.bf16 %v864, %v862
        %v987 = vpack.c.bf16 %v865, %v863
        %v988 = vpack.c.bf16 %v868, %v866
        %v989 = vpack.c.bf16 %v869, %v867
        %v990 = vpack.c.bf16 %v872, %v870
        %v991 = vpack.c.bf16 %v873, %v871
        %v992 = vpack.c.bf16 %v876, %v874
        %v993 = vpack.c.bf16 %v877, %v875
        %v994 = vpack.c.bf16 %v880, %v878
        %v995 = vpack.c.bf16 %v881, %v879
        %v996 = vpack.c.bf16 %v884, %v882
        %v997 = vpack.c.bf16 %v885, %v883
        %v998 = vpack.c.bf16 %v888, %v886
        %v999 = vpack.c.bf16 %v889, %v887
        %v1000 = vpack.c.bf16 %v892, %v890
        %v1001 = vpack.c.bf16 %v893, %v891
        %v1002 = vpack.c.bf16 %v896, %v894
        %v1003 = vpack.c.bf16 %v897, %v895
        %v1004 = vpack.c.bf16 %v900, %v898
        %v1005 = vpack.c.bf16 %v901, %v899
        %v1006 = vpack.c.bf16 %v904, %v902
        %v1007 = vpack.c.bf16 %v905, %v903
        %v1008 = vpack.c.bf16 %v908, %v906
        %v1009 = vpack.c.bf16 %v909, %v907
        %v1010 = vpack.c.bf16 %v912, %v910
        %v1011 = vpack.c.bf16 %v913, %v911
        %v1012 = vpack.c.bf16 %v916, %v914
        %v1013 = vpack.c.bf16 %v917, %v915
        %v1014 = vpack.c.bf16 %v920, %v918
        %v1015 = vpack.c.bf16 %v921, %v919
        %v1016 = vpack.c.bf16 %v924, %v922
        %v1017 = vpack.c.bf16 %v925, %v923
        %v1018 = vpack.c.bf16 %v928, %v926
        %v1019 = vpack.c.bf16 %v929, %v927
        %v1020 = vpack.c.bf16 %v932, %v930
        %v1021 = vpack.c.bf16 %v933, %v931
        %v1022 = vpack.c.bf16 %v936, %v934
        %v1023 = vpack.c.bf16 %v937, %v935
        %v1024 = vpack.c.bf16 %v940, %v938
        %v1025 = vpack.c.bf16 %v941, %v939
        %v1026 = vpack.c.bf16 %v944, %v942
        %v1027 = vpack.c.bf16 %v945, %v943
        %v1028 = vpack.c.bf16 %v948, %v946
        %v1029 = vpack.c.bf16 %v949, %v947
        %v1030 = vpack.c.bf16 %v952, %v950
        %v1031 = vpack.c.bf16 %v953, %v951
        %v1032 = vpack.c.bf16 %v956, %v954
        %v1033 = vpack.c.bf16 %v957, %v955
        %v1034 = vpack.c.bf16 %v960, %v958
        %v1035 = vpack.c.bf16 %v961, %v959
        %v1036 = vpack.c.bf16 %v964, %v962
        %v1037 = vpack.c.bf16 %v965, %v963
        %v1038 = vpack.c.bf16 %v968, %v966
        %v1039 = vpack.c.bf16 %v969, %v967
        %v1040 = vpack.c.bf16 %v972, %v970
        %v1041 = vpack.c.bf16 %v973, %v971
        %v1042 = vpack.c.bf16 %v976, %v974
        %v1043 = vpack.c.bf16 %v977, %v975
        %v1044 = vpack.c.bf16 %v980, %v978
        %v1045 = vpack.c.bf16 %v981, %v979
        %v1046 = vld [vmem:[%s3] sm:$0xff]
        %v1047 = vld [vmem:[%s3 + $0x8] sm:$0xff]
        %v1048 = vld [vmem:[%s3 + $0x10] sm:$0xff]
        %v1049 = vld [vmem:[%s3 + $0x18] sm:$0xff]
        %v1050 = vld [vmem:[%s3 + $0x20] sm:$0xff]
        %v1051 = vld [vmem:[%s3 + $0x28] sm:$0xff]
        %v1052 = vld [vmem:[%s3 + $0x30] sm:$0xff]
        %v1053 = vld [vmem:[%s3 + $0x38] sm:$0xff]
        %v1054 = vld [vmem:[%s3 + $0x40] sm:$0xff]
        %v1055 = vld [vmem:[%s3 + $0x48] sm:$0xff]
        %v1056 = vld [vmem:[%s3 + $0x50] sm:$0xff]
        %v1057 = vld [vmem:[%s3 + $0x58] sm:$0xff]
        %v1058 = vld [vmem:[%s3 + $0x60] sm:$0xff]
        %v1059 = vld [vmem:[%s3 + $0x68] sm:$0xff]
        %v1060 = vld [vmem:[%s3 + $0x70] sm:$0xff]
        %v1061 = vld [vmem:[%s3 + $0x78] sm:$0xff]
        %v1062 = vld [vmem:[%s3 + $0x80] sm:$0xff]
        %v1063 = vld [vmem:[%s3 + $0x88] sm:$0xff]
        %v1064 = vld [vmem:[%s3 + $0x90] sm:$0xff]
        %v1065 = vld [vmem:[%s3 + $0x98] sm:$0xff]
        %v1066 = vld [vmem:[%s3 + $0xa0] sm:$0xff]
        %v1067 = vld [vmem:[%s3 + $0xa8] sm:$0xff]
        %v1068 = vld [vmem:[%s3 + $0xb0] sm:$0xff]
        %v1069 = vld [vmem:[%s3 + $0xb8] sm:$0xff]
        %v1070 = vld [vmem:[%s3 + $0xc0] sm:$0xff]
        %v1071 = vld [vmem:[%s3 + $0xc8] sm:$0xff]
        %v1072 = vld [vmem:[%s3 + $0xd0] sm:$0xff]
        %v1073 = vld [vmem:[%s3 + $0xd8] sm:$0xff]
        %v1074 = vld [vmem:[%s3 + $0xe0] sm:$0xff]
        %v1075 = vld [vmem:[%s3 + $0xe8] sm:$0xff]
        %v1076 = vld [vmem:[%s3 + $0xf0] sm:$0xff]
        %v1077 = vld [vmem:[%s3 + $0xf8] sm:$0xff]
        %v1078 = vld [vmem:[%s4] sm:$0x3]
        %v1080 = vperm.slane %v1078, 0
        %v1081 = vperm.slane %v1078, 1
        %v1116 = vunpack.c.l.b16 %v1046
        %v1117 = vunpack.c.h.b16 %v1046
        %v1118 = vunpack.c.l.b16 %v1047
        %v1119 = vunpack.c.h.b16 %v1047
        %v1120 = vunpack.c.l.b16 %v1048
        %v1121 = vunpack.c.h.b16 %v1048
        %v1122 = vunpack.c.l.b16 %v1049
        %v1123 = vunpack.c.h.b16 %v1049
        %v1124 = vunpack.c.l.b16 %v1050
        %v1125 = vunpack.c.h.b16 %v1050
        %v1126 = vunpack.c.l.b16 %v1051
        %v1127 = vunpack.c.h.b16 %v1051
        %v1128 = vunpack.c.l.b16 %v1052
        %v1129 = vunpack.c.h.b16 %v1052
        %v1130 = vunpack.c.l.b16 %v1053
        %v1131 = vunpack.c.h.b16 %v1053
        %v1132 = vunpack.c.l.b16 %v1054
        %v1133 = vunpack.c.h.b16 %v1054
        %v1134 = vunpack.c.l.b16 %v1055
        %v1135 = vunpack.c.h.b16 %v1055
        %v1136 = vunpack.c.l.b16 %v1056
        %v1137 = vunpack.c.h.b16 %v1056
        %v1138 = vunpack.c.l.b16 %v1057
        %v1139 = vunpack.c.h.b16 %v1057
        %v1140 = vunpack.c.l.b16 %v1058
        %v1141 = vunpack.c.h.b16 %v1058
        %v1142 = vunpack.c.l.b16 %v1059
        %v1143 = vunpack.c.h.b16 %v1059
        %v1144 = vunpack.c.l.b16 %v1060
        %v1145 = vunpack.c.h.b16 %v1060
        %v1146 = vunpack.c.l.b16 %v1061
        %v1147 = vunpack.c.h.b16 %v1061
        %v1148 = vunpack.c.l.b16 %v1062
        %v1149 = vunpack.c.h.b16 %v1062
        %v1150 = vunpack.c.l.b16 %v1063
        %v1151 = vunpack.c.h.b16 %v1063
        %v1152 = vunpack.c.l.b16 %v1064
        %v1153 = vunpack.c.h.b16 %v1064
        %v1154 = vunpack.c.l.b16 %v1065
        %v1155 = vunpack.c.h.b16 %v1065
        %v1156 = vunpack.c.l.b16 %v1066
        %v1157 = vunpack.c.h.b16 %v1066
        %v1158 = vunpack.c.l.b16 %v1067
        %v1159 = vunpack.c.h.b16 %v1067
        %v1160 = vunpack.c.l.b16 %v1068
        %v1161 = vunpack.c.h.b16 %v1068
        %v1162 = vunpack.c.l.b16 %v1069
        %v1163 = vunpack.c.h.b16 %v1069
        %v1164 = vunpack.c.l.b16 %v1070
        %v1165 = vunpack.c.h.b16 %v1070
        %v1166 = vunpack.c.l.b16 %v1071
        %v1167 = vunpack.c.h.b16 %v1071
        %v1168 = vunpack.c.l.b16 %v1072
        %v1169 = vunpack.c.h.b16 %v1072
        %v1170 = vunpack.c.l.b16 %v1073
        %v1171 = vunpack.c.h.b16 %v1073
        %v1172 = vunpack.c.l.b16 %v1074
        %v1173 = vunpack.c.h.b16 %v1074
        %v1174 = vunpack.c.l.b16 %v1075
        %v1175 = vunpack.c.h.b16 %v1075
        %v1176 = vunpack.c.l.b16 %v1076
        %v1177 = vunpack.c.h.b16 %v1076
        %v1178 = vunpack.c.l.b16 %v1077
        %v1179 = vunpack.c.h.b16 %v1077
        %v1180 = vpack.c.b16 %v1118, %v1116
        %v1181 = vpack.c.b16 %v1119, %v1117
        %v1182 = vpack.c.b16 %v1122, %v1120
        %v1183 = vpack.c.b16 %v1123, %v1121
        %v1184 = vpack.c.b16 %v1126, %v1124
        %v1185 = vpack.c.b16 %v1127, %v1125
        %v1186 = vpack.c.b16 %v1130, %v1128
        %v1187 = vpack.c.b16 %v1131, %v1129
        %v1188 = vpack.c.b16 %v1134, %v1132
        %v1189 = vpack.c.b16 %v1135, %v1133
        %v1190 = vpack.c.b16 %v1138, %v1136
        %v1191 = vpack.c.b16 %v1139, %v1137
        %v1192 = vpack.c.b16 %v1142, %v1140
        %v1193 = vpack.c.b16 %v1143, %v1141
        %v1194 = vpack.c.b16 %v1146, %v1144
        %v1195 = vpack.c.b16 %v1147, %v1145
        %v1196 = vpack.c.b16 %v1150, %v1148
        %v1197 = vpack.c.b16 %v1151, %v1149
        %v1198 = vpack.c.b16 %v1154, %v1152
        %v1199 = vpack.c.b16 %v1155, %v1153
        %v1200 = vpack.c.b16 %v1158, %v1156
        %v1201 = vpack.c.b16 %v1159, %v1157
        %v1202 = vpack.c.b16 %v1162, %v1160
        %v1203 = vpack.c.b16 %v1163, %v1161
        %v1204 = vpack.c.b16 %v1166, %v1164
        %v1205 = vpack.c.b16 %v1167, %v1165
        %v1206 = vpack.c.b16 %v1170, %v1168
        %v1207 = vpack.c.b16 %v1171, %v1169
        %v1208 = vpack.c.b16 %v1174, %v1172
        %v1209 = vpack.c.b16 %v1175, %v1173
        %v1210 = vpack.c.b16 %v1178, %v1176
        %v1211 = vpack.c.b16 %v1179, %v1177
        %1244 = vmatpush.bf16.msra.mxu0 %v1194
        %1245 = vmatpush.bf16.msra.mxu0 %v1192
        %1246 = vmatpush.bf16.msra.mxu0 %v1190
        %1247 = vmatpush.bf16.msra.mxu0 %v1188
        %1248 = vmatpush.bf16.msra.mxu0 %v1186
        %1249 = vmatpush.bf16.msra.mxu0 %v1184
        %1250 = vmatpush.bf16.msra.mxu0 %v1182
        %1251 = vmatpush.bf16.msra.mxu0 %v1180
        %1252 = vmatmul.bf16.gmra.mxu0 %v982
        %v1253 = vpop.f32.mrf.mxu0
        %v1254 = vadd.f32 %v1080, %v1253
        %v1255 = vpop.f32.mrf.mxu0
        %v1256 = vadd.f32 %v1080, %v1255
        %1257 = vmatmul.bf16.gmra.mxu0 %v984
        %v1258 = vpop.f32.mrf.mxu0
        %v1259 = vadd.f32 %v1080, %v1258
        %v1260 = vpop.f32.mrf.mxu0
        %v1261 = vadd.f32 %v1080, %v1260
        %1262 = vmatmul.bf16.gmra.mxu0 %v986
        %v1263 = vpop.f32.mrf.mxu0
        %v1264 = vadd.f32 %v1080, %v1263
        %v1265 = vpop.f32.mrf.mxu0
        %v1266 = vadd.f32 %v1080, %v1265
        %1267 = vmatmul.bf16.gmra.mxu0 %v988
        %v1268 = vpop.f32.mrf.mxu0
        %v1269 = vadd.f32 %v1080, %v1268
        %v1270 = vpop.f32.mrf.mxu0
        %v1271 = vadd.f32 %v1080, %v1270
        %1272 = vmatmul.bf16.gmra.mxu0 %v990
        %v1273 = vpop.f32.mrf.mxu0
        %v1274 = vadd.f32 %v1080, %v1273
        %v1275 = vpop.f32.mrf.mxu0
        %v1276 = vadd.f32 %v1080, %v1275
        %1277 = vmatmul.bf16.gmra.mxu0 %v992
        %v1278 = vpop.f32.mrf.mxu0
        %v1279 = vadd.f32 %v1080, %v1278
        %v1280 = vpop.f32.mrf.mxu0
        %v1281 = vadd.f32 %v1080, %v1280
        %1282 = vmatmul.bf16.gmra.mxu0 %v994
        %v1283 = vpop.f32.mrf.mxu0
        %v1284 = vadd.f32 %v1080, %v1283
        %v1285 = vpop.f32.mrf.mxu0
        %v1286 = vadd.f32 %v1080, %v1285
        %1287 = vmatmul.bf16.gmra.mxu0 %v996
        %v1288 = vpop.f32.mrf.mxu0
        %v1289 = vadd.f32 %v1080, %v1288
        %v1290 = vpop.f32.mrf.mxu0
        %v1291 = vadd.f32 %v1080, %v1290
        %1292 = vmatmul.bf16.gmra.mxu0 %v998
        %v1293 = vpop.f32.mrf.mxu0
        %v1294 = vadd.f32 %v1080, %v1293
        %v1295 = vpop.f32.mrf.mxu0
        %v1296 = vadd.f32 %v1080, %v1295
        %1297 = vmatmul.bf16.gmra.mxu0 %v1000
        %v1298 = vpop.f32.mrf.mxu0
        %v1299 = vadd.f32 %v1080, %v1298
        %v1300 = vpop.f32.mrf.mxu0
        %v1301 = vadd.f32 %v1080, %v1300
        %1302 = vmatmul.bf16.gmra.mxu0 %v1002
        %v1303 = vpop.f32.mrf.mxu0
        %v1304 = vadd.f32 %v1080, %v1303
        %v1305 = vpop.f32.mrf.mxu0
        %v1306 = vadd.f32 %v1080, %v1305
        %1307 = vmatmul.bf16.gmra.mxu0 %v1004
        %v1308 = vpop.f32.mrf.mxu0
        %v1309 = vadd.f32 %v1080, %v1308
        %v1310 = vpop.f32.mrf.mxu0
        %v1311 = vadd.f32 %v1080, %v1310
        %1312 = vmatmul.bf16.gmra.mxu0 %v1006
        %v1313 = vpop.f32.mrf.mxu0
        %v1314 = vadd.f32 %v1080, %v1313
        %v1315 = vpop.f32.mrf.mxu0
        %v1316 = vadd.f32 %v1080, %v1315
        %1317 = vmatmul.bf16.gmra.mxu0 %v1008
        %v1318 = vpop.f32.mrf.mxu0
        %v1319 = vadd.f32 %v1080, %v1318
        %v1320 = vpop.f32.mrf.mxu0
        %v1321 = vadd.f32 %v1080, %v1320
        %1322 = vmatmul.bf16.gmra.mxu0 %v1010
        %v1323 = vpop.f32.mrf.mxu0
        %v1324 = vadd.f32 %v1080, %v1323
        %v1325 = vpop.f32.mrf.mxu0
        %v1326 = vadd.f32 %v1080, %v1325
        %1327 = vmatmul.bf16.gmra.mxu0 %v1012
        %v1328 = vpop.f32.mrf.mxu0
        %v1329 = vadd.f32 %v1080, %v1328
        %v1330 = vpop.f32.mrf.mxu0
        %v1331 = vadd.f32 %v1080, %v1330
        %1332 = vmatmul.bf16.gmra.mxu0 %v1014
        %v1333 = vpop.f32.mrf.mxu0
        %v1334 = vadd.f32 %v1080, %v1333
        %v1335 = vpop.f32.mrf.mxu0
        %v1336 = vadd.f32 %v1080, %v1335
        %1337 = vmatmul.bf16.gmra.mxu0 %v1016
        %v1338 = vpop.f32.mrf.mxu0
        %v1339 = vadd.f32 %v1080, %v1338
        %v1340 = vpop.f32.mrf.mxu0
        %v1341 = vadd.f32 %v1080, %v1340
        %1342 = vmatmul.bf16.gmra.mxu0 %v1018
        %v1343 = vpop.f32.mrf.mxu0
        %v1344 = vadd.f32 %v1080, %v1343
        %v1345 = vpop.f32.mrf.mxu0
        %v1346 = vadd.f32 %v1080, %v1345
        %1347 = vmatmul.bf16.gmra.mxu0 %v1020
        %v1348 = vpop.f32.mrf.mxu0
        %v1349 = vadd.f32 %v1080, %v1348
        %v1350 = vpop.f32.mrf.mxu0
        %v1351 = vadd.f32 %v1080, %v1350
        %1352 = vmatmul.bf16.gmra.mxu0 %v1022
        %v1353 = vpop.f32.mrf.mxu0
        %v1354 = vadd.f32 %v1080, %v1353
        %v1355 = vpop.f32.mrf.mxu0
        %v1356 = vadd.f32 %v1080, %v1355
        %1357 = vmatmul.bf16.gmra.mxu0 %v1024
        %v1358 = vpop.f32.mrf.mxu0
        %v1359 = vadd.f32 %v1080, %v1358
        %v1360 = vpop.f32.mrf.mxu0
        %v1361 = vadd.f32 %v1080, %v1360
        %1362 = vmatmul.bf16.gmra.mxu0 %v1026
        %v1363 = vpop.f32.mrf.mxu0
        %v1364 = vadd.f32 %v1080, %v1363
        %v1365 = vpop.f32.mrf.mxu0
        %v1366 = vadd.f32 %v1080, %v1365
        %1367 = vmatmul.bf16.gmra.mxu0 %v1028
        %v1368 = vpop.f32.mrf.mxu0
        %v1369 = vadd.f32 %v1080, %v1368
        %v1370 = vpop.f32.mrf.mxu0
        %v1371 = vadd.f32 %v1080, %v1370
        %1372 = vmatmul.bf16.gmra.mxu0 %v1030
        %v1373 = vpop.f32.mrf.mxu0
        %v1374 = vadd.f32 %v1080, %v1373
        %v1375 = vpop.f32.mrf.mxu0
        %v1376 = vadd.f32 %v1080, %v1375
        %1377 = vmatmul.bf16.gmra.mxu0 %v1032
        %v1378 = vpop.f32.mrf.mxu0
        %v1379 = vadd.f32 %v1080, %v1378
        %v1380 = vpop.f32.mrf.mxu0
        %v1381 = vadd.f32 %v1080, %v1380
        %1382 = vmatmul.bf16.gmra.mxu0 %v1034
        %v1383 = vpop.f32.mrf.mxu0
        %v1384 = vadd.f32 %v1080, %v1383
        %v1385 = vpop.f32.mrf.mxu0
        %v1386 = vadd.f32 %v1080, %v1385
        %1387 = vmatmul.bf16.gmra.mxu0 %v1036
        %v1388 = vpop.f32.mrf.mxu0
        %v1389 = vadd.f32 %v1080, %v1388
        %v1390 = vpop.f32.mrf.mxu0
        %v1391 = vadd.f32 %v1080, %v1390
        %1392 = vmatmul.bf16.gmra.mxu0 %v1038
        %v1393 = vpop.f32.mrf.mxu0
        %v1394 = vadd.f32 %v1080, %v1393
        %v1395 = vpop.f32.mrf.mxu0
        %v1396 = vadd.f32 %v1080, %v1395
        %1397 = vmatmul.bf16.gmra.mxu0 %v1040
        %v1398 = vpop.f32.mrf.mxu0
        %v1399 = vadd.f32 %v1080, %v1398
        %v1400 = vpop.f32.mrf.mxu0
        %v1401 = vadd.f32 %v1080, %v1400
        %1402 = vmatmul.bf16.gmra.mxu0 %v1042
        %v1403 = vpop.f32.mrf.mxu0
        %v1404 = vadd.f32 %v1080, %v1403
        %v1405 = vpop.f32.mrf.mxu0
        %v1406 = vadd.f32 %v1080, %v1405
        %1407 = vmatmul.bf16.gmra.mxu0 %v1044
        %v1408 = vpop.f32.mrf.mxu0
        %v1409 = vadd.f32 %v1080, %v1408
        %v1410 = vpop.f32.mrf.mxu0
        %v1411 = vadd.f32 %v1080, %v1410
        %1412 = vdwg.mxu0
        %1413 = vmatpush.bf16.msra.mxu0 %v1210
        %1414 = vmatpush.bf16.msra.mxu0 %v1208
        %1415 = vmatpush.bf16.msra.mxu0 %v1206
        %1416 = vmatpush.bf16.msra.mxu0 %v1204
        %1417 = vmatpush.bf16.msra.mxu0 %v1202
        %1418 = vmatpush.bf16.msra.mxu0 %v1200
        %1419 = vmatpush.bf16.msra.mxu0 %v1198
        %1420 = vmatpush.bf16.msra.mxu0 %v1196
        %1421 = vmatmul.bf16.gmra.mxu0 %v983
        %v1422 = vpop.f32.mrf.mxu0
        %v1423 = vadd.f32 %v1254, %v1422
        %v1424 = vpop.f32.mrf.mxu0
        %v1425 = vadd.f32 %v1256, %v1424
        %1426 = vmatmul.bf16.gmra.mxu0 %v985
        %v1427 = vpop.f32.mrf.mxu0
        %v1428 = vadd.f32 %v1259, %v1427
        %v1429 = vpop.f32.mrf.mxu0
        %v1430 = vadd.f32 %v1261, %v1429
        %1431 = vmatmul.bf16.gmra.mxu0 %v987
        %v1432 = vpop.f32.mrf.mxu0
        %v1433 = vadd.f32 %v1264, %v1432
        %v1434 = vpop.f32.mrf.mxu0
        %v1435 = vadd.f32 %v1266, %v1434
        %1436 = vmatmul.bf16.gmra.mxu0 %v989
        %v1437 = vpop.f32.mrf.mxu0
        %v1438 = vadd.f32 %v1269, %v1437
        %v1439 = vpop.f32.mrf.mxu0
        %v1440 = vadd.f32 %v1271, %v1439
        %1441 = vmatmul.bf16.gmra.mxu0 %v991
        %v1442 = vpop.f32.mrf.mxu0
        %v1443 = vadd.f32 %v1274, %v1442
        %v1444 = vpop.f32.mrf.mxu0
        %v1445 = vadd.f32 %v1276, %v1444
        %1446 = vmatmul.bf16.gmra.mxu0 %v993
        %v1447 = vpop.f32.mrf.mxu0
        %v1448 = vadd.f32 %v1279, %v1447
        %v1449 = vpop.f32.mrf.mxu0
        %v1450 = vadd.f32 %v1281, %v1449
        %1451 = vmatmul.bf16.gmra.mxu0 %v995
        %v1452 = vpop.f32.mrf.mxu0
        %v1453 = vadd.f32 %v1284, %v1452
        %v1454 = vpop.f32.mrf.mxu0
        %v1455 = vadd.f32 %v1286, %v1454
        %1456 = vmatmul.bf16.gmra.mxu0 %v997
        %v1457 = vpop.f32.mrf.mxu0
        %v1458 = vadd.f32 %v1289, %v1457
        %v1459 = vpop.f32.mrf.mxu0
        %v1460 = vadd.f32 %v1291, %v1459
        %1461 = vmatmul.bf16.gmra.mxu0 %v999
        %v1462 = vpop.f32.mrf.mxu0
        %v1463 = vadd.f32 %v1294, %v1462
        %v1464 = vpop.f32.mrf.mxu0
        %v1465 = vadd.f32 %v1296, %v1464
        %1466 = vmatmul.bf16.gmra.mxu0 %v1001
        %v1467 = vpop.f32.mrf.mxu0
        %v1468 = vadd.f32 %v1299, %v1467
        %v1469 = vpop.f32.mrf.mxu0
        %v1470 = vadd.f32 %v1301, %v1469
        %1471 = vmatmul.bf16.gmra.mxu0 %v1003
        %v1472 = vpop.f32.mrf.mxu0
        %v1473 = vadd.f32 %v1304, %v1472
        %v1474 = vpop.f32.mrf.mxu0
        %v1475 = vadd.f32 %v1306, %v1474
        %1476 = vmatmul.bf16.gmra.mxu0 %v1005
        %v1477 = vpop.f32.mrf.mxu0
        %v1478 = vadd.f32 %v1309, %v1477
        %v1479 = vpop.f32.mrf.mxu0
        %v1480 = vadd.f32 %v1311, %v1479
        %1481 = vmatmul.bf16.gmra.mxu0 %v1007
        %v1482 = vpop.f32.mrf.mxu0
        %v1483 = vadd.f32 %v1314, %v1482
        %v1484 = vpop.f32.mrf.mxu0
        %v1485 = vadd.f32 %v1316, %v1484
        %1486 = vmatmul.bf16.gmra.mxu0 %v1009
        %v1487 = vpop.f32.mrf.mxu0
        %v1488 = vadd.f32 %v1319, %v1487
        %v1489 = vpop.f32.mrf.mxu0
        %v1490 = vadd.f32 %v1321, %v1489
        %1491 = vmatmul.bf16.gmra.mxu0 %v1011
        %v1492 = vpop.f32.mrf.mxu0
        %v1493 = vadd.f32 %v1324, %v1492
        %v1494 = vpop.f32.mrf.mxu0
        %v1495 = vadd.f32 %v1326, %v1494
        %1496 = vmatmul.bf16.gmra.mxu0 %v1013
        %v1497 = vpop.f32.mrf.mxu0
        %v1498 = vadd.f32 %v1329, %v1497
        %v1499 = vpop.f32.mrf.mxu0
        %v1500 = vadd.f32 %v1331, %v1499
        %1501 = vmatmul.bf16.gmra.mxu0 %v1015
        %v1502 = vpop.f32.mrf.mxu0
        %v1503 = vadd.f32 %v1334, %v1502
        %v1504 = vpop.f32.mrf.mxu0
        %v1505 = vadd.f32 %v1336, %v1504
        %1506 = vmatmul.bf16.gmra.mxu0 %v1017
        %v1507 = vpop.f32.mrf.mxu0
        %v1508 = vadd.f32 %v1339, %v1507
        %v1509 = vpop.f32.mrf.mxu0
        %v1510 = vadd.f32 %v1341, %v1509
        %1511 = vmatmul.bf16.gmra.mxu0 %v1019
        %v1512 = vpop.f32.mrf.mxu0
        %v1513 = vadd.f32 %v1344, %v1512
        %v1514 = vpop.f32.mrf.mxu0
        %v1515 = vadd.f32 %v1346, %v1514
        %1516 = vmatmul.bf16.gmra.mxu0 %v1021
        %v1517 = vpop.f32.mrf.mxu0
        %v1518 = vadd.f32 %v1349, %v1517
        %v1519 = vpop.f32.mrf.mxu0
        %v1520 = vadd.f32 %v1351, %v1519
        %1521 = vmatmul.bf16.gmra.mxu0 %v1023
        %v1522 = vpop.f32.mrf.mxu0
        %v1523 = vadd.f32 %v1354, %v1522
        %v1524 = vpop.f32.mrf.mxu0
        %v1525 = vadd.f32 %v1356, %v1524
        %1526 = vmatmul.bf16.gmra.mxu0 %v1025
        %v1527 = vpop.f32.mrf.mxu0
        %v1528 = vadd.f32 %v1359, %v1527
        %v1529 = vpop.f32.mrf.mxu0
        %v1530 = vadd.f32 %v1361, %v1529
        %1531 = vmatmul.bf16.gmra.mxu0 %v1027
        %v1532 = vpop.f32.mrf.mxu0
        %v1533 = vadd.f32 %v1364, %v1532
        %v1534 = vpop.f32.mrf.mxu0
        %v1535 = vadd.f32 %v1366, %v1534
        %1536 = vmatmul.bf16.gmra.mxu0 %v1029
        %v1537 = vpop.f32.mrf.mxu0
        %v1538 = vadd.f32 %v1369, %v1537
        %v1539 = vpop.f32.mrf.mxu0
        %v1540 = vadd.f32 %v1371, %v1539
        %1541 = vmatmul.bf16.gmra.mxu0 %v1031
        %v1542 = vpop.f32.mrf.mxu0
        %v1543 = vadd.f32 %v1374, %v1542
        %v1544 = vpop.f32.mrf.mxu0
        %v1545 = vadd.f32 %v1376, %v1544
        %1546 = vmatmul.bf16.gmra.mxu0 %v1033
        %v1547 = vpop.f32.mrf.mxu0
        %v1548 = vadd.f32 %v1379, %v1547
        %v1549 = vpop.f32.mrf.mxu0
        %v1550 = vadd.f32 %v1381, %v1549
        %1551 = vmatmul.bf16.gmra.mxu0 %v1035
        %v1552 = vpop.f32.mrf.mxu0
        %v1553 = vadd.f32 %v1384, %v1552
        %v1554 = vpop.f32.mrf.mxu0
        %v1555 = vadd.f32 %v1386, %v1554
        %1556 = vmatmul.bf16.gmra.mxu0 %v1037
        %v1557 = vpop.f32.mrf.mxu0
        %v1558 = vadd.f32 %v1389, %v1557
        %v1559 = vpop.f32.mrf.mxu0
        %v1560 = vadd.f32 %v1391, %v1559
        %1561 = vmatmul.bf16.gmra.mxu0 %v1039
        %v1562 = vpop.f32.mrf.mxu0
        %v1563 = vadd.f32 %v1394, %v1562
        %v1564 = vpop.f32.mrf.mxu0
        %v1565 = vadd.f32 %v1396, %v1564
        %1566 = vmatmul.bf16.gmra.mxu0 %v1041
        %v1567 = vpop.f32.mrf.mxu0
        %v1568 = vadd.f32 %v1399, %v1567
        %v1569 = vpop.f32.mrf.mxu0
        %v1570 = vadd.f32 %v1401, %v1569
        %1571 = vmatmul.bf16.gmra.mxu0 %v1043
        %v1572 = vpop.f32.mrf.mxu0
        %v1573 = vadd.f32 %v1404, %v1572
        %v1574 = vpop.f32.mrf.mxu0
        %v1575 = vadd.f32 %v1406, %v1574
        %1576 = vmatmul.bf16.gmra.mxu0 %v1045
        %v1577 = vpop.f32.mrf.mxu0
        %v1578 = vadd.f32 %v1409, %v1577
        %v1579 = vpop.f32.mrf.mxu0
        %v1580 = vadd.f32 %v1411, %v1579
        %1581 = vdwg.mxu0
        %1582 = vmatpush.bf16.msra.mxu0 %v1195
        %1583 = vmatpush.bf16.msra.mxu0 %v1193
        %1584 = vmatpush.bf16.msra.mxu0 %v1191
        %1585 = vmatpush.bf16.msra.mxu0 %v1189
        %1586 = vmatpush.bf16.msra.mxu0 %v1187
        %1587 = vmatpush.bf16.msra.mxu0 %v1185
        %1588 = vmatpush.bf16.msra.mxu0 %v1183
        %1589 = vmatpush.bf16.msra.mxu0 %v1181
        %1590 = vmatmul.bf16.gmra.mxu0 %v982
        %v1591 = vpop.f32.mrf.mxu0
        %v1592 = vadd.f32 %v1081, %v1591
        %v1593 = vpop.f32.mrf.mxu0
        %v1594 = vadd.f32 %v1081, %v1593
        %1595 = vmatmul.bf16.gmra.mxu0 %v984
        %v1596 = vpop.f32.mrf.mxu0
        %v1597 = vadd.f32 %v1081, %v1596
        %v1598 = vpop.f32.mrf.mxu0
        %v1599 = vadd.f32 %v1081, %v1598
        %1600 = vmatmul.bf16.gmra.mxu0 %v986
        %v1601 = vpop.f32.mrf.mxu0
        %v1602 = vadd.f32 %v1081, %v1601
        %v1603 = vpop.f32.mrf.mxu0
        %v1604 = vadd.f32 %v1081, %v1603
        %1605 = vmatmul.bf16.gmra.mxu0 %v988
        %v1606 = vpop.f32.mrf.mxu0
        %v1607 = vadd.f32 %v1081, %v1606
        %v1608 = vpop.f32.mrf.mxu0
        %v1609 = vadd.f32 %v1081, %v1608
        %1610 = vmatmul.bf16.gmra.mxu0 %v990
        %v1611 = vpop.f32.mrf.mxu0
        %v1612 = vadd.f32 %v1081, %v1611
        %v1613 = vpop.f32.mrf.mxu0
        %v1614 = vadd.f32 %v1081, %v1613
        %1615 = vmatmul.bf16.gmra.mxu0 %v992
        %v1616 = vpop.f32.mrf.mxu0
        %v1617 = vadd.f32 %v1081, %v1616
        %v1618 = vpop.f32.mrf.mxu0
        %v1619 = vadd.f32 %v1081, %v1618
        %1620 = vmatmul.bf16.gmra.mxu0 %v994
        %v1621 = vpop.f32.mrf.mxu0
        %v1622 = vadd.f32 %v1081, %v1621
        %v1623 = vpop.f32.mrf.mxu0
        %v1624 = vadd.f32 %v1081, %v1623
        %1625 = vmatmul.bf16.gmra.mxu0 %v996
        %v1626 = vpop.f32.mrf.mxu0
        %v1627 = vadd.f32 %v1081, %v1626
        %v1628 = vpop.f32.mrf.mxu0
        %v1629 = vadd.f32 %v1081, %v1628
        %1630 = vmatmul.bf16.gmra.mxu0 %v998
        %v1631 = vpop.f32.mrf.mxu0
        %v1632 = vadd.f32 %v1081, %v1631
        %v1633 = vpop.f32.mrf.mxu0
        %v1634 = vadd.f32 %v1081, %v1633
        %1635 = vmatmul.bf16.gmra.mxu0 %v1000
        %v1636 = vpop.f32.mrf.mxu0
        %v1637 = vadd.f32 %v1081, %v1636
        %v1638 = vpop.f32.mrf.mxu0
        %v1639 = vadd.f32 %v1081, %v1638
        %1640 = vmatmul.bf16.gmra.mxu0 %v1002
        %v1641 = vpop.f32.mrf.mxu0
        %v1642 = vadd.f32 %v1081, %v1641
        %v1643 = vpop.f32.mrf.mxu0
        %v1644 = vadd.f32 %v1081, %v1643
        %1645 = vmatmul.bf16.gmra.mxu0 %v1004
        %v1646 = vpop.f32.mrf.mxu0
        %v1647 = vadd.f32 %v1081, %v1646
        %v1648 = vpop.f32.mrf.mxu0
        %v1649 = vadd.f32 %v1081, %v1648
        %1650 = vmatmul.bf16.gmra.mxu0 %v1006
        %v1651 = vpop.f32.mrf.mxu0
        %v1652 = vadd.f32 %v1081, %v1651
        %v1653 = vpop.f32.mrf.mxu0
        %v1654 = vadd.f32 %v1081, %v1653
        %1655 = vmatmul.bf16.gmra.mxu0 %v1008
        %v1656 = vpop.f32.mrf.mxu0
        %v1657 = vadd.f32 %v1081, %v1656
        %v1658 = vpop.f32.mrf.mxu0
        %v1659 = vadd.f32 %v1081, %v1658
        %1660 = vmatmul.bf16.gmra.mxu0 %v1010
        %v1661 = vpop.f32.mrf.mxu0
        %v1662 = vadd.f32 %v1081, %v1661
        %v1663 = vpop.f32.mrf.mxu0
        %v1664 = vadd.f32 %v1081, %v1663
        %1665 = vmatmul.bf16.gmra.mxu0 %v1012
        %v1666 = vpop.f32.mrf.mxu0
        %v1667 = vadd.f32 %v1081, %v1666
        %v1668 = vpop.f32.mrf.mxu0
        %v1669 = vadd.f32 %v1081, %v1668
        %1670 = vmatmul.bf16.gmra.mxu0 %v1014
        %v1671 = vpop.f32.mrf.mxu0
        %v1672 = vadd.f32 %v1081, %v1671
        %v1673 = vpop.f32.mrf.mxu0
        %v1674 = vadd.f32 %v1081, %v1673
        %1675 = vmatmul.bf16.gmra.mxu0 %v1016
        %v1676 = vpop.f32.mrf.mxu0
        %v1677 = vadd.f32 %v1081, %v1676
        %v1678 = vpop.f32.mrf.mxu0
        %v1679 = vadd.f32 %v1081, %v1678
        %1680 = vmatmul.bf16.gmra.mxu0 %v1018
        %v1681 = vpop.f32.mrf.mxu0
        %v1682 = vadd.f32 %v1081, %v1681
        %v1683 = vpop.f32.mrf.mxu0
        %v1684 = vadd.f32 %v1081, %v1683
        %1685 = vmatmul.bf16.gmra.mxu0 %v1020
        %v1686 = vpop.f32.mrf.mxu0
        %v1687 = vadd.f32 %v1081, %v1686
        %v1688 = vpop.f32.mrf.mxu0
        %v1689 = vadd.f32 %v1081, %v1688
        %1690 = vmatmul.bf16.gmra.mxu0 %v1022
        %v1691 = vpop.f32.mrf.mxu0
        %v1692 = vadd.f32 %v1081, %v1691
        %v1693 = vpop.f32.mrf.mxu0
        %v1694 = vadd.f32 %v1081, %v1693
        %1695 = vmatmul.bf16.gmra.mxu0 %v1024
        %v1696 = vpop.f32.mrf.mxu0
        %v1697 = vadd.f32 %v1081, %v1696
        %v1698 = vpop.f32.mrf.mxu0
        %v1699 = vadd.f32 %v1081, %v1698
        %1700 = vmatmul.bf16.gmra.mxu0 %v1026
        %v1701 = vpop.f32.mrf.mxu0
        %v1702 = vadd.f32 %v1081, %v1701
        %v1703 = vpop.f32.mrf.mxu0
        %v1704 = vadd.f32 %v1081, %v1703
        %1705 = vmatmul.bf16.gmra.mxu0 %v1028
        %v1706 = vpop.f32.mrf.mxu0
        %v1707 = vadd.f32 %v1081, %v1706
        %v1708 = vpop.f32.mrf.mxu0
        %v1709 = vadd.f32 %v1081, %v1708
        %1710 = vmatmul.bf16.gmra.mxu0 %v1030
        %v1711 = vpop.f32.mrf.mxu0
        %v1712 = vadd.f32 %v1081, %v1711
        %v1713 = vpop.f32.mrf.mxu0
        %v1714 = vadd.f32 %v1081, %v1713
        %1715 = vmatmul.bf16.gmra.mxu0 %v1032
        %v1716 = vpop.f32.mrf.mxu0
        %v1717 = vadd.f32 %v1081, %v1716
        %v1718 = vpop.f32.mrf.mxu0
        %v1719 = vadd.f32 %v1081, %v1718
        %1720 = vmatmul.bf16.gmra.mxu0 %v1034
        %v1721 = vpop.f32.mrf.mxu0
        %v1722 = vadd.f32 %v1081, %v1721
        %v1723 = vpop.f32.mrf.mxu0
        %v1724 = vadd.f32 %v1081, %v1723
        %1725 = vmatmul.bf16.gmra.mxu0 %v1036
        %v1726 = vpop.f32.mrf.mxu0
        %v1727 = vadd.f32 %v1081, %v1726
        %v1728 = vpop.f32.mrf.mxu0
        %v1729 = vadd.f32 %v1081, %v1728
        %1730 = vmatmul.bf16.gmra.mxu0 %v1038
        %v1731 = vpop.f32.mrf.mxu0
        %v1732 = vadd.f32 %v1081, %v1731
        %v1733 = vpop.f32.mrf.mxu0
        %v1734 = vadd.f32 %v1081, %v1733
        %1735 = vmatmul.bf16.gmra.mxu0 %v1040
        %v1736 = vpop.f32.mrf.mxu0
        %v1737 = vadd.f32 %v1081, %v1736
        %v1738 = vpop.f32.mrf.mxu0
        %v1739 = vadd.f32 %v1081, %v1738
        %1740 = vmatmul.bf16.gmra.mxu0 %v1042
        %v1741 = vpop.f32.mrf.mxu0
        %v1742 = vadd.f32 %v1081, %v1741
        %v1743 = vpop.f32.mrf.mxu0
        %v1744 = vadd.f32 %v1081, %v1743
        %1745 = vmatmul.bf16.gmra.mxu0 %v1044
        %v1746 = vpop.f32.mrf.mxu0
        %v1747 = vadd.f32 %v1081, %v1746
        %v1748 = vpop.f32.mrf.mxu0
        %v1749 = vadd.f32 %v1081, %v1748
        %1750 = vdwg.mxu0
        %1751 = vmatpush.bf16.msra.mxu0 %v1211
        %1752 = vmatpush.bf16.msra.mxu0 %v1209
        %1753 = vmatpush.bf16.msra.mxu0 %v1207
        %1754 = vmatpush.bf16.msra.mxu0 %v1205
        %1755 = vmatpush.bf16.msra.mxu0 %v1203
        %1756 = vmatpush.bf16.msra.mxu0 %v1201
        %1757 = vmatpush.bf16.msra.mxu0 %v1199
        %1758 = vmatpush.bf16.msra.mxu0 %v1197
        %1759 = vmatmul.bf16.gmra.mxu0 %v983
        %v1760 = vpop.f32.mrf.mxu0
        %v1761 = vadd.f32 %v1592, %v1760
        %v1762 = vpop.f32.mrf.mxu0
        %v1763 = vadd.f32 %v1594, %v1762
        %1764 = vmatmul.bf16.gmra.mxu0 %v985
        %v1765 = vpop.f32.mrf.mxu0
        %v1766 = vadd.f32 %v1597, %v1765
        %v1767 = vpop.f32.mrf.mxu0
        %v1768 = vadd.f32 %v1599, %v1767
        %1769 = vmatmul.bf16.gmra.mxu0 %v987
        %v1770 = vpop.f32.mrf.mxu0
        %v1771 = vadd.f32 %v1602, %v1770
        %v1772 = vpop.f32.mrf.mxu0
        %v1773 = vadd.f32 %v1604, %v1772
        %1774 = vmatmul.bf16.gmra.mxu0 %v989
        %v1775 = vpop.f32.mrf.mxu0
        %v1776 = vadd.f32 %v1607, %v1775
        %v1777 = vpop.f32.mrf.mxu0
        %v1778 = vadd.f32 %v1609, %v1777
        %1779 = vmatmul.bf16.gmra.mxu0 %v991
        %v1780 = vpop.f32.mrf.mxu0
        %v1781 = vadd.f32 %v1612, %v1780
        %v1782 = vpop.f32.mrf.mxu0
        %v1783 = vadd.f32 %v1614, %v1782
        %1784 = vmatmul.bf16.gmra.mxu0 %v993
        %v1785 = vpop.f32.mrf.mxu0
        %v1786 = vadd.f32 %v1617, %v1785
        %v1787 = vpop.f32.mrf.mxu0
        %v1788 = vadd.f32 %v1619, %v1787
        %1789 = vmatmul.bf16.gmra.mxu0 %v995
        %v1790 = vpop.f32.mrf.mxu0
        %v1791 = vadd.f32 %v1622, %v1790
        %v1792 = vpop.f32.mrf.mxu0
        %v1793 = vadd.f32 %v1624, %v1792
        %1794 = vmatmul.bf16.gmra.mxu0 %v997
        %v1795 = vpop.f32.mrf.mxu0
        %v1796 = vadd.f32 %v1627, %v1795
        %v1797 = vpop.f32.mrf.mxu0
        %v1798 = vadd.f32 %v1629, %v1797
        %1799 = vmatmul.bf16.gmra.mxu0 %v999
        %v1800 = vpop.f32.mrf.mxu0
        %v1801 = vadd.f32 %v1632, %v1800
        %v1802 = vpop.f32.mrf.mxu0
        %v1803 = vadd.f32 %v1634, %v1802
        %1804 = vmatmul.bf16.gmra.mxu0 %v1001
        %v1805 = vpop.f32.mrf.mxu0
        %v1806 = vadd.f32 %v1637, %v1805
        %v1807 = vpop.f32.mrf.mxu0
        %v1808 = vadd.f32 %v1639, %v1807
        %1809 = vmatmul.bf16.gmra.mxu0 %v1003
        %v1810 = vpop.f32.mrf.mxu0
        %v1811 = vadd.f32 %v1642, %v1810
        %v1812 = vpop.f32.mrf.mxu0
        %v1813 = vadd.f32 %v1644, %v1812
        %1814 = vmatmul.bf16.gmra.mxu0 %v1005
        %v1815 = vpop.f32.mrf.mxu0
        %v1816 = vadd.f32 %v1647, %v1815
        %v1817 = vpop.f32.mrf.mxu0
        %v1818 = vadd.f32 %v1649, %v1817
        %1819 = vmatmul.bf16.gmra.mxu0 %v1007
        %v1820 = vpop.f32.mrf.mxu0
        %v1821 = vadd.f32 %v1652, %v1820
        %v1822 = vpop.f32.mrf.mxu0
        %v1823 = vadd.f32 %v1654, %v1822
        %1824 = vmatmul.bf16.gmra.mxu0 %v1009
        %v1825 = vpop.f32.mrf.mxu0
        %v1826 = vadd.f32 %v1657, %v1825
        %v1827 = vpop.f32.mrf.mxu0
        %v1828 = vadd.f32 %v1659, %v1827
        %1829 = vmatmul.bf16.gmra.mxu0 %v1011
        %v1830 = vpop.f32.mrf.mxu0
        %v1831 = vadd.f32 %v1662, %v1830
        %v1832 = vpop.f32.mrf.mxu0
        %v1833 = vadd.f32 %v1664, %v1832
        %1834 = vmatmul.bf16.gmra.mxu0 %v1013
        %v1835 = vpop.f32.mrf.mxu0
        %v1836 = vadd.f32 %v1667, %v1835
        %v1837 = vpop.f32.mrf.mxu0
        %v1838 = vadd.f32 %v1669, %v1837
        %1839 = vmatmul.bf16.gmra.mxu0 %v1015
        %v1840 = vpop.f32.mrf.mxu0
        %v1841 = vadd.f32 %v1672, %v1840
        %v1842 = vpop.f32.mrf.mxu0
        %v1843 = vadd.f32 %v1674, %v1842
        %1844 = vmatmul.bf16.gmra.mxu0 %v1017
        %v1845 = vpop.f32.mrf.mxu0
        %v1846 = vadd.f32 %v1677, %v1845
        %v1847 = vpop.f32.mrf.mxu0
        %v1848 = vadd.f32 %v1679, %v1847
        %1849 = vmatmul.bf16.gmra.mxu0 %v1019
        %v1850 = vpop.f32.mrf.mxu0
        %v1851 = vadd.f32 %v1682, %v1850
        %v1852 = vpop.f32.mrf.mxu0
        %v1853 = vadd.f32 %v1684, %v1852
        %1854 = vmatmul.bf16.gmra.mxu0 %v1021
        %v1855 = vpop.f32.mrf.mxu0
        %v1856 = vadd.f32 %v1687, %v1855
        %v1857 = vpop.f32.mrf.mxu0
        %v1858 = vadd.f32 %v1689, %v1857
        %1859 = vmatmul.bf16.gmra.mxu0 %v1023
        %v1860 = vpop.f32.mrf.mxu0
        %v1861 = vadd.f32 %v1692, %v1860
        %v1862 = vpop.f32.mrf.mxu0
        %v1863 = vadd.f32 %v1694, %v1862
        %1864 = vmatmul.bf16.gmra.mxu0 %v1025
        %v1865 = vpop.f32.mrf.mxu0
        %v1866 = vadd.f32 %v1697, %v1865
        %v1867 = vpop.f32.mrf.mxu0
        %v1868 = vadd.f32 %v1699, %v1867
        %1869 = vmatmul.bf16.gmra.mxu0 %v1027
        %v1870 = vpop.f32.mrf.mxu0
        %v1871 = vadd.f32 %v1702, %v1870
        %v1872 = vpop.f32.mrf.mxu0
        %v1873 = vadd.f32 %v1704, %v1872
        %1874 = vmatmul.bf16.gmra.mxu0 %v1029
        %v1875 = vpop.f32.mrf.mxu0
        %v1876 = vadd.f32 %v1707, %v1875
        %v1877 = vpop.f32.mrf.mxu0
        %v1878 = vadd.f32 %v1709, %v1877
        %1879 = vmatmul.bf16.gmra.mxu0 %v1031
        %v1880 = vpop.f32.mrf.mxu0
        %v1881 = vadd.f32 %v1712, %v1880
        %v1882 = vpop.f32.mrf.mxu0
        %v1883 = vadd.f32 %v1714, %v1882
        %1884 = vmatmul.bf16.gmra.mxu0 %v1033
        %v1885 = vpop.f32.mrf.mxu0
        %v1886 = vadd.f32 %v1717, %v1885
        %v1887 = vpop.f32.mrf.mxu0
        %v1888 = vadd.f32 %v1719, %v1887
        %1889 = vmatmul.bf16.gmra.mxu0 %v1035
        %v1890 = vpop.f32.mrf.mxu0
        %v1891 = vadd.f32 %v1722, %v1890
        %v1892 = vpop.f32.mrf.mxu0
        %v1893 = vadd.f32 %v1724, %v1892
        %1894 = vmatmul.bf16.gmra.mxu0 %v1037
        %v1895 = vpop.f32.mrf.mxu0
        %v1896 = vadd.f32 %v1727, %v1895
        %v1897 = vpop.f32.mrf.mxu0
        %v1898 = vadd.f32 %v1729, %v1897
        %1899 = vmatmul.bf16.gmra.mxu0 %v1039
        %v1900 = vpop.f32.mrf.mxu0
        %v1901 = vadd.f32 %v1732, %v1900
        %v1902 = vpop.f32.mrf.mxu0
        %v1903 = vadd.f32 %v1734, %v1902
        %1904 = vmatmul.bf16.gmra.mxu0 %v1041
        %v1905 = vpop.f32.mrf.mxu0
        %v1906 = vadd.f32 %v1737, %v1905
        %v1907 = vpop.f32.mrf.mxu0
        %v1908 = vadd.f32 %v1739, %v1907
        %1909 = vmatmul.bf16.gmra.mxu0 %v1043
        %v1910 = vpop.f32.mrf.mxu0
        %v1911 = vadd.f32 %v1742, %v1910
        %v1912 = vpop.f32.mrf.mxu0
        %v1913 = vadd.f32 %v1744, %v1912
        %1914 = vmatmul.bf16.gmra.mxu0 %v1045
        %v1915 = vpop.f32.mrf.mxu0
        %v1916 = vadd.f32 %v1747, %v1915
        %v1917 = vpop.f32.mrf.mxu0
        %v1918 = vadd.f32 %v1749, %v1917
        %1919 = vdwg.mxu0
        %v1920 = vmax.f32 %v1423, 0.0
        %v1921 = vmax.f32 %v1761, 0.0
        %v1922 = vmax.f32 %v1425, 0.0
        %v1923 = vmax.f32 %v1763, 0.0
        %v1924 = vmax.f32 %v1428, 0.0
        %v1925 = vmax.f32 %v1766, 0.0
        %v1926 = vmax.f32 %v1430, 0.0
        %v1927 = vmax.f32 %v1768, 0.0
        %v1928 = vmax.f32 %v1433, 0.0
        %v1929 = vmax.f32 %v1771, 0.0
        %v1930 = vmax.f32 %v1435, 0.0
        %v1931 = vmax.f32 %v1773, 0.0
        %v1932 = vmax.f32 %v1438, 0.0
        %v1933 = vmax.f32 %v1776, 0.0
        %v1934 = vmax.f32 %v1440, 0.0
        %v1935 = vmax.f32 %v1778, 0.0
        %v1936 = vmax.f32 %v1443, 0.0
        %v1937 = vmax.f32 %v1781, 0.0
        %v1938 = vmax.f32 %v1445, 0.0
        %v1939 = vmax.f32 %v1783, 0.0
        %v1940 = vmax.f32 %v1448, 0.0
        %v1941 = vmax.f32 %v1786, 0.0
        %v1942 = vmax.f32 %v1450, 0.0
        %v1943 = vmax.f32 %v1788, 0.0
        %v1944 = vmax.f32 %v1453, 0.0
        %v1945 = vmax.f32 %v1791, 0.0
        %v1946 = vmax.f32 %v1455, 0.0
        %v1947 = vmax.f32 %v1793, 0.0
        %v1948 = vmax.f32 %v1458, 0.0
        %v1949 = vmax.f32 %v1796, 0.0
        %v1950 = vmax.f32 %v1460, 0.0
        %v1951 = vmax.f32 %v1798, 0.0
        %v1952 = vmax.f32 %v1463, 0.0
        %v1953 = vmax.f32 %v1801, 0.0
        %v1954 = vmax.f32 %v1465, 0.0
        %v1955 = vmax.f32 %v1803, 0.0
        %v1956 = vmax.f32 %v1468, 0.0
        %v1957 = vmax.f32 %v1806, 0.0
        %v1958 = vmax.f32 %v1470, 0.0
        %v1959 = vmax.f32 %v1808, 0.0
        %v1960 = vmax.f32 %v1473, 0.0
        %v1961 = vmax.f32 %v1811, 0.0
        %v1962 = vmax.f32 %v1475, 0.0
        %v1963 = vmax.f32 %v1813, 0.0
        %v1964 = vmax.f32 %v1478, 0.0
        %v1965 = vmax.f32 %v1816, 0.0
        %v1966 = vmax.f32 %v1480, 0.0
        %v1967 = vmax.f32 %v1818, 0.0
        %v1968 = vmax.f32 %v1483, 0.0
        %v1969 = vmax.f32 %v1821, 0.0
        %v1970 = vmax.f32 %v1485, 0.0
        %v1971 = vmax.f32 %v1823, 0.0
        %v1972 = vmax.f32 %v1488, 0.0
        %v1973 = vmax.f32 %v1826, 0.0
        %v1974 = vmax.f32 %v1490, 0.0
        %v1975 = vmax.f32 %v1828, 0.0
        %v1976 = vmax.f32 %v1493, 0.0
        %v1977 = vmax.f32 %v1831, 0.0
        %v1978 = vmax.f32 %v1495, 0.0
        %v1979 = vmax.f32 %v1833, 0.0
        %v1980 = vmax.f32 %v1498, 0.0
        %v1981 = vmax.f32 %v1836, 0.0
        %v1982 = vmax.f32 %v1500, 0.0
        %v1983 = vmax.f32 %v1838, 0.0
        %v1984 = vmax.f32 %v1503, 0.0
        %v1985 = vmax.f32 %v1841, 0.0
        %v1986 = vmax.f32 %v1505, 0.0
        %v1987 = vmax.f32 %v1843, 0.0
        %v1988 = vmax.f32 %v1508, 0.0
        %v1989 = vmax.f32 %v1846, 0.0
        %v1990 = vmax.f32 %v1510, 0.0
        %v1991 = vmax.f32 %v1848, 0.0
        %v1992 = vmax.f32 %v1513, 0.0
        %v1993 = vmax.f32 %v1851, 0.0
        %v1994 = vmax.f32 %v1515, 0.0
        %v1995 = vmax.f32 %v1853, 0.0
        %v1996 = vmax.f32 %v1518, 0.0
        %v1997 = vmax.f32 %v1856, 0.0
        %v1998 = vmax.f32 %v1520, 0.0
        %v1999 = vmax.f32 %v1858, 0.0
        %v2000 = vmax.f32 %v1523, 0.0
        %v2001 = vmax.f32 %v1861, 0.0
        %v2002 = vmax.f32 %v1525, 0.0
        %v2003 = vmax.f32 %v1863, 0.0
        %v2004 = vmax.f32 %v1528, 0.0
        %v2005 = vmax.f32 %v1866, 0.0
        %v2006 = vmax.f32 %v1530, 0.0
        %v2007 = vmax.f32 %v1868, 0.0
        %v2008 = vmax.f32 %v1533, 0.0
        %v2009 = vmax.f32 %v1871, 0.0
        %v2010 = vmax.f32 %v1535, 0.0
        %v2011 = vmax.f32 %v1873, 0.0
        %v2012 = vmax.f32 %v1538, 0.0
        %v2013 = vmax.f32 %v1876, 0.0
        %v2014 = vmax.f32 %v1540, 0.0
        %v2015 = vmax.f32 %v1878, 0.0
        %v2016 = vmax.f32 %v1543, 0.0
        %v2017 = vmax.f32 %v1881, 0.0
        %v2018 = vmax.f32 %v1545, 0.0
        %v2019 = vmax.f32 %v1883, 0.0
        %v2020 = vmax.f32 %v1548, 0.0
        %v2021 = vmax.f32 %v1886, 0.0
        %v2022 = vmax.f32 %v1550, 0.0
        %v2023 = vmax.f32 %v1888, 0.0
        %v2024 = vmax.f32 %v1553, 0.0
        %v2025 = vmax.f32 %v1891, 0.0
        %v2026 = vmax.f32 %v1555, 0.0
        %v2027 = vmax.f32 %v1893, 0.0
        %v2028 = vmax.f32 %v1558, 0.0
        %v2029 = vmax.f32 %v1896, 0.0
        %v2030 = vmax.f32 %v1560, 0.0
        %v2031 = vmax.f32 %v1898, 0.0
        %v2032 = vmax.f32 %v1563, 0.0
        %v2033 = vmax.f32 %v1901, 0.0
        %v2034 = vmax.f32 %v1565, 0.0
        %v2035 = vmax.f32 %v1903, 0.0
        %v2036 = vmax.f32 %v1568, 0.0
        %v2037 = vmax.f32 %v1906, 0.0
        %v2038 = vmax.f32 %v1570, 0.0
        %v2039 = vmax.f32 %v1908, 0.0
        %v2040 = vmax.f32 %v1573, 0.0
        %v2041 = vmax.f32 %v1911, 0.0
        %v2042 = vmax.f32 %v1575, 0.0
        %v2043 = vmax.f32 %v1913, 0.0
        %v2044 = vmax.f32 %v1578, 0.0
        %v2045 = vmax.f32 %v1916, 0.0
        %v2046 = vmax.f32 %v1580, 0.0
        %v2047 = vmax.f32 %v1918, 0.0
        %v2048 = vpack.c.bf16 %v1922, %v1920
        %v2049 = vpack.c.bf16 %v1923, %v1921
        %v2050 = vpack.c.bf16 %v1926, %v1924
        %v2051 = vpack.c.bf16 %v1927, %v1925
        %v2052 = vpack.c.bf16 %v1930, %v1928
        %v2053 = vpack.c.bf16 %v1931, %v1929
        %v2054 = vpack.c.bf16 %v1934, %v1932
        %v2055 = vpack.c.bf16 %v1935, %v1933
        %v2056 = vpack.c.bf16 %v1938, %v1936
        %v2057 = vpack.c.bf16 %v1939, %v1937
        %v2058 = vpack.c.bf16 %v1942, %v1940
        %v2059 = vpack.c.bf16 %v1943, %v1941
        %v2060 = vpack.c.bf16 %v1946, %v1944
        %v2061 = vpack.c.bf16 %v1947, %v1945
        %v2062 = vpack.c.bf16 %v1950, %v1948
        %v2063 = vpack.c.bf16 %v1951, %v1949
        %v2064 = vpack.c.bf16 %v1954, %v1952
        %v2065 = vpack.c.bf16 %v1955, %v1953
        %v2066 = vpack.c.bf16 %v1958, %v1956
        %v2067 = vpack.c.bf16 %v1959, %v1957
        %v2068 = vpack.c.bf16 %v1962, %v1960
        %v2069 = vpack.c.bf16 %v1963, %v1961
        %v2070 = vpack.c.bf16 %v1966, %v1964
        %v2071 = vpack.c.bf16 %v1967, %v1965
        %v2072 = vpack.c.bf16 %v1970, %v1968
        %v2073 = vpack.c.bf16 %v1971, %v1969
        %v2074 = vpack.c.bf16 %v1974, %v1972
        %v2075 = vpack.c.bf16 %v1975, %v1973
        %v2076 = vpack.c.bf16 %v1978, %v1976
        %v2077 = vpack.c.bf16 %v1979, %v1977
        %v2078 = vpack.c.bf16 %v1982, %v1980
        %v2079 = vpack.c.bf16 %v1983, %v1981
        %v2080 = vpack.c.bf16 %v1986, %v1984
        %v2081 = vpack.c.bf16 %v1987, %v1985
        %v2082 = vpack.c.bf16 %v1990, %v1988
        %v2083 = vpack.c.bf16 %v1991, %v1989
        %v2084 = vpack.c.bf16 %v1994, %v1992
        %v2085 = vpack.c.bf16 %v1995, %v1993
        %v2086 = vpack.c.bf16 %v1998, %v1996
        %v2087 = vpack.c.bf16 %v1999, %v1997
        %v2088 = vpack.c.bf16 %v2002, %v2000
        %v2089 = vpack.c.bf16 %v2003, %v2001
        %v2090 = vpack.c.bf16 %v2006, %v2004
        %v2091 = vpack.c.bf16 %v2007, %v2005
        %v2092 = vpack.c.bf16 %v2010, %v2008
        %v2093 = vpack.c.bf16 %v2011, %v2009
        %v2094 = vpack.c.bf16 %v2014, %v2012
        %v2095 = vpack.c.bf16 %v2015, %v2013
        %v2096 = vpack.c.bf16 %v2018, %v2016
        %v2097 = vpack.c.bf16 %v2019, %v2017
        %v2098 = vpack.c.bf16 %v2022, %v2020
        %v2099 = vpack.c.bf16 %v2023, %v2021
        %v2100 = vpack.c.bf16 %v2026, %v2024
        %v2101 = vpack.c.bf16 %v2027, %v2025
        %v2102 = vpack.c.bf16 %v2030, %v2028
        %v2103 = vpack.c.bf16 %v2031, %v2029
        %v2104 = vpack.c.bf16 %v2034, %v2032
        %v2105 = vpack.c.bf16 %v2035, %v2033
        %v2106 = vpack.c.bf16 %v2038, %v2036
        %v2107 = vpack.c.bf16 %v2039, %v2037
        %v2108 = vpack.c.bf16 %v2042, %v2040
        %v2109 = vpack.c.bf16 %v2043, %v2041
        %v2110 = vpack.c.bf16 %v2046, %v2044
        %v2111 = vpack.c.bf16 %v2047, %v2045
        %v2112 = vld [vmem:[%s5] sm:$0xf]
        %v2113 = vld [vmem:[%s5 + $0x4] sm:$0xf]
        %v2114 = vld [vmem:[%s5 + $0x8] sm:$0xf]
        %v2115 = vld [vmem:[%s5 + $0xc] sm:$0xf]
        %v2116 = vld [vmem:[%s5 + $0x10] sm:$0xf]
        %v2117 = vld [vmem:[%s5 + $0x14] sm:$0xf]
        %v2118 = vld [vmem:[%s5 + $0x18] sm:$0xf]
        %v2119 = vld [vmem:[%s5 + $0x1c] sm:$0xf]
        %v2120 = vld [vmem:[%s5 + $0x20] sm:$0xf]
        %v2121 = vld [vmem:[%s5 + $0x24] sm:$0xf]
        %v2122 = vld [vmem:[%s5 + $0x28] sm:$0xf]
        %v2123 = vld [vmem:[%s5 + $0x2c] sm:$0xf]
        %v2124 = vld [vmem:[%s5 + $0x30] sm:$0xf]
        %v2125 = vld [vmem:[%s5 + $0x34] sm:$0xf]
        %v2126 = vld [vmem:[%s5 + $0x38] sm:$0xf]
        %v2127 = vld [vmem:[%s5 + $0x3c] sm:$0xf]
        %v2128 = vld [vmem:[%s5 + $0x40] sm:$0xf]
        %v2129 = vld [vmem:[%s5 + $0x44] sm:$0xf]
        %v2130 = vld [vmem:[%s5 + $0x48] sm:$0xf]
        %v2131 = vld [vmem:[%s5 + $0x4c] sm:$0xf]
        %v2132 = vld [vmem:[%s5 + $0x50] sm:$0xf]
        %v2133 = vld [vmem:[%s5 + $0x54] sm:$0xf]
        %v2134 = vld [vmem:[%s5 + $0x58] sm:$0xf]
        %v2135 = vld [vmem:[%s5 + $0x5c] sm:$0xf]
        %v2136 = vld [vmem:[%s5 + $0x60] sm:$0xf]
        %v2137 = vld [vmem:[%s5 + $0x64] sm:$0xf]
        %v2138 = vld [vmem:[%s5 + $0x68] sm:$0xf]
        %v2139 = vld [vmem:[%s5 + $0x6c] sm:$0xf]
        %v2140 = vld [vmem:[%s5 + $0x70] sm:$0xf]
        %v2141 = vld [vmem:[%s5 + $0x74] sm:$0xf]
        %v2142 = vld [vmem:[%s5 + $0x78] sm:$0xf]
        %v2143 = vld [vmem:[%s5 + $0x7c] sm:$0xf]
        %v2144 = vld [vmem:[%s6] sm:$0x1]
        %v2146 = vperm.slane %v2144, 0
        %v2180 = vunpack.c.l.b16 %v2112
        %v2181 = vunpack.c.l.b16 %v2113
        %v2182 = vunpack.c.l.b16 %v2114
        %v2183 = vunpack.c.l.b16 %v2115
        %v2184 = vunpack.c.l.b16 %v2116
        %v2185 = vunpack.c.l.b16 %v2117
        %v2186 = vunpack.c.l.b16 %v2118
        %v2187 = vunpack.c.l.b16 %v2119
        %v2188 = vunpack.c.l.b16 %v2120
        %v2189 = vunpack.c.l.b16 %v2121
        %v2190 = vunpack.c.l.b16 %v2122
        %v2191 = vunpack.c.l.b16 %v2123
        %v2192 = vunpack.c.l.b16 %v2124
        %v2193 = vunpack.c.l.b16 %v2125
        %v2194 = vunpack.c.l.b16 %v2126
        %v2195 = vunpack.c.l.b16 %v2127
        %v2196 = vunpack.c.l.b16 %v2128
        %v2197 = vunpack.c.l.b16 %v2129
        %v2198 = vunpack.c.l.b16 %v2130
        %v2199 = vunpack.c.l.b16 %v2131
        %v2200 = vunpack.c.l.b16 %v2132
        %v2201 = vunpack.c.l.b16 %v2133
        %v2202 = vunpack.c.l.b16 %v2134
        %v2203 = vunpack.c.l.b16 %v2135
        %v2204 = vunpack.c.l.b16 %v2136
        %v2205 = vunpack.c.l.b16 %v2137
        %v2206 = vunpack.c.l.b16 %v2138
        %v2207 = vunpack.c.l.b16 %v2139
        %v2208 = vunpack.c.l.b16 %v2140
        %v2209 = vunpack.c.l.b16 %v2141
        %v2210 = vunpack.c.l.b16 %v2142
        %v2211 = vunpack.c.l.b16 %v2143
        %v2212 = vpack.c.b16 %v2181, %v2180
        %v2213 = vpack.c.b16 %v2183, %v2182
        %v2214 = vpack.c.b16 %v2185, %v2184
        %v2215 = vpack.c.b16 %v2187, %v2186
        %v2216 = vpack.c.b16 %v2189, %v2188
        %v2217 = vpack.c.b16 %v2191, %v2190
        %v2218 = vpack.c.b16 %v2193, %v2192
        %v2219 = vpack.c.b16 %v2195, %v2194
        %v2220 = vpack.c.b16 %v2197, %v2196
        %v2221 = vpack.c.b16 %v2199, %v2198
        %v2222 = vpack.c.b16 %v2201, %v2200
        %v2223 = vpack.c.b16 %v2203, %v2202
        %v2224 = vpack.c.b16 %v2205, %v2204
        %v2225 = vpack.c.b16 %v2207, %v2206
        %v2226 = vpack.c.b16 %v2209, %v2208
        %v2227 = vpack.c.b16 %v2211, %v2210
        %2244 = vmatpush.bf16.msra.mxu0 %v2219
        %2245 = vmatpush.bf16.msra.mxu0 %v2218
        %2246 = vmatpush.bf16.msra.mxu0 %v2217
        %2247 = vmatpush.bf16.msra.mxu0 %v2216
        %2248 = vmatpush.bf16.msra.mxu0 %v2215
        %2249 = vmatpush.bf16.msra.mxu0 %v2214
        %2250 = vmatpush.bf16.msra.mxu0 %v2213
        %2251 = vmatpush.bf16.msra.mxu0 %v2212
        %2252 = vmatmul.bf16.gmra.mxu0 %v2048
        %v2253 = vpop.f32.mrf.mxu0
        %v2254 = vadd.f32 %v2146, %v2253
        %v2255 = vpop.f32.mrf.mxu0
        %v2256 = vadd.f32 %v2146, %v2255
        %2257 = vmatmul.bf16.gmra.mxu0 %v2050
        %v2258 = vpop.f32.mrf.mxu0
        %v2259 = vadd.f32 %v2146, %v2258
        %v2260 = vpop.f32.mrf.mxu0
        %v2261 = vadd.f32 %v2146, %v2260
        %2262 = vmatmul.bf16.gmra.mxu0 %v2052
        %v2263 = vpop.f32.mrf.mxu0
        %v2264 = vadd.f32 %v2146, %v2263
        %v2265 = vpop.f32.mrf.mxu0
        %v2266 = vadd.f32 %v2146, %v2265
        %2267 = vmatmul.bf16.gmra.mxu0 %v2054
        %v2268 = vpop.f32.mrf.mxu0
        %v2269 = vadd.f32 %v2146, %v2268
        %v2270 = vpop.f32.mrf.mxu0
        %v2271 = vadd.f32 %v2146, %v2270
        %2272 = vmatmul.bf16.gmra.mxu0 %v2056
        %v2273 = vpop.f32.mrf.mxu0
        %v2274 = vadd.f32 %v2146, %v2273
        %v2275 = vpop.f32.mrf.mxu0
        %v2276 = vadd.f32 %v2146, %v2275
        %2277 = vmatmul.bf16.gmra.mxu0 %v2058
        %v2278 = vpop.f32.mrf.mxu0
        %v2279 = vadd.f32 %v2146, %v2278
        %v2280 = vpop.f32.mrf.mxu0
        %v2281 = vadd.f32 %v2146, %v2280
        %2282 = vmatmul.bf16.gmra.mxu0 %v2060
        %v2283 = vpop.f32.mrf.mxu0
        %v2284 = vadd.f32 %v2146, %v2283
        %v2285 = vpop.f32.mrf.mxu0
        %v2286 = vadd.f32 %v2146, %v2285
        %2287 = vmatmul.bf16.gmra.mxu0 %v2062
        %v2288 = vpop.f32.mrf.mxu0
        %v2289 = vadd.f32 %v2146, %v2288
        %v2290 = vpop.f32.mrf.mxu0
        %v2291 = vadd.f32 %v2146, %v2290
        %2292 = vmatmul.bf16.gmra.mxu0 %v2064
        %v2293 = vpop.f32.mrf.mxu0
        %v2294 = vadd.f32 %v2146, %v2293
        %v2295 = vpop.f32.mrf.mxu0
        %v2296 = vadd.f32 %v2146, %v2295
        %2297 = vmatmul.bf16.gmra.mxu0 %v2066
        %v2298 = vpop.f32.mrf.mxu0
        %v2299 = vadd.f32 %v2146, %v2298
        %v2300 = vpop.f32.mrf.mxu0
        %v2301 = vadd.f32 %v2146, %v2300
        %2302 = vmatmul.bf16.gmra.mxu0 %v2068
        %v2303 = vpop.f32.mrf.mxu0
        %v2304 = vadd.f32 %v2146, %v2303
        %v2305 = vpop.f32.mrf.mxu0
        %v2306 = vadd.f32 %v2146, %v2305
        %2307 = vmatmul.bf16.gmra.mxu0 %v2070
        %v2308 = vpop.f32.mrf.mxu0
        %v2309 = vadd.f32 %v2146, %v2308
        %v2310 = vpop.f32.mrf.mxu0
        %v2311 = vadd.f32 %v2146, %v2310
        %2312 = vmatmul.bf16.gmra.mxu0 %v2072
        %v2313 = vpop.f32.mrf.mxu0
        %v2314 = vadd.f32 %v2146, %v2313
        %v2315 = vpop.f32.mrf.mxu0
        %v2316 = vadd.f32 %v2146, %v2315
        %2317 = vmatmul.bf16.gmra.mxu0 %v2074
        %v2318 = vpop.f32.mrf.mxu0
        %v2319 = vadd.f32 %v2146, %v2318
        %v2320 = vpop.f32.mrf.mxu0
        %v2321 = vadd.f32 %v2146, %v2320
        %2322 = vmatmul.bf16.gmra.mxu0 %v2076
        %v2323 = vpop.f32.mrf.mxu0
        %v2324 = vadd.f32 %v2146, %v2323
        %v2325 = vpop.f32.mrf.mxu0
        %v2326 = vadd.f32 %v2146, %v2325
        %2327 = vmatmul.bf16.gmra.mxu0 %v2078
        %v2328 = vpop.f32.mrf.mxu0
        %v2329 = vadd.f32 %v2146, %v2328
        %v2330 = vpop.f32.mrf.mxu0
        %v2331 = vadd.f32 %v2146, %v2330
        %2332 = vmatmul.bf16.gmra.mxu0 %v2080
        %v2333 = vpop.f32.mrf.mxu0
        %v2334 = vadd.f32 %v2146, %v2333
        %v2335 = vpop.f32.mrf.mxu0
        %v2336 = vadd.f32 %v2146, %v2335
        %2337 = vmatmul.bf16.gmra.mxu0 %v2082
        %v2338 = vpop.f32.mrf.mxu0
        %v2339 = vadd.f32 %v2146, %v2338
        %v2340 = vpop.f32.mrf.mxu0
        %v2341 = vadd.f32 %v2146, %v2340
        %2342 = vmatmul.bf16.gmra.mxu0 %v2084
        %v2343 = vpop.f32.mrf.mxu0
        %v2344 = vadd.f32 %v2146, %v2343
        %v2345 = vpop.f32.mrf.mxu0
        %v2346 = vadd.f32 %v2146, %v2345
        %2347 = vmatmul.bf16.gmra.mxu0 %v2086
        %v2348 = vpop.f32.mrf.mxu0
        %v2349 = vadd.f32 %v2146, %v2348
        %v2350 = vpop.f32.mrf.mxu0
        %v2351 = vadd.f32 %v2146, %v2350
        %2352 = vmatmul.bf16.gmra.mxu0 %v2088
        %v2353 = vpop.f32.mrf.mxu0
        %v2354 = vadd.f32 %v2146, %v2353
        %v2355 = vpop.f32.mrf.mxu0
        %v2356 = vadd.f32 %v2146, %v2355
        %2357 = vmatmul.bf16.gmra.mxu0 %v2090
        %v2358 = vpop.f32.mrf.mxu0
        %v2359 = vadd.f32 %v2146, %v2358
        %v2360 = vpop.f32.mrf.mxu0
        %v2361 = vadd.f32 %v2146, %v2360
        %2362 = vmatmul.bf16.gmra.mxu0 %v2092
        %v2363 = vpop.f32.mrf.mxu0
        %v2364 = vadd.f32 %v2146, %v2363
        %v2365 = vpop.f32.mrf.mxu0
        %v2366 = vadd.f32 %v2146, %v2365
        %2367 = vmatmul.bf16.gmra.mxu0 %v2094
        %v2368 = vpop.f32.mrf.mxu0
        %v2369 = vadd.f32 %v2146, %v2368
        %v2370 = vpop.f32.mrf.mxu0
        %v2371 = vadd.f32 %v2146, %v2370
        %2372 = vmatmul.bf16.gmra.mxu0 %v2096
        %v2373 = vpop.f32.mrf.mxu0
        %v2374 = vadd.f32 %v2146, %v2373
        %v2375 = vpop.f32.mrf.mxu0
        %v2376 = vadd.f32 %v2146, %v2375
        %2377 = vmatmul.bf16.gmra.mxu0 %v2098
        %v2378 = vpop.f32.mrf.mxu0
        %v2379 = vadd.f32 %v2146, %v2378
        %v2380 = vpop.f32.mrf.mxu0
        %v2381 = vadd.f32 %v2146, %v2380
        %2382 = vmatmul.bf16.gmra.mxu0 %v2100
        %v2383 = vpop.f32.mrf.mxu0
        %v2384 = vadd.f32 %v2146, %v2383
        %v2385 = vpop.f32.mrf.mxu0
        %v2386 = vadd.f32 %v2146, %v2385
        %2387 = vmatmul.bf16.gmra.mxu0 %v2102
        %v2388 = vpop.f32.mrf.mxu0
        %v2389 = vadd.f32 %v2146, %v2388
        %v2390 = vpop.f32.mrf.mxu0
        %v2391 = vadd.f32 %v2146, %v2390
        %2392 = vmatmul.bf16.gmra.mxu0 %v2104
        %v2393 = vpop.f32.mrf.mxu0
        %v2394 = vadd.f32 %v2146, %v2393
        %v2395 = vpop.f32.mrf.mxu0
        %v2396 = vadd.f32 %v2146, %v2395
        %2397 = vmatmul.bf16.gmra.mxu0 %v2106
        %v2398 = vpop.f32.mrf.mxu0
        %v2399 = vadd.f32 %v2146, %v2398
        %v2400 = vpop.f32.mrf.mxu0
        %v2401 = vadd.f32 %v2146, %v2400
        %2402 = vmatmul.bf16.gmra.mxu0 %v2108
        %v2403 = vpop.f32.mrf.mxu0
        %v2404 = vadd.f32 %v2146, %v2403
        %v2405 = vpop.f32.mrf.mxu0
        %v2406 = vadd.f32 %v2146, %v2405
        %2407 = vmatmul.bf16.gmra.mxu0 %v2110
        %v2408 = vpop.f32.mrf.mxu0
        %v2409 = vadd.f32 %v2146, %v2408
        %v2410 = vpop.f32.mrf.mxu0
        %v2411 = vadd.f32 %v2146, %v2410
        %2412 = vdwg.mxu0
        %2413 = vmatpush.bf16.msra.mxu0 %v2227
        %2414 = vmatpush.bf16.msra.mxu0 %v2226
        %2415 = vmatpush.bf16.msra.mxu0 %v2225
        %2416 = vmatpush.bf16.msra.mxu0 %v2224
        %2417 = vmatpush.bf16.msra.mxu0 %v2223
        %2418 = vmatpush.bf16.msra.mxu0 %v2222
        %2419 = vmatpush.bf16.msra.mxu0 %v2221
        %2420 = vmatpush.bf16.msra.mxu0 %v2220
        %2421 = vmatmul.bf16.gmra.mxu0 %v2049
        %v2422 = vpop.f32.mrf.mxu0
        %v2423 = vadd.f32 %v2254, %v2422
        %v2424 = vpop.f32.mrf.mxu0
        %v2425 = vadd.f32 %v2256, %v2424
        %2426 = vmatmul.bf16.gmra.mxu0 %v2051
        %v2427 = vpop.f32.mrf.mxu0
        %v2428 = vadd.f32 %v2259, %v2427
        %v2429 = vpop.f32.mrf.mxu0
        %v2430 = vadd.f32 %v2261, %v2429
        %2431 = vmatmul.bf16.gmra.mxu0 %v2053
        %v2432 = vpop.f32.mrf.mxu0
        %v2433 = vadd.f32 %v2264, %v2432
        %v2434 = vpop.f32.mrf.mxu0
        %v2435 = vadd.f32 %v2266, %v2434
        %2436 = vmatmul.bf16.gmra.mxu0 %v2055
        %v2437 = vpop.f32.mrf.mxu0
        %v2438 = vadd.f32 %v2269, %v2437
        %v2439 = vpop.f32.mrf.mxu0
        %v2440 = vadd.f32 %v2271, %v2439
        %2441 = vmatmul.bf16.gmra.mxu0 %v2057
        %v2442 = vpop.f32.mrf.mxu0
        %v2443 = vadd.f32 %v2274, %v2442
        %v2444 = vpop.f32.mrf.mxu0
        %v2445 = vadd.f32 %v2276, %v2444
        %2446 = vmatmul.bf16.gmra.mxu0 %v2059
        %v2447 = vpop.f32.mrf.mxu0
        %v2448 = vadd.f32 %v2279, %v2447
        %v2449 = vpop.f32.mrf.mxu0
        %v2450 = vadd.f32 %v2281, %v2449
        %2451 = vmatmul.bf16.gmra.mxu0 %v2061
        %v2452 = vpop.f32.mrf.mxu0
        %v2453 = vadd.f32 %v2284, %v2452
        %v2454 = vpop.f32.mrf.mxu0
        %v2455 = vadd.f32 %v2286, %v2454
        %2456 = vmatmul.bf16.gmra.mxu0 %v2063
        %v2457 = vpop.f32.mrf.mxu0
        %v2458 = vadd.f32 %v2289, %v2457
        %v2459 = vpop.f32.mrf.mxu0
        %v2460 = vadd.f32 %v2291, %v2459
        %2461 = vmatmul.bf16.gmra.mxu0 %v2065
        %v2462 = vpop.f32.mrf.mxu0
        %v2463 = vadd.f32 %v2294, %v2462
        %v2464 = vpop.f32.mrf.mxu0
        %v2465 = vadd.f32 %v2296, %v2464
        %2466 = vmatmul.bf16.gmra.mxu0 %v2067
        %v2467 = vpop.f32.mrf.mxu0
        %v2468 = vadd.f32 %v2299, %v2467
        %v2469 = vpop.f32.mrf.mxu0
        %v2470 = vadd.f32 %v2301, %v2469
        %2471 = vmatmul.bf16.gmra.mxu0 %v2069
        %v2472 = vpop.f32.mrf.mxu0
        %v2473 = vadd.f32 %v2304, %v2472
        %v2474 = vpop.f32.mrf.mxu0
        %v2475 = vadd.f32 %v2306, %v2474
        %2476 = vmatmul.bf16.gmra.mxu0 %v2071
        %v2477 = vpop.f32.mrf.mxu0
        %v2478 = vadd.f32 %v2309, %v2477
        %v2479 = vpop.f32.mrf.mxu0
        %v2480 = vadd.f32 %v2311, %v2479
        %2481 = vmatmul.bf16.gmra.mxu0 %v2073
        %v2482 = vpop.f32.mrf.mxu0
        %v2483 = vadd.f32 %v2314, %v2482
        %v2484 = vpop.f32.mrf.mxu0
        %v2485 = vadd.f32 %v2316, %v2484
        %2486 = vmatmul.bf16.gmra.mxu0 %v2075
        %v2487 = vpop.f32.mrf.mxu0
        %v2488 = vadd.f32 %v2319, %v2487
        %v2489 = vpop.f32.mrf.mxu0
        %v2490 = vadd.f32 %v2321, %v2489
        %2491 = vmatmul.bf16.gmra.mxu0 %v2077
        %v2492 = vpop.f32.mrf.mxu0
        %v2493 = vadd.f32 %v2324, %v2492
        %v2494 = vpop.f32.mrf.mxu0
        %v2495 = vadd.f32 %v2326, %v2494
        %2496 = vmatmul.bf16.gmra.mxu0 %v2079
        %v2497 = vpop.f32.mrf.mxu0
        %v2498 = vadd.f32 %v2329, %v2497
        %v2499 = vpop.f32.mrf.mxu0
        %v2500 = vadd.f32 %v2331, %v2499
        %2501 = vmatmul.bf16.gmra.mxu0 %v2081
        %v2502 = vpop.f32.mrf.mxu0
        %v2503 = vadd.f32 %v2334, %v2502
        %v2504 = vpop.f32.mrf.mxu0
        %v2505 = vadd.f32 %v2336, %v2504
        %2506 = vmatmul.bf16.gmra.mxu0 %v2083
        %v2507 = vpop.f32.mrf.mxu0
        %v2508 = vadd.f32 %v2339, %v2507
        %v2509 = vpop.f32.mrf.mxu0
        %v2510 = vadd.f32 %v2341, %v2509
        %2511 = vmatmul.bf16.gmra.mxu0 %v2085
        %v2512 = vpop.f32.mrf.mxu0
        %v2513 = vadd.f32 %v2344, %v2512
        %v2514 = vpop.f32.mrf.mxu0
        %v2515 = vadd.f32 %v2346, %v2514
        %2516 = vmatmul.bf16.gmra.mxu0 %v2087
        %v2517 = vpop.f32.mrf.mxu0
        %v2518 = vadd.f32 %v2349, %v2517
        %v2519 = vpop.f32.mrf.mxu0
        %v2520 = vadd.f32 %v2351, %v2519
        %2521 = vmatmul.bf16.gmra.mxu0 %v2089
        %v2522 = vpop.f32.mrf.mxu0
        %v2523 = vadd.f32 %v2354, %v2522
        %v2524 = vpop.f32.mrf.mxu0
        %v2525 = vadd.f32 %v2356, %v2524
        %2526 = vmatmul.bf16.gmra.mxu0 %v2091
        %v2527 = vpop.f32.mrf.mxu0
        %v2528 = vadd.f32 %v2359, %v2527
        %v2529 = vpop.f32.mrf.mxu0
        %v2530 = vadd.f32 %v2361, %v2529
        %2531 = vmatmul.bf16.gmra.mxu0 %v2093
        %v2532 = vpop.f32.mrf.mxu0
        %v2533 = vadd.f32 %v2364, %v2532
        %v2534 = vpop.f32.mrf.mxu0
        %v2535 = vadd.f32 %v2366, %v2534
        %2536 = vmatmul.bf16.gmra.mxu0 %v2095
        %v2537 = vpop.f32.mrf.mxu0
        %v2538 = vadd.f32 %v2369, %v2537
        %v2539 = vpop.f32.mrf.mxu0
        %v2540 = vadd.f32 %v2371, %v2539
        %2541 = vmatmul.bf16.gmra.mxu0 %v2097
        %v2542 = vpop.f32.mrf.mxu0
        %v2543 = vadd.f32 %v2374, %v2542
        %v2544 = vpop.f32.mrf.mxu0
        %v2545 = vadd.f32 %v2376, %v2544
        %2546 = vmatmul.bf16.gmra.mxu0 %v2099
        %v2547 = vpop.f32.mrf.mxu0
        %v2548 = vadd.f32 %v2379, %v2547
        %v2549 = vpop.f32.mrf.mxu0
        %v2550 = vadd.f32 %v2381, %v2549
        %2551 = vmatmul.bf16.gmra.mxu0 %v2101
        %v2552 = vpop.f32.mrf.mxu0
        %v2553 = vadd.f32 %v2384, %v2552
        %v2554 = vpop.f32.mrf.mxu0
        %v2555 = vadd.f32 %v2386, %v2554
        %2556 = vmatmul.bf16.gmra.mxu0 %v2103
        %v2557 = vpop.f32.mrf.mxu0
        %v2558 = vadd.f32 %v2389, %v2557
        %v2559 = vpop.f32.mrf.mxu0
        %v2560 = vadd.f32 %v2391, %v2559
        %2561 = vmatmul.bf16.gmra.mxu0 %v2105
        %v2562 = vpop.f32.mrf.mxu0
        %v2563 = vadd.f32 %v2394, %v2562
        %v2564 = vpop.f32.mrf.mxu0
        %v2565 = vadd.f32 %v2396, %v2564
        %2566 = vmatmul.bf16.gmra.mxu0 %v2107
        %v2567 = vpop.f32.mrf.mxu0
        %v2568 = vadd.f32 %v2399, %v2567
        %v2569 = vpop.f32.mrf.mxu0
        %v2570 = vadd.f32 %v2401, %v2569
        %2571 = vmatmul.bf16.gmra.mxu0 %v2109
        %v2572 = vpop.f32.mrf.mxu0
        %v2573 = vadd.f32 %v2404, %v2572
        %v2574 = vpop.f32.mrf.mxu0
        %v2575 = vadd.f32 %v2406, %v2574
        %2576 = vmatmul.bf16.gmra.mxu0 %v2111
        %v2577 = vpop.f32.mrf.mxu0
        %v2578 = vadd.f32 %v2409, %v2577
        %v2579 = vpop.f32.mrf.mxu0
        %v2580 = vadd.f32 %v2411, %v2579
        %2581 = vdwg.mxu0
        %v2582 = vlaneseq
        %v2583 = vand.u32 %v2582, 127
        %vm2584 = vcmp.lt.s32.totalorder %v2583, 8
        %v2585 = vsel %vm2584, %v2423, -1e+30
        %v2586 = vsel %vm2584, %v2425, -1e+30
        %v2587 = vsel %vm2584, %v2428, -1e+30
        %v2588 = vsel %vm2584, %v2430, -1e+30
        %v2589 = vsel %vm2584, %v2433, -1e+30
        %v2590 = vsel %vm2584, %v2435, -1e+30
        %v2591 = vsel %vm2584, %v2438, -1e+30
        %v2592 = vsel %vm2584, %v2440, -1e+30
        %v2593 = vsel %vm2584, %v2443, -1e+30
        %v2594 = vsel %vm2584, %v2445, -1e+30
        %v2595 = vsel %vm2584, %v2448, -1e+30
        %v2596 = vsel %vm2584, %v2450, -1e+30
        %v2597 = vsel %vm2584, %v2453, -1e+30
        %v2598 = vsel %vm2584, %v2455, -1e+30
        %v2599 = vsel %vm2584, %v2458, -1e+30
        %v2600 = vsel %vm2584, %v2460, -1e+30
        %v2601 = vsel %vm2584, %v2463, -1e+30
        %v2602 = vsel %vm2584, %v2465, -1e+30
        %v2603 = vsel %vm2584, %v2468, -1e+30
        %v2604 = vsel %vm2584, %v2470, -1e+30
        %v2605 = vsel %vm2584, %v2473, -1e+30
        %v2606 = vsel %vm2584, %v2475, -1e+30
        %v2607 = vsel %vm2584, %v2478, -1e+30
        %v2608 = vsel %vm2584, %v2480, -1e+30
        %v2609 = vsel %vm2584, %v2483, -1e+30
        %v2610 = vsel %vm2584, %v2485, -1e+30
        %v2611 = vsel %vm2584, %v2488, -1e+30
        %v2612 = vsel %vm2584, %v2490, -1e+30
        %v2613 = vsel %vm2584, %v2493, -1e+30
        %v2614 = vsel %vm2584, %v2495, -1e+30
        %v2615 = vsel %vm2584, %v2498, -1e+30
        %v2616 = vsel %vm2584, %v2500, -1e+30
        %v2617 = vsel %vm2584, %v2503, -1e+30
        %v2618 = vsel %vm2584, %v2505, -1e+30
        %v2619 = vsel %vm2584, %v2508, -1e+30
        %v2620 = vsel %vm2584, %v2510, -1e+30
        %v2621 = vsel %vm2584, %v2513, -1e+30
        %v2622 = vsel %vm2584, %v2515, -1e+30
        %v2623 = vsel %vm2584, %v2518, -1e+30
        %v2624 = vsel %vm2584, %v2520, -1e+30
        %v2625 = vsel %vm2584, %v2523, -1e+30
        %v2626 = vsel %vm2584, %v2525, -1e+30
        %v2627 = vsel %vm2584, %v2528, -1e+30
        %v2628 = vsel %vm2584, %v2530, -1e+30
        %v2629 = vsel %vm2584, %v2533, -1e+30
        %v2630 = vsel %vm2584, %v2535, -1e+30
        %v2631 = vsel %vm2584, %v2538, -1e+30
        %v2632 = vsel %vm2584, %v2540, -1e+30
        %v2633 = vsel %vm2584, %v2543, -1e+30
        %v2634 = vsel %vm2584, %v2545, -1e+30
        %v2635 = vsel %vm2584, %v2548, -1e+30
        %v2636 = vsel %vm2584, %v2550, -1e+30
        %v2637 = vsel %vm2584, %v2553, -1e+30
        %v2638 = vsel %vm2584, %v2555, -1e+30
        %v2639 = vsel %vm2584, %v2558, -1e+30
        %v2640 = vsel %vm2584, %v2560, -1e+30
        %v2641 = vsel %vm2584, %v2563, -1e+30
        %v2642 = vsel %vm2584, %v2565, -1e+30
        %v2643 = vsel %vm2584, %v2568, -1e+30
        %v2644 = vsel %vm2584, %v2570, -1e+30
        %v2645 = vsel %vm2584, %v2573, -1e+30
        %v2646 = vsel %vm2584, %v2575, -1e+30
        %v2647 = vsel %vm2584, %v2578, -1e+30
        %v2648 = vsel %vm2584, %v2580, -1e+30
        %2649 = vmax.xlane.f32.xlu0 %v2585
        %v2650 = vpop.xlane.xlu0 %2649
        %2651 = vmax.xlane.f32.xlu0 %v2586
        %v2652 = vpop.xlane.xlu0 %2651
        %2653 = vmax.xlane.f32.xlu0 %v2587
        %v2654 = vpop.xlane.xlu0 %2653
        %2655 = vmax.xlane.f32.xlu0 %v2588
        %v2656 = vpop.xlane.xlu0 %2655
        %2657 = vmax.xlane.f32.xlu0 %v2589
        %v2658 = vpop.xlane.xlu0 %2657
        %2659 = vmax.xlane.f32.xlu0 %v2590
        %v2660 = vpop.xlane.xlu0 %2659
        %2661 = vmax.xlane.f32.xlu0 %v2591
        %v2662 = vpop.xlane.xlu0 %2661
        %2663 = vmax.xlane.f32.xlu0 %v2592
        %v2664 = vpop.xlane.xlu0 %2663
        %2665 = vmax.xlane.f32.xlu0 %v2593
        %v2666 = vpop.xlane.xlu0 %2665
        %2667 = vmax.xlane.f32.xlu0 %v2594
        %v2668 = vpop.xlane.xlu0 %2667
        %2669 = vmax.xlane.f32.xlu0 %v2595
        %v2670 = vpop.xlane.xlu0 %2669
        %2671 = vmax.xlane.f32.xlu0 %v2596
        %v2672 = vpop.xlane.xlu0 %2671
        %2673 = vmax.xlane.f32.xlu0 %v2597
        %v2674 = vpop.xlane.xlu0 %2673
        %2675 = vmax.xlane.f32.xlu0 %v2598
        %v2676 = vpop.xlane.xlu0 %2675
        %2677 = vmax.xlane.f32.xlu0 %v2599
        %v2678 = vpop.xlane.xlu0 %2677
        %2679 = vmax.xlane.f32.xlu0 %v2600
        %v2680 = vpop.xlane.xlu0 %2679
        %2681 = vmax.xlane.f32.xlu0 %v2601
        %v2682 = vpop.xlane.xlu0 %2681
        %2683 = vmax.xlane.f32.xlu0 %v2602
        %v2684 = vpop.xlane.xlu0 %2683
        %2685 = vmax.xlane.f32.xlu0 %v2603
        %v2686 = vpop.xlane.xlu0 %2685
        %2687 = vmax.xlane.f32.xlu0 %v2604
        %v2688 = vpop.xlane.xlu0 %2687
        %2689 = vmax.xlane.f32.xlu0 %v2605
        %v2690 = vpop.xlane.xlu0 %2689
        %2691 = vmax.xlane.f32.xlu0 %v2606
        %v2692 = vpop.xlane.xlu0 %2691
        %2693 = vmax.xlane.f32.xlu0 %v2607
        %v2694 = vpop.xlane.xlu0 %2693
        %2695 = vmax.xlane.f32.xlu0 %v2608
        %v2696 = vpop.xlane.xlu0 %2695
        %2697 = vmax.xlane.f32.xlu0 %v2609
        %v2698 = vpop.xlane.xlu0 %2697
        %2699 = vmax.xlane.f32.xlu0 %v2610
        %v2700 = vpop.xlane.xlu0 %2699
        %2701 = vmax.xlane.f32.xlu0 %v2611
        %v2702 = vpop.xlane.xlu0 %2701
        %2703 = vmax.xlane.f32.xlu0 %v2612
        %v2704 = vpop.xlane.xlu0 %2703
        %2705 = vmax.xlane.f32.xlu0 %v2613
        %v2706 = vpop.xlane.xlu0 %2705
        %2707 = vmax.xlane.f32.xlu0 %v2614
        %v2708 = vpop.xlane.xlu0 %2707
        %2709 = vmax.xlane.f32.xlu0 %v2615
        %v2710 = vpop.xlane.xlu0 %2709
        %2711 = vmax.xlane.f32.xlu0 %v2616
        %v2712 = vpop.xlane.xlu0 %2711
        %2713 = vmax.xlane.f32.xlu0 %v2617
        %v2714 = vpop.xlane.xlu0 %2713
        %2715 = vmax.xlane.f32.xlu0 %v2618
        %v2716 = vpop.xlane.xlu0 %2715
        %2717 = vmax.xlane.f32.xlu0 %v2619
        %v2718 = vpop.xlane.xlu0 %2717
        %2719 = vmax.xlane.f32.xlu0 %v2620
        %v2720 = vpop.xlane.xlu0 %2719
        %2721 = vmax.xlane.f32.xlu0 %v2621
        %v2722 = vpop.xlane.xlu0 %2721
        %2723 = vmax.xlane.f32.xlu0 %v2622
        %v2724 = vpop.xlane.xlu0 %2723
        %2725 = vmax.xlane.f32.xlu0 %v2623
        %v2726 = vpop.xlane.xlu0 %2725
        %2727 = vmax.xlane.f32.xlu0 %v2624
        %v2728 = vpop.xlane.xlu0 %2727
        %2729 = vmax.xlane.f32.xlu0 %v2625
        %v2730 = vpop.xlane.xlu0 %2729
        %2731 = vmax.xlane.f32.xlu0 %v2626
        %v2732 = vpop.xlane.xlu0 %2731
        %2733 = vmax.xlane.f32.xlu0 %v2627
        %v2734 = vpop.xlane.xlu0 %2733
        %2735 = vmax.xlane.f32.xlu0 %v2628
        %v2736 = vpop.xlane.xlu0 %2735
        %2737 = vmax.xlane.f32.xlu0 %v2629
        %v2738 = vpop.xlane.xlu0 %2737
        %2739 = vmax.xlane.f32.xlu0 %v2630
        %v2740 = vpop.xlane.xlu0 %2739
        %2741 = vmax.xlane.f32.xlu0 %v2631
        %v2742 = vpop.xlane.xlu0 %2741
        %2743 = vmax.xlane.f32.xlu0 %v2632
        %v2744 = vpop.xlane.xlu0 %2743
        %2745 = vmax.xlane.f32.xlu0 %v2633
        %v2746 = vpop.xlane.xlu0 %2745
        %2747 = vmax.xlane.f32.xlu0 %v2634
        %v2748 = vpop.xlane.xlu0 %2747
        %2749 = vmax.xlane.f32.xlu0 %v2635
        %v2750 = vpop.xlane.xlu0 %2749
        %2751 = vmax.xlane.f32.xlu0 %v2636
        %v2752 = vpop.xlane.xlu0 %2751
        %2753 = vmax.xlane.f32.xlu0 %v2637
        %v2754 = vpop.xlane.xlu0 %2753
        %2755 = vmax.xlane.f32.xlu0 %v2638
        %v2756 = vpop.xlane.xlu0 %2755
        %2757 = vmax.xlane.f32.xlu0 %v2639
        %v2758 = vpop.xlane.xlu0 %2757
        %2759 = vmax.xlane.f32.xlu0 %v2640
        %v2760 = vpop.xlane.xlu0 %2759
        %2761 = vmax.xlane.f32.xlu0 %v2641
        %v2762 = vpop.xlane.xlu0 %2761
        %2763 = vmax.xlane.f32.xlu0 %v2642
        %v2764 = vpop.xlane.xlu0 %2763
        %2765 = vmax.xlane.f32.xlu0 %v2643
        %v2766 = vpop.xlane.xlu0 %2765
        %2767 = vmax.xlane.f32.xlu0 %v2644
        %v2768 = vpop.xlane.xlu0 %2767
        %2769 = vmax.xlane.f32.xlu0 %v2645
        %v2770 = vpop.xlane.xlu0 %2769
        %2771 = vmax.xlane.f32.xlu0 %v2646
        %v2772 = vpop.xlane.xlu0 %2771
        %2773 = vmax.xlane.f32.xlu0 %v2647
        %v2774 = vpop.xlane.xlu0 %2773
        %2775 = vmax.xlane.f32.xlu0 %v2648
        %v2776 = vpop.xlane.xlu0 %2775
        %v2777 = vsub.f32 %v2585, %v2650
        %v2778 = vsub.f32 %v2586, %v2652
        %v2779 = vsub.f32 %v2587, %v2654
        %v2780 = vsub.f32 %v2588, %v2656
        %v2781 = vsub.f32 %v2589, %v2658
        %v2782 = vsub.f32 %v2590, %v2660
        %v2783 = vsub.f32 %v2591, %v2662
        %v2784 = vsub.f32 %v2592, %v2664
        %v2785 = vsub.f32 %v2593, %v2666
        %v2786 = vsub.f32 %v2594, %v2668
        %v2787 = vsub.f32 %v2595, %v2670
        %v2788 = vsub.f32 %v2596, %v2672
        %v2789 = vsub.f32 %v2597, %v2674
        %v2790 = vsub.f32 %v2598, %v2676
        %v2791 = vsub.f32 %v2599, %v2678
        %v2792 = vsub.f32 %v2600, %v2680
        %v2793 = vsub.f32 %v2601, %v2682
        %v2794 = vsub.f32 %v2602, %v2684
        %v2795 = vsub.f32 %v2603, %v2686
        %v2796 = vsub.f32 %v2604, %v2688
        %v2797 = vsub.f32 %v2605, %v2690
        %v2798 = vsub.f32 %v2606, %v2692
        %v2799 = vsub.f32 %v2607, %v2694
        %v2800 = vsub.f32 %v2608, %v2696
        %v2801 = vsub.f32 %v2609, %v2698
        %v2802 = vsub.f32 %v2610, %v2700
        %v2803 = vsub.f32 %v2611, %v2702
        %v2804 = vsub.f32 %v2612, %v2704
        %v2805 = vsub.f32 %v2613, %v2706
        %v2806 = vsub.f32 %v2614, %v2708
        %v2807 = vsub.f32 %v2615, %v2710
        %v2808 = vsub.f32 %v2616, %v2712
        %v2809 = vsub.f32 %v2617, %v2714
        %v2810 = vsub.f32 %v2618, %v2716
        %v2811 = vsub.f32 %v2619, %v2718
        %v2812 = vsub.f32 %v2620, %v2720
        %v2813 = vsub.f32 %v2621, %v2722
        %v2814 = vsub.f32 %v2622, %v2724
        %v2815 = vsub.f32 %v2623, %v2726
        %v2816 = vsub.f32 %v2624, %v2728
        %v2817 = vsub.f32 %v2625, %v2730
        %v2818 = vsub.f32 %v2626, %v2732
        %v2819 = vsub.f32 %v2627, %v2734
        %v2820 = vsub.f32 %v2628, %v2736
        %v2821 = vsub.f32 %v2629, %v2738
        %v2822 = vsub.f32 %v2630, %v2740
        %v2823 = vsub.f32 %v2631, %v2742
        %v2824 = vsub.f32 %v2632, %v2744
        %v2825 = vsub.f32 %v2633, %v2746
        %v2826 = vsub.f32 %v2634, %v2748
        %v2827 = vsub.f32 %v2635, %v2750
        %v2828 = vsub.f32 %v2636, %v2752
        %v2829 = vsub.f32 %v2637, %v2754
        %v2830 = vsub.f32 %v2638, %v2756
        %v2831 = vsub.f32 %v2639, %v2758
        %v2832 = vsub.f32 %v2640, %v2760
        %v2833 = vsub.f32 %v2641, %v2762
        %v2834 = vsub.f32 %v2642, %v2764
        %v2835 = vsub.f32 %v2643, %v2766
        %v2836 = vsub.f32 %v2644, %v2768
        %v2837 = vsub.f32 %v2645, %v2770
        %v2838 = vsub.f32 %v2646, %v2772
        %v2839 = vsub.f32 %v2647, %v2774
        %v2840 = vsub.f32 %v2648, %v2776
        %v2841 = vmul.f32 %v2777, 1.442695
        %v2842 = vpow.pop %v2841
        %v2843 = vmul.f32 %v2778, 1.442695
        %v2844 = vpow.pop %v2843
        %v2845 = vmul.f32 %v2779, 1.442695
        %v2846 = vpow.pop %v2845
        %v2847 = vmul.f32 %v2780, 1.442695
        %v2848 = vpow.pop %v2847
        %v2849 = vmul.f32 %v2781, 1.442695
        %v2850 = vpow.pop %v2849
        %v2851 = vmul.f32 %v2782, 1.442695
        %v2852 = vpow.pop %v2851
        %v2853 = vmul.f32 %v2783, 1.442695
        %v2854 = vpow.pop %v2853
        %v2855 = vmul.f32 %v2784, 1.442695
        %v2856 = vpow.pop %v2855
        %v2857 = vmul.f32 %v2785, 1.442695
        %v2858 = vpow.pop %v2857
        %v2859 = vmul.f32 %v2786, 1.442695
        %v2860 = vpow.pop %v2859
        %v2861 = vmul.f32 %v2787, 1.442695
        %v2862 = vpow.pop %v2861
        %v2863 = vmul.f32 %v2788, 1.442695
        %v2864 = vpow.pop %v2863
        %v2865 = vmul.f32 %v2789, 1.442695
        %v2866 = vpow.pop %v2865
        %v2867 = vmul.f32 %v2790, 1.442695
        %v2868 = vpow.pop %v2867
        %v2869 = vmul.f32 %v2791, 1.442695
        %v2870 = vpow.pop %v2869
        %v2871 = vmul.f32 %v2792, 1.442695
        %v2872 = vpow.pop %v2871
        %v2873 = vmul.f32 %v2793, 1.442695
        %v2874 = vpow.pop %v2873
        %v2875 = vmul.f32 %v2794, 1.442695
        %v2876 = vpow.pop %v2875
        %v2877 = vmul.f32 %v2795, 1.442695
        %v2878 = vpow.pop %v2877
        %v2879 = vmul.f32 %v2796, 1.442695
        %v2880 = vpow.pop %v2879
        %v2881 = vmul.f32 %v2797, 1.442695
        %v2882 = vpow.pop %v2881
        %v2883 = vmul.f32 %v2798, 1.442695
        %v2884 = vpow.pop %v2883
        %v2885 = vmul.f32 %v2799, 1.442695
        %v2886 = vpow.pop %v2885
        %v2887 = vmul.f32 %v2800, 1.442695
        %v2888 = vpow.pop %v2887
        %v2889 = vmul.f32 %v2801, 1.442695
        %v2890 = vpow.pop %v2889
        %v2891 = vmul.f32 %v2802, 1.442695
        %v2892 = vpow.pop %v2891
        %v2893 = vmul.f32 %v2803, 1.442695
        %v2894 = vpow.pop %v2893
        %v2895 = vmul.f32 %v2804, 1.442695
        %v2896 = vpow.pop %v2895
        %v2897 = vmul.f32 %v2805, 1.442695
        %v2898 = vpow.pop %v2897
        %v2899 = vmul.f32 %v2806, 1.442695
        %v2900 = vpow.pop %v2899
        %v2901 = vmul.f32 %v2807, 1.442695
        %v2902 = vpow.pop %v2901
        %v2903 = vmul.f32 %v2808, 1.442695
        %v2904 = vpow.pop %v2903
        %v2905 = vmul.f32 %v2809, 1.442695
        %v2906 = vpow.pop %v2905
        %v2907 = vmul.f32 %v2810, 1.442695
        %v2908 = vpow.pop %v2907
        %v2909 = vmul.f32 %v2811, 1.442695
        %v2910 = vpow.pop %v2909
        %v2911 = vmul.f32 %v2812, 1.442695
        %v2912 = vpow.pop %v2911
        %v2913 = vmul.f32 %v2813, 1.442695
        %v2914 = vpow.pop %v2913
        %v2915 = vmul.f32 %v2814, 1.442695
        %v2916 = vpow.pop %v2915
        %v2917 = vmul.f32 %v2815, 1.442695
        %v2918 = vpow.pop %v2917
        %v2919 = vmul.f32 %v2816, 1.442695
        %v2920 = vpow.pop %v2919
        %v2921 = vmul.f32 %v2817, 1.442695
        %v2922 = vpow.pop %v2921
        %v2923 = vmul.f32 %v2818, 1.442695
        %v2924 = vpow.pop %v2923
        %v2925 = vmul.f32 %v2819, 1.442695
        %v2926 = vpow.pop %v2925
        %v2927 = vmul.f32 %v2820, 1.442695
        %v2928 = vpow.pop %v2927
        %v2929 = vmul.f32 %v2821, 1.442695
        %v2930 = vpow.pop %v2929
        %v2931 = vmul.f32 %v2822, 1.442695
        %v2932 = vpow.pop %v2931
        %v2933 = vmul.f32 %v2823, 1.442695
        %v2934 = vpow.pop %v2933
        %v2935 = vmul.f32 %v2824, 1.442695
        %v2936 = vpow.pop %v2935
        %v2937 = vmul.f32 %v2825, 1.442695
        %v2938 = vpow.pop %v2937
        %v2939 = vmul.f32 %v2826, 1.442695
        %v2940 = vpow.pop %v2939
        %v2941 = vmul.f32 %v2827, 1.442695
        %v2942 = vpow.pop %v2941
        %v2943 = vmul.f32 %v2828, 1.442695
        %v2944 = vpow.pop %v2943
        %v2945 = vmul.f32 %v2829, 1.442695
        %v2946 = vpow.pop %v2945
        %v2947 = vmul.f32 %v2830, 1.442695
        %v2948 = vpow.pop %v2947
        %v2949 = vmul.f32 %v2831, 1.442695
        %v2950 = vpow.pop %v2949
        %v2951 = vmul.f32 %v2832, 1.442695
        %v2952 = vpow.pop %v2951
        %v2953 = vmul.f32 %v2833, 1.442695
        %v2954 = vpow.pop %v2953
        %v2955 = vmul.f32 %v2834, 1.442695
        %v2956 = vpow.pop %v2955
        %v2957 = vmul.f32 %v2835, 1.442695
        %v2958 = vpow.pop %v2957
        %v2959 = vmul.f32 %v2836, 1.442695
        %v2960 = vpow.pop %v2959
        %v2961 = vmul.f32 %v2837, 1.442695
        %v2962 = vpow.pop %v2961
        %v2963 = vmul.f32 %v2838, 1.442695
        %v2964 = vpow.pop %v2963
        %v2965 = vmul.f32 %v2839, 1.442695
        %v2966 = vpow.pop %v2965
        %v2967 = vmul.f32 %v2840, 1.442695
        %v2968 = vpow.pop %v2967
        %2969 = vadd.xlane.f32.xlu0 %v2842
        %v2970 = vpop.xlane.xlu0 %2969
        %2971 = vadd.xlane.f32.xlu0 %v2844
        %v2972 = vpop.xlane.xlu0 %2971
        %2973 = vadd.xlane.f32.xlu0 %v2846
        %v2974 = vpop.xlane.xlu0 %2973
        %2975 = vadd.xlane.f32.xlu0 %v2848
        %v2976 = vpop.xlane.xlu0 %2975
        %2977 = vadd.xlane.f32.xlu0 %v2850
        %v2978 = vpop.xlane.xlu0 %2977
        %2979 = vadd.xlane.f32.xlu0 %v2852
        %v2980 = vpop.xlane.xlu0 %2979
        %2981 = vadd.xlane.f32.xlu0 %v2854
        %v2982 = vpop.xlane.xlu0 %2981
        %2983 = vadd.xlane.f32.xlu0 %v2856
        %v2984 = vpop.xlane.xlu0 %2983
        %2985 = vadd.xlane.f32.xlu0 %v2858
        %v2986 = vpop.xlane.xlu0 %2985
        %2987 = vadd.xlane.f32.xlu0 %v2860
        %v2988 = vpop.xlane.xlu0 %2987
        %2989 = vadd.xlane.f32.xlu0 %v2862
        %v2990 = vpop.xlane.xlu0 %2989
        %2991 = vadd.xlane.f32.xlu0 %v2864
        %v2992 = vpop.xlane.xlu0 %2991
        %2993 = vadd.xlane.f32.xlu0 %v2866
        %v2994 = vpop.xlane.xlu0 %2993
        %2995 = vadd.xlane.f32.xlu0 %v2868
        %v2996 = vpop.xlane.xlu0 %2995
        %2997 = vadd.xlane.f32.xlu0 %v2870
        %v2998 = vpop.xlane.xlu0 %2997
        %2999 = vadd.xlane.f32.xlu0 %v2872
        %v3000 = vpop.xlane.xlu0 %2999
        %3001 = vadd.xlane.f32.xlu0 %v2874
        %v3002 = vpop.xlane.xlu0 %3001
        %3003 = vadd.xlane.f32.xlu0 %v2876
        %v3004 = vpop.xlane.xlu0 %3003
        %3005 = vadd.xlane.f32.xlu0 %v2878
        %v3006 = vpop.xlane.xlu0 %3005
        %3007 = vadd.xlane.f32.xlu0 %v2880
        %v3008 = vpop.xlane.xlu0 %3007
        %3009 = vadd.xlane.f32.xlu0 %v2882
        %v3010 = vpop.xlane.xlu0 %3009
        %3011 = vadd.xlane.f32.xlu0 %v2884
        %v3012 = vpop.xlane.xlu0 %3011
        %3013 = vadd.xlane.f32.xlu0 %v2886
        %v3014 = vpop.xlane.xlu0 %3013
        %3015 = vadd.xlane.f32.xlu0 %v2888
        %v3016 = vpop.xlane.xlu0 %3015
        %3017 = vadd.xlane.f32.xlu0 %v2890
        %v3018 = vpop.xlane.xlu0 %3017
        %3019 = vadd.xlane.f32.xlu0 %v2892
        %v3020 = vpop.xlane.xlu0 %3019
        %3021 = vadd.xlane.f32.xlu0 %v2894
        %v3022 = vpop.xlane.xlu0 %3021
        %3023 = vadd.xlane.f32.xlu0 %v2896
        %v3024 = vpop.xlane.xlu0 %3023
        %3025 = vadd.xlane.f32.xlu0 %v2898
        %v3026 = vpop.xlane.xlu0 %3025
        %3027 = vadd.xlane.f32.xlu0 %v2900
        %v3028 = vpop.xlane.xlu0 %3027
        %3029 = vadd.xlane.f32.xlu0 %v2902
        %v3030 = vpop.xlane.xlu0 %3029
        %3031 = vadd.xlane.f32.xlu0 %v2904
        %v3032 = vpop.xlane.xlu0 %3031
        %3033 = vadd.xlane.f32.xlu0 %v2906
        %v3034 = vpop.xlane.xlu0 %3033
        %3035 = vadd.xlane.f32.xlu0 %v2908
        %v3036 = vpop.xlane.xlu0 %3035
        %3037 = vadd.xlane.f32.xlu0 %v2910
        %v3038 = vpop.xlane.xlu0 %3037
        %3039 = vadd.xlane.f32.xlu0 %v2912
        %v3040 = vpop.xlane.xlu0 %3039
        %3041 = vadd.xlane.f32.xlu0 %v2914
        %v3042 = vpop.xlane.xlu0 %3041
        %3043 = vadd.xlane.f32.xlu0 %v2916
        %v3044 = vpop.xlane.xlu0 %3043
        %3045 = vadd.xlane.f32.xlu0 %v2918
        %v3046 = vpop.xlane.xlu0 %3045
        %3047 = vadd.xlane.f32.xlu0 %v2920
        %v3048 = vpop.xlane.xlu0 %3047
        %3049 = vadd.xlane.f32.xlu0 %v2922
        %v3050 = vpop.xlane.xlu0 %3049
        %3051 = vadd.xlane.f32.xlu0 %v2924
        %v3052 = vpop.xlane.xlu0 %3051
        %3053 = vadd.xlane.f32.xlu0 %v2926
        %v3054 = vpop.xlane.xlu0 %3053
        %3055 = vadd.xlane.f32.xlu0 %v2928
        %v3056 = vpop.xlane.xlu0 %3055
        %3057 = vadd.xlane.f32.xlu0 %v2930
        %v3058 = vpop.xlane.xlu0 %3057
        %3059 = vadd.xlane.f32.xlu0 %v2932
        %v3060 = vpop.xlane.xlu0 %3059
        %3061 = vadd.xlane.f32.xlu0 %v2934
        %v3062 = vpop.xlane.xlu0 %3061
        %3063 = vadd.xlane.f32.xlu0 %v2936
        %v3064 = vpop.xlane.xlu0 %3063
        %3065 = vadd.xlane.f32.xlu0 %v2938
        %v3066 = vpop.xlane.xlu0 %3065
        %3067 = vadd.xlane.f32.xlu0 %v2940
        %v3068 = vpop.xlane.xlu0 %3067
        %3069 = vadd.xlane.f32.xlu0 %v2942
        %v3070 = vpop.xlane.xlu0 %3069
        %3071 = vadd.xlane.f32.xlu0 %v2944
        %v3072 = vpop.xlane.xlu0 %3071
        %3073 = vadd.xlane.f32.xlu0 %v2946
        %v3074 = vpop.xlane.xlu0 %3073
        %3075 = vadd.xlane.f32.xlu0 %v2948
        %v3076 = vpop.xlane.xlu0 %3075
        %3077 = vadd.xlane.f32.xlu0 %v2950
        %v3078 = vpop.xlane.xlu0 %3077
        %3079 = vadd.xlane.f32.xlu0 %v2952
        %v3080 = vpop.xlane.xlu0 %3079
        %3081 = vadd.xlane.f32.xlu0 %v2954
        %v3082 = vpop.xlane.xlu0 %3081
        %3083 = vadd.xlane.f32.xlu0 %v2956
        %v3084 = vpop.xlane.xlu0 %3083
        %3085 = vadd.xlane.f32.xlu0 %v2958
        %v3086 = vpop.xlane.xlu0 %3085
        %3087 = vadd.xlane.f32.xlu0 %v2960
        %v3088 = vpop.xlane.xlu0 %3087
        %3089 = vadd.xlane.f32.xlu0 %v2962
        %v3090 = vpop.xlane.xlu0 %3089
        %3091 = vadd.xlane.f32.xlu0 %v2964
        %v3092 = vpop.xlane.xlu0 %3091
        %3093 = vadd.xlane.f32.xlu0 %v2966
        %v3094 = vpop.xlane.xlu0 %3093
        %3095 = vadd.xlane.f32.xlu0 %v2968
        %v3096 = vpop.xlane.xlu0 %3095
        %v3097 = vrcp.pop %v2970
        %v3098 = vmul.f32 %v2970, %v3097
        %v3099 = vsub.f32 1.0, %v3098
        %v3100 = vmul.f32 %v3097, %v3099
        %v3101 = vadd.f32 %v3097, %v3100
        %vm3102 = vweird.f32 %v2970
        %vm3103 = vweird.f32 %v3097
        %vm3104 = vmor %vm3102, %vm3103
        %v3105 = vsel %vm3104, %v3097, %v3101
        %v3106 = vand.u32 2147483647, %v2970
        %vm3107 = vcmp.eq.f32.partialorder %v3106, 8.507059e+37
        %v3108 = vand.u32 %v2970, 2147483648
        %v3109 = vor.u32 1.1754944e-38, %v3108
        %v3110 = vsel %vm3107, %v3109, %v3105
        %v3111 = vmul.f32 %v2842, %v3110
        %v3112 = vrcp.pop %v2972
        %v3113 = vmul.f32 %v2972, %v3112
        %v3114 = vsub.f32 1.0, %v3113
        %v3115 = vmul.f32 %v3112, %v3114
        %v3116 = vadd.f32 %v3112, %v3115
        %vm3117 = vweird.f32 %v2972
        %vm3118 = vweird.f32 %v3112
        %vm3119 = vmor %vm3117, %vm3118
        %v3120 = vsel %vm3119, %v3112, %v3116
        %v3121 = vand.u32 2147483647, %v2972
        %vm3122 = vcmp.eq.f32.partialorder %v3121, 8.507059e+37
        %v3123 = vand.u32 %v2972, 2147483648
        %v3124 = vor.u32 1.1754944e-38, %v3123
        %v3125 = vsel %vm3122, %v3124, %v3120
        %v3126 = vmul.f32 %v2844, %v3125
        %v3127 = vrcp.pop %v2974
        %v3128 = vmul.f32 %v2974, %v3127
        %v3129 = vsub.f32 1.0, %v3128
        %v3130 = vmul.f32 %v3127, %v3129
        %v3131 = vadd.f32 %v3127, %v3130
        %vm3132 = vweird.f32 %v2974
        %vm3133 = vweird.f32 %v3127
        %vm3134 = vmor %vm3132, %vm3133
        %v3135 = vsel %vm3134, %v3127, %v3131
        %v3136 = vand.u32 2147483647, %v2974
        %vm3137 = vcmp.eq.f32.partialorder %v3136, 8.507059e+37
        %v3138 = vand.u32 %v2974, 2147483648
        %v3139 = vor.u32 1.1754944e-38, %v3138
        %v3140 = vsel %vm3137, %v3139, %v3135
        %v3141 = vmul.f32 %v2846, %v3140
        %v3142 = vrcp.pop %v2976
        %v3143 = vmul.f32 %v2976, %v3142
        %v3144 = vsub.f32 1.0, %v3143
        %v3145 = vmul.f32 %v3142, %v3144
        %v3146 = vadd.f32 %v3142, %v3145
        %vm3147 = vweird.f32 %v2976
        %vm3148 = vweird.f32 %v3142
        %vm3149 = vmor %vm3147, %vm3148
        %v3150 = vsel %vm3149, %v3142, %v3146
        %v3151 = vand.u32 2147483647, %v2976
        %vm3152 = vcmp.eq.f32.partialorder %v3151, 8.507059e+37
        %v3153 = vand.u32 %v2976, 2147483648
        %v3154 = vor.u32 1.1754944e-38, %v3153
        %v3155 = vsel %vm3152, %v3154, %v3150
        %v3156 = vmul.f32 %v2848, %v3155
        %v3157 = vrcp.pop %v2978
        %v3158 = vmul.f32 %v2978, %v3157
        %v3159 = vsub.f32 1.0, %v3158
        %v3160 = vmul.f32 %v3157, %v3159
        %v3161 = vadd.f32 %v3157, %v3160
        %vm3162 = vweird.f32 %v2978
        %vm3163 = vweird.f32 %v3157
        %vm3164 = vmor %vm3162, %vm3163
        %v3165 = vsel %vm3164, %v3157, %v3161
        %v3166 = vand.u32 2147483647, %v2978
        %vm3167 = vcmp.eq.f32.partialorder %v3166, 8.507059e+37
        %v3168 = vand.u32 %v2978, 2147483648
        %v3169 = vor.u32 1.1754944e-38, %v3168
        %v3170 = vsel %vm3167, %v3169, %v3165
        %v3171 = vmul.f32 %v2850, %v3170
        %v3172 = vrcp.pop %v2980
        %v3173 = vmul.f32 %v2980, %v3172
        %v3174 = vsub.f32 1.0, %v3173
        %v3175 = vmul.f32 %v3172, %v3174
        %v3176 = vadd.f32 %v3172, %v3175
        %vm3177 = vweird.f32 %v2980
        %vm3178 = vweird.f32 %v3172
        %vm3179 = vmor %vm3177, %vm3178
        %v3180 = vsel %vm3179, %v3172, %v3176
        %v3181 = vand.u32 2147483647, %v2980
        %vm3182 = vcmp.eq.f32.partialorder %v3181, 8.507059e+37
        %v3183 = vand.u32 %v2980, 2147483648
        %v3184 = vor.u32 1.1754944e-38, %v3183
        %v3185 = vsel %vm3182, %v3184, %v3180
        %v3186 = vmul.f32 %v2852, %v3185
        %v3187 = vrcp.pop %v2982
        %v3188 = vmul.f32 %v2982, %v3187
        %v3189 = vsub.f32 1.0, %v3188
        %v3190 = vmul.f32 %v3187, %v3189
        %v3191 = vadd.f32 %v3187, %v3190
        %vm3192 = vweird.f32 %v2982
        %vm3193 = vweird.f32 %v3187
        %vm3194 = vmor %vm3192, %vm3193
        %v3195 = vsel %vm3194, %v3187, %v3191
        %v3196 = vand.u32 2147483647, %v2982
        %vm3197 = vcmp.eq.f32.partialorder %v3196, 8.507059e+37
        %v3198 = vand.u32 %v2982, 2147483648
        %v3199 = vor.u32 1.1754944e-38, %v3198
        %v3200 = vsel %vm3197, %v3199, %v3195
        %v3201 = vmul.f32 %v2854, %v3200
        %v3202 = vrcp.pop %v2984
        %v3203 = vmul.f32 %v2984, %v3202
        %v3204 = vsub.f32 1.0, %v3203
        %v3205 = vmul.f32 %v3202, %v3204
        %v3206 = vadd.f32 %v3202, %v3205
        %vm3207 = vweird.f32 %v2984
        %vm3208 = vweird.f32 %v3202
        %vm3209 = vmor %vm3207, %vm3208
        %v3210 = vsel %vm3209, %v3202, %v3206
        %v3211 = vand.u32 2147483647, %v2984
        %vm3212 = vcmp.eq.f32.partialorder %v3211, 8.507059e+37
        %v3213 = vand.u32 %v2984, 2147483648
        %v3214 = vor.u32 1.1754944e-38, %v3213
        %v3215 = vsel %vm3212, %v3214, %v3210
        %v3216 = vmul.f32 %v2856, %v3215
        %v3217 = vrcp.pop %v2986
        %v3218 = vmul.f32 %v2986, %v3217
        %v3219 = vsub.f32 1.0, %v3218
        %v3220 = vmul.f32 %v3217, %v3219
        %v3221 = vadd.f32 %v3217, %v3220
        %vm3222 = vweird.f32 %v2986
        %vm3223 = vweird.f32 %v3217
        %vm3224 = vmor %vm3222, %vm3223
        %v3225 = vsel %vm3224, %v3217, %v3221
        %v3226 = vand.u32 2147483647, %v2986
        %vm3227 = vcmp.eq.f32.partialorder %v3226, 8.507059e+37
        %v3228 = vand.u32 %v2986, 2147483648
        %v3229 = vor.u32 1.1754944e-38, %v3228
        %v3230 = vsel %vm3227, %v3229, %v3225
        %v3231 = vmul.f32 %v2858, %v3230
        %v3232 = vrcp.pop %v2988
        %v3233 = vmul.f32 %v2988, %v3232
        %v3234 = vsub.f32 1.0, %v3233
        %v3235 = vmul.f32 %v3232, %v3234
        %v3236 = vadd.f32 %v3232, %v3235
        %vm3237 = vweird.f32 %v2988
        %vm3238 = vweird.f32 %v3232
        %vm3239 = vmor %vm3237, %vm3238
        %v3240 = vsel %vm3239, %v3232, %v3236
        %v3241 = vand.u32 2147483647, %v2988
        %vm3242 = vcmp.eq.f32.partialorder %v3241, 8.507059e+37
        %v3243 = vand.u32 %v2988, 2147483648
        %v3244 = vor.u32 1.1754944e-38, %v3243
        %v3245 = vsel %vm3242, %v3244, %v3240
        %v3246 = vmul.f32 %v2860, %v3245
        %v3247 = vrcp.pop %v2990
        %v3248 = vmul.f32 %v2990, %v3247
        %v3249 = vsub.f32 1.0, %v3248
        %v3250 = vmul.f32 %v3247, %v3249
        %v3251 = vadd.f32 %v3247, %v3250
        %vm3252 = vweird.f32 %v2990
        %vm3253 = vweird.f32 %v3247
        %vm3254 = vmor %vm3252, %vm3253
        %v3255 = vsel %vm3254, %v3247, %v3251
        %v3256 = vand.u32 2147483647, %v2990
        %vm3257 = vcmp.eq.f32.partialorder %v3256, 8.507059e+37
        %v3258 = vand.u32 %v2990, 2147483648
        %v3259 = vor.u32 1.1754944e-38, %v3258
        %v3260 = vsel %vm3257, %v3259, %v3255
        %v3261 = vmul.f32 %v2862, %v3260
        %v3262 = vrcp.pop %v2992
        %v3263 = vmul.f32 %v2992, %v3262
        %v3264 = vsub.f32 1.0, %v3263
        %v3265 = vmul.f32 %v3262, %v3264
        %v3266 = vadd.f32 %v3262, %v3265
        %vm3267 = vweird.f32 %v2992
        %vm3268 = vweird.f32 %v3262
        %vm3269 = vmor %vm3267, %vm3268
        %v3270 = vsel %vm3269, %v3262, %v3266
        %v3271 = vand.u32 2147483647, %v2992
        %vm3272 = vcmp.eq.f32.partialorder %v3271, 8.507059e+37
        %v3273 = vand.u32 %v2992, 2147483648
        %v3274 = vor.u32 1.1754944e-38, %v3273
        %v3275 = vsel %vm3272, %v3274, %v3270
        %v3276 = vmul.f32 %v2864, %v3275
        %v3277 = vrcp.pop %v2994
        %v3278 = vmul.f32 %v2994, %v3277
        %v3279 = vsub.f32 1.0, %v3278
        %v3280 = vmul.f32 %v3277, %v3279
        %v3281 = vadd.f32 %v3277, %v3280
        %vm3282 = vweird.f32 %v2994
        %vm3283 = vweird.f32 %v3277
        %vm3284 = vmor %vm3282, %vm3283
        %v3285 = vsel %vm3284, %v3277, %v3281
        %v3286 = vand.u32 2147483647, %v2994
        %vm3287 = vcmp.eq.f32.partialorder %v3286, 8.507059e+37
        %v3288 = vand.u32 %v2994, 2147483648
        %v3289 = vor.u32 1.1754944e-38, %v3288
        %v3290 = vsel %vm3287, %v3289, %v3285
        %v3291 = vmul.f32 %v2866, %v3290
        %v3292 = vrcp.pop %v2996
        %v3293 = vmul.f32 %v2996, %v3292
        %v3294 = vsub.f32 1.0, %v3293
        %v3295 = vmul.f32 %v3292, %v3294
        %v3296 = vadd.f32 %v3292, %v3295
        %vm3297 = vweird.f32 %v2996
        %vm3298 = vweird.f32 %v3292
        %vm3299 = vmor %vm3297, %vm3298
        %v3300 = vsel %vm3299, %v3292, %v3296
        %v3301 = vand.u32 2147483647, %v2996
        %vm3302 = vcmp.eq.f32.partialorder %v3301, 8.507059e+37
        %v3303 = vand.u32 %v2996, 2147483648
        %v3304 = vor.u32 1.1754944e-38, %v3303
        %v3305 = vsel %vm3302, %v3304, %v3300
        %v3306 = vmul.f32 %v2868, %v3305
        %v3307 = vrcp.pop %v2998
        %v3308 = vmul.f32 %v2998, %v3307
        %v3309 = vsub.f32 1.0, %v3308
        %v3310 = vmul.f32 %v3307, %v3309
        %v3311 = vadd.f32 %v3307, %v3310
        %vm3312 = vweird.f32 %v2998
        %vm3313 = vweird.f32 %v3307
        %vm3314 = vmor %vm3312, %vm3313
        %v3315 = vsel %vm3314, %v3307, %v3311
        %v3316 = vand.u32 2147483647, %v2998
        %vm3317 = vcmp.eq.f32.partialorder %v3316, 8.507059e+37
        %v3318 = vand.u32 %v2998, 2147483648
        %v3319 = vor.u32 1.1754944e-38, %v3318
        %v3320 = vsel %vm3317, %v3319, %v3315
        %v3321 = vmul.f32 %v2870, %v3320
        %v3322 = vrcp.pop %v3000
        %v3323 = vmul.f32 %v3000, %v3322
        %v3324 = vsub.f32 1.0, %v3323
        %v3325 = vmul.f32 %v3322, %v3324
        %v3326 = vadd.f32 %v3322, %v3325
        %vm3327 = vweird.f32 %v3000
        %vm3328 = vweird.f32 %v3322
        %vm3329 = vmor %vm3327, %vm3328
        %v3330 = vsel %vm3329, %v3322, %v3326
        %v3331 = vand.u32 2147483647, %v3000
        %vm3332 = vcmp.eq.f32.partialorder %v3331, 8.507059e+37
        %v3333 = vand.u32 %v3000, 2147483648
        %v3334 = vor.u32 1.1754944e-38, %v3333
        %v3335 = vsel %vm3332, %v3334, %v3330
        %v3336 = vmul.f32 %v2872, %v3335
        %v3337 = vrcp.pop %v3002
        %v3338 = vmul.f32 %v3002, %v3337
        %v3339 = vsub.f32 1.0, %v3338
        %v3340 = vmul.f32 %v3337, %v3339
        %v3341 = vadd.f32 %v3337, %v3340
        %vm3342 = vweird.f32 %v3002
        %vm3343 = vweird.f32 %v3337
        %vm3344 = vmor %vm3342, %vm3343
        %v3345 = vsel %vm3344, %v3337, %v3341
        %v3346 = vand.u32 2147483647, %v3002
        %vm3347 = vcmp.eq.f32.partialorder %v3346, 8.507059e+37
        %v3348 = vand.u32 %v3002, 2147483648
        %v3349 = vor.u32 1.1754944e-38, %v3348
        %v3350 = vsel %vm3347, %v3349, %v3345
        %v3351 = vmul.f32 %v2874, %v3350
        %v3352 = vrcp.pop %v3004
        %v3353 = vmul.f32 %v3004, %v3352
        %v3354 = vsub.f32 1.0, %v3353
        %v3355 = vmul.f32 %v3352, %v3354
        %v3356 = vadd.f32 %v3352, %v3355
        %vm3357 = vweird.f32 %v3004
        %vm3358 = vweird.f32 %v3352
        %vm3359 = vmor %vm3357, %vm3358
        %v3360 = vsel %vm3359, %v3352, %v3356
        %v3361 = vand.u32 2147483647, %v3004
        %vm3362 = vcmp.eq.f32.partialorder %v3361, 8.507059e+37
        %v3363 = vand.u32 %v3004, 2147483648
        %v3364 = vor.u32 1.1754944e-38, %v3363
        %v3365 = vsel %vm3362, %v3364, %v3360
        %v3366 = vmul.f32 %v2876, %v3365
        %v3367 = vrcp.pop %v3006
        %v3368 = vmul.f32 %v3006, %v3367
        %v3369 = vsub.f32 1.0, %v3368
        %v3370 = vmul.f32 %v3367, %v3369
        %v3371 = vadd.f32 %v3367, %v3370
        %vm3372 = vweird.f32 %v3006
        %vm3373 = vweird.f32 %v3367
        %vm3374 = vmor %vm3372, %vm3373
        %v3375 = vsel %vm3374, %v3367, %v3371
        %v3376 = vand.u32 2147483647, %v3006
        %vm3377 = vcmp.eq.f32.partialorder %v3376, 8.507059e+37
        %v3378 = vand.u32 %v3006, 2147483648
        %v3379 = vor.u32 1.1754944e-38, %v3378
        %v3380 = vsel %vm3377, %v3379, %v3375
        %v3381 = vmul.f32 %v2878, %v3380
        %v3382 = vrcp.pop %v3008
        %v3383 = vmul.f32 %v3008, %v3382
        %v3384 = vsub.f32 1.0, %v3383
        %v3385 = vmul.f32 %v3382, %v3384
        %v3386 = vadd.f32 %v3382, %v3385
        %vm3387 = vweird.f32 %v3008
        %vm3388 = vweird.f32 %v3382
        %vm3389 = vmor %vm3387, %vm3388
        %v3390 = vsel %vm3389, %v3382, %v3386
        %v3391 = vand.u32 2147483647, %v3008
        %vm3392 = vcmp.eq.f32.partialorder %v3391, 8.507059e+37
        %v3393 = vand.u32 %v3008, 2147483648
        %v3394 = vor.u32 1.1754944e-38, %v3393
        %v3395 = vsel %vm3392, %v3394, %v3390
        %v3396 = vmul.f32 %v2880, %v3395
        %v3397 = vrcp.pop %v3010
        %v3398 = vmul.f32 %v3010, %v3397
        %v3399 = vsub.f32 1.0, %v3398
        %v3400 = vmul.f32 %v3397, %v3399
        %v3401 = vadd.f32 %v3397, %v3400
        %vm3402 = vweird.f32 %v3010
        %vm3403 = vweird.f32 %v3397
        %vm3404 = vmor %vm3402, %vm3403
        %v3405 = vsel %vm3404, %v3397, %v3401
        %v3406 = vand.u32 2147483647, %v3010
        %vm3407 = vcmp.eq.f32.partialorder %v3406, 8.507059e+37
        %v3408 = vand.u32 %v3010, 2147483648
        %v3409 = vor.u32 1.1754944e-38, %v3408
        %v3410 = vsel %vm3407, %v3409, %v3405
        %v3411 = vmul.f32 %v2882, %v3410
        %v3412 = vrcp.pop %v3012
        %v3413 = vmul.f32 %v3012, %v3412
        %v3414 = vsub.f32 1.0, %v3413
        %v3415 = vmul.f32 %v3412, %v3414
        %v3416 = vadd.f32 %v3412, %v3415
        %vm3417 = vweird.f32 %v3012
        %vm3418 = vweird.f32 %v3412
        %vm3419 = vmor %vm3417, %vm3418
        %v3420 = vsel %vm3419, %v3412, %v3416
        %v3421 = vand.u32 2147483647, %v3012
        %vm3422 = vcmp.eq.f32.partialorder %v3421, 8.507059e+37
        %v3423 = vand.u32 %v3012, 2147483648
        %v3424 = vor.u32 1.1754944e-38, %v3423
        %v3425 = vsel %vm3422, %v3424, %v3420
        %v3426 = vmul.f32 %v2884, %v3425
        %v3427 = vrcp.pop %v3014
        %v3428 = vmul.f32 %v3014, %v3427
        %v3429 = vsub.f32 1.0, %v3428
        %v3430 = vmul.f32 %v3427, %v3429
        %v3431 = vadd.f32 %v3427, %v3430
        %vm3432 = vweird.f32 %v3014
        %vm3433 = vweird.f32 %v3427
        %vm3434 = vmor %vm3432, %vm3433
        %v3435 = vsel %vm3434, %v3427, %v3431
        %v3436 = vand.u32 2147483647, %v3014
        %vm3437 = vcmp.eq.f32.partialorder %v3436, 8.507059e+37
        %v3438 = vand.u32 %v3014, 2147483648
        %v3439 = vor.u32 1.1754944e-38, %v3438
        %v3440 = vsel %vm3437, %v3439, %v3435
        %v3441 = vmul.f32 %v2886, %v3440
        %v3442 = vrcp.pop %v3016
        %v3443 = vmul.f32 %v3016, %v3442
        %v3444 = vsub.f32 1.0, %v3443
        %v3445 = vmul.f32 %v3442, %v3444
        %v3446 = vadd.f32 %v3442, %v3445
        %vm3447 = vweird.f32 %v3016
        %vm3448 = vweird.f32 %v3442
        %vm3449 = vmor %vm3447, %vm3448
        %v3450 = vsel %vm3449, %v3442, %v3446
        %v3451 = vand.u32 2147483647, %v3016
        %vm3452 = vcmp.eq.f32.partialorder %v3451, 8.507059e+37
        %v3453 = vand.u32 %v3016, 2147483648
        %v3454 = vor.u32 1.1754944e-38, %v3453
        %v3455 = vsel %vm3452, %v3454, %v3450
        %v3456 = vmul.f32 %v2888, %v3455
        %v3457 = vrcp.pop %v3018
        %v3458 = vmul.f32 %v3018, %v3457
        %v3459 = vsub.f32 1.0, %v3458
        %v3460 = vmul.f32 %v3457, %v3459
        %v3461 = vadd.f32 %v3457, %v3460
        %vm3462 = vweird.f32 %v3018
        %vm3463 = vweird.f32 %v3457
        %vm3464 = vmor %vm3462, %vm3463
        %v3465 = vsel %vm3464, %v3457, %v3461
        %v3466 = vand.u32 2147483647, %v3018
        %vm3467 = vcmp.eq.f32.partialorder %v3466, 8.507059e+37
        %v3468 = vand.u32 %v3018, 2147483648
        %v3469 = vor.u32 1.1754944e-38, %v3468
        %v3470 = vsel %vm3467, %v3469, %v3465
        %v3471 = vmul.f32 %v2890, %v3470
        %v3472 = vrcp.pop %v3020
        %v3473 = vmul.f32 %v3020, %v3472
        %v3474 = vsub.f32 1.0, %v3473
        %v3475 = vmul.f32 %v3472, %v3474
        %v3476 = vadd.f32 %v3472, %v3475
        %vm3477 = vweird.f32 %v3020
        %vm3478 = vweird.f32 %v3472
        %vm3479 = vmor %vm3477, %vm3478
        %v3480 = vsel %vm3479, %v3472, %v3476
        %v3481 = vand.u32 2147483647, %v3020
        %vm3482 = vcmp.eq.f32.partialorder %v3481, 8.507059e+37
        %v3483 = vand.u32 %v3020, 2147483648
        %v3484 = vor.u32 1.1754944e-38, %v3483
        %v3485 = vsel %vm3482, %v3484, %v3480
        %v3486 = vmul.f32 %v2892, %v3485
        %v3487 = vrcp.pop %v3022
        %v3488 = vmul.f32 %v3022, %v3487
        %v3489 = vsub.f32 1.0, %v3488
        %v3490 = vmul.f32 %v3487, %v3489
        %v3491 = vadd.f32 %v3487, %v3490
        %vm3492 = vweird.f32 %v3022
        %vm3493 = vweird.f32 %v3487
        %vm3494 = vmor %vm3492, %vm3493
        %v3495 = vsel %vm3494, %v3487, %v3491
        %v3496 = vand.u32 2147483647, %v3022
        %vm3497 = vcmp.eq.f32.partialorder %v3496, 8.507059e+37
        %v3498 = vand.u32 %v3022, 2147483648
        %v3499 = vor.u32 1.1754944e-38, %v3498
        %v3500 = vsel %vm3497, %v3499, %v3495
        %v3501 = vmul.f32 %v2894, %v3500
        %v3502 = vrcp.pop %v3024
        %v3503 = vmul.f32 %v3024, %v3502
        %v3504 = vsub.f32 1.0, %v3503
        %v3505 = vmul.f32 %v3502, %v3504
        %v3506 = vadd.f32 %v3502, %v3505
        %vm3507 = vweird.f32 %v3024
        %vm3508 = vweird.f32 %v3502
        %vm3509 = vmor %vm3507, %vm3508
        %v3510 = vsel %vm3509, %v3502, %v3506
        %v3511 = vand.u32 2147483647, %v3024
        %vm3512 = vcmp.eq.f32.partialorder %v3511, 8.507059e+37
        %v3513 = vand.u32 %v3024, 2147483648
        %v3514 = vor.u32 1.1754944e-38, %v3513
        %v3515 = vsel %vm3512, %v3514, %v3510
        %v3516 = vmul.f32 %v2896, %v3515
        %v3517 = vrcp.pop %v3026
        %v3518 = vmul.f32 %v3026, %v3517
        %v3519 = vsub.f32 1.0, %v3518
        %v3520 = vmul.f32 %v3517, %v3519
        %v3521 = vadd.f32 %v3517, %v3520
        %vm3522 = vweird.f32 %v3026
        %vm3523 = vweird.f32 %v3517
        %vm3524 = vmor %vm3522, %vm3523
        %v3525 = vsel %vm3524, %v3517, %v3521
        %v3526 = vand.u32 2147483647, %v3026
        %vm3527 = vcmp.eq.f32.partialorder %v3526, 8.507059e+37
        %v3528 = vand.u32 %v3026, 2147483648
        %v3529 = vor.u32 1.1754944e-38, %v3528
        %v3530 = vsel %vm3527, %v3529, %v3525
        %v3531 = vmul.f32 %v2898, %v3530
        %v3532 = vrcp.pop %v3028
        %v3533 = vmul.f32 %v3028, %v3532
        %v3534 = vsub.f32 1.0, %v3533
        %v3535 = vmul.f32 %v3532, %v3534
        %v3536 = vadd.f32 %v3532, %v3535
        %vm3537 = vweird.f32 %v3028
        %vm3538 = vweird.f32 %v3532
        %vm3539 = vmor %vm3537, %vm3538
        %v3540 = vsel %vm3539, %v3532, %v3536
        %v3541 = vand.u32 2147483647, %v3028
        %vm3542 = vcmp.eq.f32.partialorder %v3541, 8.507059e+37
        %v3543 = vand.u32 %v3028, 2147483648
        %v3544 = vor.u32 1.1754944e-38, %v3543
        %v3545 = vsel %vm3542, %v3544, %v3540
        %v3546 = vmul.f32 %v2900, %v3545
        %v3547 = vrcp.pop %v3030
        %v3548 = vmul.f32 %v3030, %v3547
        %v3549 = vsub.f32 1.0, %v3548
        %v3550 = vmul.f32 %v3547, %v3549
        %v3551 = vadd.f32 %v3547, %v3550
        %vm3552 = vweird.f32 %v3030
        %vm3553 = vweird.f32 %v3547
        %vm3554 = vmor %vm3552, %vm3553
        %v3555 = vsel %vm3554, %v3547, %v3551
        %v3556 = vand.u32 2147483647, %v3030
        %vm3557 = vcmp.eq.f32.partialorder %v3556, 8.507059e+37
        %v3558 = vand.u32 %v3030, 2147483648
        %v3559 = vor.u32 1.1754944e-38, %v3558
        %v3560 = vsel %vm3557, %v3559, %v3555
        %v3561 = vmul.f32 %v2902, %v3560
        %v3562 = vrcp.pop %v3032
        %v3563 = vmul.f32 %v3032, %v3562
        %v3564 = vsub.f32 1.0, %v3563
        %v3565 = vmul.f32 %v3562, %v3564
        %v3566 = vadd.f32 %v3562, %v3565
        %vm3567 = vweird.f32 %v3032
        %vm3568 = vweird.f32 %v3562
        %vm3569 = vmor %vm3567, %vm3568
        %v3570 = vsel %vm3569, %v3562, %v3566
        %v3571 = vand.u32 2147483647, %v3032
        %vm3572 = vcmp.eq.f32.partialorder %v3571, 8.507059e+37
        %v3573 = vand.u32 %v3032, 2147483648
        %v3574 = vor.u32 1.1754944e-38, %v3573
        %v3575 = vsel %vm3572, %v3574, %v3570
        %v3576 = vmul.f32 %v2904, %v3575
        %v3577 = vrcp.pop %v3034
        %v3578 = vmul.f32 %v3034, %v3577
        %v3579 = vsub.f32 1.0, %v3578
        %v3580 = vmul.f32 %v3577, %v3579
        %v3581 = vadd.f32 %v3577, %v3580
        %vm3582 = vweird.f32 %v3034
        %vm3583 = vweird.f32 %v3577
        %vm3584 = vmor %vm3582, %vm3583
        %v3585 = vsel %vm3584, %v3577, %v3581
        %v3586 = vand.u32 2147483647, %v3034
        %vm3587 = vcmp.eq.f32.partialorder %v3586, 8.507059e+37
        %v3588 = vand.u32 %v3034, 2147483648
        %v3589 = vor.u32 1.1754944e-38, %v3588
        %v3590 = vsel %vm3587, %v3589, %v3585
        %v3591 = vmul.f32 %v2906, %v3590
        %v3592 = vrcp.pop %v3036
        %v3593 = vmul.f32 %v3036, %v3592
        %v3594 = vsub.f32 1.0, %v3593
        %v3595 = vmul.f32 %v3592, %v3594
        %v3596 = vadd.f32 %v3592, %v3595
        %vm3597 = vweird.f32 %v3036
        %vm3598 = vweird.f32 %v3592
        %vm3599 = vmor %vm3597, %vm3598
        %v3600 = vsel %vm3599, %v3592, %v3596
        %v3601 = vand.u32 2147483647, %v3036
        %vm3602 = vcmp.eq.f32.partialorder %v3601, 8.507059e+37
        %v3603 = vand.u32 %v3036, 2147483648
        %v3604 = vor.u32 1.1754944e-38, %v3603
        %v3605 = vsel %vm3602, %v3604, %v3600
        %v3606 = vmul.f32 %v2908, %v3605
        %v3607 = vrcp.pop %v3038
        %v3608 = vmul.f32 %v3038, %v3607
        %v3609 = vsub.f32 1.0, %v3608
        %v3610 = vmul.f32 %v3607, %v3609
        %v3611 = vadd.f32 %v3607, %v3610
        %vm3612 = vweird.f32 %v3038
        %vm3613 = vweird.f32 %v3607
        %vm3614 = vmor %vm3612, %vm3613
        %v3615 = vsel %vm3614, %v3607, %v3611
        %v3616 = vand.u32 2147483647, %v3038
        %vm3617 = vcmp.eq.f32.partialorder %v3616, 8.507059e+37
        %v3618 = vand.u32 %v3038, 2147483648
        %v3619 = vor.u32 1.1754944e-38, %v3618
        %v3620 = vsel %vm3617, %v3619, %v3615
        %v3621 = vmul.f32 %v2910, %v3620
        %v3622 = vrcp.pop %v3040
        %v3623 = vmul.f32 %v3040, %v3622
        %v3624 = vsub.f32 1.0, %v3623
        %v3625 = vmul.f32 %v3622, %v3624
        %v3626 = vadd.f32 %v3622, %v3625
        %vm3627 = vweird.f32 %v3040
        %vm3628 = vweird.f32 %v3622
        %vm3629 = vmor %vm3627, %vm3628
        %v3630 = vsel %vm3629, %v3622, %v3626
        %v3631 = vand.u32 2147483647, %v3040
        %vm3632 = vcmp.eq.f32.partialorder %v3631, 8.507059e+37
        %v3633 = vand.u32 %v3040, 2147483648
        %v3634 = vor.u32 1.1754944e-38, %v3633
        %v3635 = vsel %vm3632, %v3634, %v3630
        %v3636 = vmul.f32 %v2912, %v3635
        %v3637 = vrcp.pop %v3042
        %v3638 = vmul.f32 %v3042, %v3637
        %v3639 = vsub.f32 1.0, %v3638
        %v3640 = vmul.f32 %v3637, %v3639
        %v3641 = vadd.f32 %v3637, %v3640
        %vm3642 = vweird.f32 %v3042
        %vm3643 = vweird.f32 %v3637
        %vm3644 = vmor %vm3642, %vm3643
        %v3645 = vsel %vm3644, %v3637, %v3641
        %v3646 = vand.u32 2147483647, %v3042
        %vm3647 = vcmp.eq.f32.partialorder %v3646, 8.507059e+37
        %v3648 = vand.u32 %v3042, 2147483648
        %v3649 = vor.u32 1.1754944e-38, %v3648
        %v3650 = vsel %vm3647, %v3649, %v3645
        %v3651 = vmul.f32 %v2914, %v3650
        %v3652 = vrcp.pop %v3044
        %v3653 = vmul.f32 %v3044, %v3652
        %v3654 = vsub.f32 1.0, %v3653
        %v3655 = vmul.f32 %v3652, %v3654
        %v3656 = vadd.f32 %v3652, %v3655
        %vm3657 = vweird.f32 %v3044
        %vm3658 = vweird.f32 %v3652
        %vm3659 = vmor %vm3657, %vm3658
        %v3660 = vsel %vm3659, %v3652, %v3656
        %v3661 = vand.u32 2147483647, %v3044
        %vm3662 = vcmp.eq.f32.partialorder %v3661, 8.507059e+37
        %v3663 = vand.u32 %v3044, 2147483648
        %v3664 = vor.u32 1.1754944e-38, %v3663
        %v3665 = vsel %vm3662, %v3664, %v3660
        %v3666 = vmul.f32 %v2916, %v3665
        %v3667 = vrcp.pop %v3046
        %v3668 = vmul.f32 %v3046, %v3667
        %v3669 = vsub.f32 1.0, %v3668
        %v3670 = vmul.f32 %v3667, %v3669
        %v3671 = vadd.f32 %v3667, %v3670
        %vm3672 = vweird.f32 %v3046
        %vm3673 = vweird.f32 %v3667
        %vm3674 = vmor %vm3672, %vm3673
        %v3675 = vsel %vm3674, %v3667, %v3671
        %v3676 = vand.u32 2147483647, %v3046
        %vm3677 = vcmp.eq.f32.partialorder %v3676, 8.507059e+37
        %v3678 = vand.u32 %v3046, 2147483648
        %v3679 = vor.u32 1.1754944e-38, %v3678
        %v3680 = vsel %vm3677, %v3679, %v3675
        %v3681 = vmul.f32 %v2918, %v3680
        %v3682 = vrcp.pop %v3048
        %v3683 = vmul.f32 %v3048, %v3682
        %v3684 = vsub.f32 1.0, %v3683
        %v3685 = vmul.f32 %v3682, %v3684
        %v3686 = vadd.f32 %v3682, %v3685
        %vm3687 = vweird.f32 %v3048
        %vm3688 = vweird.f32 %v3682
        %vm3689 = vmor %vm3687, %vm3688
        %v3690 = vsel %vm3689, %v3682, %v3686
        %v3691 = vand.u32 2147483647, %v3048
        %vm3692 = vcmp.eq.f32.partialorder %v3691, 8.507059e+37
        %v3693 = vand.u32 %v3048, 2147483648
        %v3694 = vor.u32 1.1754944e-38, %v3693
        %v3695 = vsel %vm3692, %v3694, %v3690
        %v3696 = vmul.f32 %v2920, %v3695
        %v3697 = vrcp.pop %v3050
        %v3698 = vmul.f32 %v3050, %v3697
        %v3699 = vsub.f32 1.0, %v3698
        %v3700 = vmul.f32 %v3697, %v3699
        %v3701 = vadd.f32 %v3697, %v3700
        %vm3702 = vweird.f32 %v3050
        %vm3703 = vweird.f32 %v3697
        %vm3704 = vmor %vm3702, %vm3703
        %v3705 = vsel %vm3704, %v3697, %v3701
        %v3706 = vand.u32 2147483647, %v3050
        %vm3707 = vcmp.eq.f32.partialorder %v3706, 8.507059e+37
        %v3708 = vand.u32 %v3050, 2147483648
        %v3709 = vor.u32 1.1754944e-38, %v3708
        %v3710 = vsel %vm3707, %v3709, %v3705
        %v3711 = vmul.f32 %v2922, %v3710
        %v3712 = vrcp.pop %v3052
        %v3713 = vmul.f32 %v3052, %v3712
        %v3714 = vsub.f32 1.0, %v3713
        %v3715 = vmul.f32 %v3712, %v3714
        %v3716 = vadd.f32 %v3712, %v3715
        %vm3717 = vweird.f32 %v3052
        %vm3718 = vweird.f32 %v3712
        %vm3719 = vmor %vm3717, %vm3718
        %v3720 = vsel %vm3719, %v3712, %v3716
        %v3721 = vand.u32 2147483647, %v3052
        %vm3722 = vcmp.eq.f32.partialorder %v3721, 8.507059e+37
        %v3723 = vand.u32 %v3052, 2147483648
        %v3724 = vor.u32 1.1754944e-38, %v3723
        %v3725 = vsel %vm3722, %v3724, %v3720
        %v3726 = vmul.f32 %v2924, %v3725
        %v3727 = vrcp.pop %v3054
        %v3728 = vmul.f32 %v3054, %v3727
        %v3729 = vsub.f32 1.0, %v3728
        %v3730 = vmul.f32 %v3727, %v3729
        %v3731 = vadd.f32 %v3727, %v3730
        %vm3732 = vweird.f32 %v3054
        %vm3733 = vweird.f32 %v3727
        %vm3734 = vmor %vm3732, %vm3733
        %v3735 = vsel %vm3734, %v3727, %v3731
        %v3736 = vand.u32 2147483647, %v3054
        %vm3737 = vcmp.eq.f32.partialorder %v3736, 8.507059e+37
        %v3738 = vand.u32 %v3054, 2147483648
        %v3739 = vor.u32 1.1754944e-38, %v3738
        %v3740 = vsel %vm3737, %v3739, %v3735
        %v3741 = vmul.f32 %v2926, %v3740
        %v3742 = vrcp.pop %v3056
        %v3743 = vmul.f32 %v3056, %v3742
        %v3744 = vsub.f32 1.0, %v3743
        %v3745 = vmul.f32 %v3742, %v3744
        %v3746 = vadd.f32 %v3742, %v3745
        %vm3747 = vweird.f32 %v3056
        %vm3748 = vweird.f32 %v3742
        %vm3749 = vmor %vm3747, %vm3748
        %v3750 = vsel %vm3749, %v3742, %v3746
        %v3751 = vand.u32 2147483647, %v3056
        %vm3752 = vcmp.eq.f32.partialorder %v3751, 8.507059e+37
        %v3753 = vand.u32 %v3056, 2147483648
        %v3754 = vor.u32 1.1754944e-38, %v3753
        %v3755 = vsel %vm3752, %v3754, %v3750
        %v3756 = vmul.f32 %v2928, %v3755
        %v3757 = vrcp.pop %v3058
        %v3758 = vmul.f32 %v3058, %v3757
        %v3759 = vsub.f32 1.0, %v3758
        %v3760 = vmul.f32 %v3757, %v3759
        %v3761 = vadd.f32 %v3757, %v3760
        %vm3762 = vweird.f32 %v3058
        %vm3763 = vweird.f32 %v3757
        %vm3764 = vmor %vm3762, %vm3763
        %v3765 = vsel %vm3764, %v3757, %v3761
        %v3766 = vand.u32 2147483647, %v3058
        %vm3767 = vcmp.eq.f32.partialorder %v3766, 8.507059e+37
        %v3768 = vand.u32 %v3058, 2147483648
        %v3769 = vor.u32 1.1754944e-38, %v3768
        %v3770 = vsel %vm3767, %v3769, %v3765
        %v3771 = vmul.f32 %v2930, %v3770
        %v3772 = vrcp.pop %v3060
        %v3773 = vmul.f32 %v3060, %v3772
        %v3774 = vsub.f32 1.0, %v3773
        %v3775 = vmul.f32 %v3772, %v3774
        %v3776 = vadd.f32 %v3772, %v3775
        %vm3777 = vweird.f32 %v3060
        %vm3778 = vweird.f32 %v3772
        %vm3779 = vmor %vm3777, %vm3778
        %v3780 = vsel %vm3779, %v3772, %v3776
        %v3781 = vand.u32 2147483647, %v3060
        %vm3782 = vcmp.eq.f32.partialorder %v3781, 8.507059e+37
        %v3783 = vand.u32 %v3060, 2147483648
        %v3784 = vor.u32 1.1754944e-38, %v3783
        %v3785 = vsel %vm3782, %v3784, %v3780
        %v3786 = vmul.f32 %v2932, %v3785
        %v3787 = vrcp.pop %v3062
        %v3788 = vmul.f32 %v3062, %v3787
        %v3789 = vsub.f32 1.0, %v3788
        %v3790 = vmul.f32 %v3787, %v3789
        %v3791 = vadd.f32 %v3787, %v3790
        %vm3792 = vweird.f32 %v3062
        %vm3793 = vweird.f32 %v3787
        %vm3794 = vmor %vm3792, %vm3793
        %v3795 = vsel %vm3794, %v3787, %v3791
        %v3796 = vand.u32 2147483647, %v3062
        %vm3797 = vcmp.eq.f32.partialorder %v3796, 8.507059e+37
        %v3798 = vand.u32 %v3062, 2147483648
        %v3799 = vor.u32 1.1754944e-38, %v3798
        %v3800 = vsel %vm3797, %v3799, %v3795
        %v3801 = vmul.f32 %v2934, %v3800
        %v3802 = vrcp.pop %v3064
        %v3803 = vmul.f32 %v3064, %v3802
        %v3804 = vsub.f32 1.0, %v3803
        %v3805 = vmul.f32 %v3802, %v3804
        %v3806 = vadd.f32 %v3802, %v3805
        %vm3807 = vweird.f32 %v3064
        %vm3808 = vweird.f32 %v3802
        %vm3809 = vmor %vm3807, %vm3808
        %v3810 = vsel %vm3809, %v3802, %v3806
        %v3811 = vand.u32 2147483647, %v3064
        %vm3812 = vcmp.eq.f32.partialorder %v3811, 8.507059e+37
        %v3813 = vand.u32 %v3064, 2147483648
        %v3814 = vor.u32 1.1754944e-38, %v3813
        %v3815 = vsel %vm3812, %v3814, %v3810
        %v3816 = vmul.f32 %v2936, %v3815
        %v3817 = vrcp.pop %v3066
        %v3818 = vmul.f32 %v3066, %v3817
        %v3819 = vsub.f32 1.0, %v3818
        %v3820 = vmul.f32 %v3817, %v3819
        %v3821 = vadd.f32 %v3817, %v3820
        %vm3822 = vweird.f32 %v3066
        %vm3823 = vweird.f32 %v3817
        %vm3824 = vmor %vm3822, %vm3823
        %v3825 = vsel %vm3824, %v3817, %v3821
        %v3826 = vand.u32 2147483647, %v3066
        %vm3827 = vcmp.eq.f32.partialorder %v3826, 8.507059e+37
        %v3828 = vand.u32 %v3066, 2147483648
        %v3829 = vor.u32 1.1754944e-38, %v3828
        %v3830 = vsel %vm3827, %v3829, %v3825
        %v3831 = vmul.f32 %v2938, %v3830
        %v3832 = vrcp.pop %v3068
        %v3833 = vmul.f32 %v3068, %v3832
        %v3834 = vsub.f32 1.0, %v3833
        %v3835 = vmul.f32 %v3832, %v3834
        %v3836 = vadd.f32 %v3832, %v3835
        %vm3837 = vweird.f32 %v3068
        %vm3838 = vweird.f32 %v3832
        %vm3839 = vmor %vm3837, %vm3838
        %v3840 = vsel %vm3839, %v3832, %v3836
        %v3841 = vand.u32 2147483647, %v3068
        %vm3842 = vcmp.eq.f32.partialorder %v3841, 8.507059e+37
        %v3843 = vand.u32 %v3068, 2147483648
        %v3844 = vor.u32 1.1754944e-38, %v3843
        %v3845 = vsel %vm3842, %v3844, %v3840
        %v3846 = vmul.f32 %v2940, %v3845
        %v3847 = vrcp.pop %v3070
        %v3848 = vmul.f32 %v3070, %v3847
        %v3849 = vsub.f32 1.0, %v3848
        %v3850 = vmul.f32 %v3847, %v3849
        %v3851 = vadd.f32 %v3847, %v3850
        %vm3852 = vweird.f32 %v3070
        %vm3853 = vweird.f32 %v3847
        %vm3854 = vmor %vm3852, %vm3853
        %v3855 = vsel %vm3854, %v3847, %v3851
        %v3856 = vand.u32 2147483647, %v3070
        %vm3857 = vcmp.eq.f32.partialorder %v3856, 8.507059e+37
        %v3858 = vand.u32 %v3070, 2147483648
        %v3859 = vor.u32 1.1754944e-38, %v3858
        %v3860 = vsel %vm3857, %v3859, %v3855
        %v3861 = vmul.f32 %v2942, %v3860
        %v3862 = vrcp.pop %v3072
        %v3863 = vmul.f32 %v3072, %v3862
        %v3864 = vsub.f32 1.0, %v3863
        %v3865 = vmul.f32 %v3862, %v3864
        %v3866 = vadd.f32 %v3862, %v3865
        %vm3867 = vweird.f32 %v3072
        %vm3868 = vweird.f32 %v3862
        %vm3869 = vmor %vm3867, %vm3868
        %v3870 = vsel %vm3869, %v3862, %v3866
        %v3871 = vand.u32 2147483647, %v3072
        %vm3872 = vcmp.eq.f32.partialorder %v3871, 8.507059e+37
        %v3873 = vand.u32 %v3072, 2147483648
        %v3874 = vor.u32 1.1754944e-38, %v3873
        %v3875 = vsel %vm3872, %v3874, %v3870
        %v3876 = vmul.f32 %v2944, %v3875
        %v3877 = vrcp.pop %v3074
        %v3878 = vmul.f32 %v3074, %v3877
        %v3879 = vsub.f32 1.0, %v3878
        %v3880 = vmul.f32 %v3877, %v3879
        %v3881 = vadd.f32 %v3877, %v3880
        %vm3882 = vweird.f32 %v3074
        %vm3883 = vweird.f32 %v3877
        %vm3884 = vmor %vm3882, %vm3883
        %v3885 = vsel %vm3884, %v3877, %v3881
        %v3886 = vand.u32 2147483647, %v3074
        %vm3887 = vcmp.eq.f32.partialorder %v3886, 8.507059e+37
        %v3888 = vand.u32 %v3074, 2147483648
        %v3889 = vor.u32 1.1754944e-38, %v3888
        %v3890 = vsel %vm3887, %v3889, %v3885
        %v3891 = vmul.f32 %v2946, %v3890
        %v3892 = vrcp.pop %v3076
        %v3893 = vmul.f32 %v3076, %v3892
        %v3894 = vsub.f32 1.0, %v3893
        %v3895 = vmul.f32 %v3892, %v3894
        %v3896 = vadd.f32 %v3892, %v3895
        %vm3897 = vweird.f32 %v3076
        %vm3898 = vweird.f32 %v3892
        %vm3899 = vmor %vm3897, %vm3898
        %v3900 = vsel %vm3899, %v3892, %v3896
        %v3901 = vand.u32 2147483647, %v3076
        %vm3902 = vcmp.eq.f32.partialorder %v3901, 8.507059e+37
        %v3903 = vand.u32 %v3076, 2147483648
        %v3904 = vor.u32 1.1754944e-38, %v3903
        %v3905 = vsel %vm3902, %v3904, %v3900
        %v3906 = vmul.f32 %v2948, %v3905
        %v3907 = vrcp.pop %v3078
        %v3908 = vmul.f32 %v3078, %v3907
        %v3909 = vsub.f32 1.0, %v3908
        %v3910 = vmul.f32 %v3907, %v3909
        %v3911 = vadd.f32 %v3907, %v3910
        %vm3912 = vweird.f32 %v3078
        %vm3913 = vweird.f32 %v3907
        %vm3914 = vmor %vm3912, %vm3913
        %v3915 = vsel %vm3914, %v3907, %v3911
        %v3916 = vand.u32 2147483647, %v3078
        %vm3917 = vcmp.eq.f32.partialorder %v3916, 8.507059e+37
        %v3918 = vand.u32 %v3078, 2147483648
        %v3919 = vor.u32 1.1754944e-38, %v3918
        %v3920 = vsel %vm3917, %v3919, %v3915
        %v3921 = vmul.f32 %v2950, %v3920
        %v3922 = vrcp.pop %v3080
        %v3923 = vmul.f32 %v3080, %v3922
        %v3924 = vsub.f32 1.0, %v3923
        %v3925 = vmul.f32 %v3922, %v3924
        %v3926 = vadd.f32 %v3922, %v3925
        %vm3927 = vweird.f32 %v3080
        %vm3928 = vweird.f32 %v3922
        %vm3929 = vmor %vm3927, %vm3928
        %v3930 = vsel %vm3929, %v3922, %v3926
        %v3931 = vand.u32 2147483647, %v3080
        %vm3932 = vcmp.eq.f32.partialorder %v3931, 8.507059e+37
        %v3933 = vand.u32 %v3080, 2147483648
        %v3934 = vor.u32 1.1754944e-38, %v3933
        %v3935 = vsel %vm3932, %v3934, %v3930
        %v3936 = vmul.f32 %v2952, %v3935
        %v3937 = vrcp.pop %v3082
        %v3938 = vmul.f32 %v3082, %v3937
        %v3939 = vsub.f32 1.0, %v3938
        %v3940 = vmul.f32 %v3937, %v3939
        %v3941 = vadd.f32 %v3937, %v3940
        %vm3942 = vweird.f32 %v3082
        %vm3943 = vweird.f32 %v3937
        %vm3944 = vmor %vm3942, %vm3943
        %v3945 = vsel %vm3944, %v3937, %v3941
        %v3946 = vand.u32 2147483647, %v3082
        %vm3947 = vcmp.eq.f32.partialorder %v3946, 8.507059e+37
        %v3948 = vand.u32 %v3082, 2147483648
        %v3949 = vor.u32 1.1754944e-38, %v3948
        %v3950 = vsel %vm3947, %v3949, %v3945
        %v3951 = vmul.f32 %v2954, %v3950
        %v3952 = vrcp.pop %v3084
        %v3953 = vmul.f32 %v3084, %v3952
        %v3954 = vsub.f32 1.0, %v3953
        %v3955 = vmul.f32 %v3952, %v3954
        %v3956 = vadd.f32 %v3952, %v3955
        %vm3957 = vweird.f32 %v3084
        %vm3958 = vweird.f32 %v3952
        %vm3959 = vmor %vm3957, %vm3958
        %v3960 = vsel %vm3959, %v3952, %v3956
        %v3961 = vand.u32 2147483647, %v3084
        %vm3962 = vcmp.eq.f32.partialorder %v3961, 8.507059e+37
        %v3963 = vand.u32 %v3084, 2147483648
        %v3964 = vor.u32 1.1754944e-38, %v3963
        %v3965 = vsel %vm3962, %v3964, %v3960
        %v3966 = vmul.f32 %v2956, %v3965
        %v3967 = vrcp.pop %v3086
        %v3968 = vmul.f32 %v3086, %v3967
        %v3969 = vsub.f32 1.0, %v3968
        %v3970 = vmul.f32 %v3967, %v3969
        %v3971 = vadd.f32 %v3967, %v3970
        %vm3972 = vweird.f32 %v3086
        %vm3973 = vweird.f32 %v3967
        %vm3974 = vmor %vm3972, %vm3973
        %v3975 = vsel %vm3974, %v3967, %v3971
        %v3976 = vand.u32 2147483647, %v3086
        %vm3977 = vcmp.eq.f32.partialorder %v3976, 8.507059e+37
        %v3978 = vand.u32 %v3086, 2147483648
        %v3979 = vor.u32 1.1754944e-38, %v3978
        %v3980 = vsel %vm3977, %v3979, %v3975
        %v3981 = vmul.f32 %v2958, %v3980
        %v3982 = vrcp.pop %v3088
        %v3983 = vmul.f32 %v3088, %v3982
        %v3984 = vsub.f32 1.0, %v3983
        %v3985 = vmul.f32 %v3982, %v3984
        %v3986 = vadd.f32 %v3982, %v3985
        %vm3987 = vweird.f32 %v3088
        %vm3988 = vweird.f32 %v3982
        %vm3989 = vmor %vm3987, %vm3988
        %v3990 = vsel %vm3989, %v3982, %v3986
        %v3991 = vand.u32 2147483647, %v3088
        %vm3992 = vcmp.eq.f32.partialorder %v3991, 8.507059e+37
        %v3993 = vand.u32 %v3088, 2147483648
        %v3994 = vor.u32 1.1754944e-38, %v3993
        %v3995 = vsel %vm3992, %v3994, %v3990
        %v3996 = vmul.f32 %v2960, %v3995
        %v3997 = vrcp.pop %v3090
        %v3998 = vmul.f32 %v3090, %v3997
        %v3999 = vsub.f32 1.0, %v3998
        %v4000 = vmul.f32 %v3997, %v3999
        %v4001 = vadd.f32 %v3997, %v4000
        %vm4002 = vweird.f32 %v3090
        %vm4003 = vweird.f32 %v3997
        %vm4004 = vmor %vm4002, %vm4003
        %v4005 = vsel %vm4004, %v3997, %v4001
        %v4006 = vand.u32 2147483647, %v3090
        %vm4007 = vcmp.eq.f32.partialorder %v4006, 8.507059e+37
        %v4008 = vand.u32 %v3090, 2147483648
        %v4009 = vor.u32 1.1754944e-38, %v4008
        %v4010 = vsel %vm4007, %v4009, %v4005
        %v4011 = vmul.f32 %v2962, %v4010
        %v4012 = vrcp.pop %v3092
        %v4013 = vmul.f32 %v3092, %v4012
        %v4014 = vsub.f32 1.0, %v4013
        %v4015 = vmul.f32 %v4012, %v4014
        %v4016 = vadd.f32 %v4012, %v4015
        %vm4017 = vweird.f32 %v3092
        %vm4018 = vweird.f32 %v4012
        %vm4019 = vmor %vm4017, %vm4018
        %v4020 = vsel %vm4019, %v4012, %v4016
        %v4021 = vand.u32 2147483647, %v3092
        %vm4022 = vcmp.eq.f32.partialorder %v4021, 8.507059e+37
        %v4023 = vand.u32 %v3092, 2147483648
        %v4024 = vor.u32 1.1754944e-38, %v4023
        %v4025 = vsel %vm4022, %v4024, %v4020
        %v4026 = vmul.f32 %v2964, %v4025
        %v4027 = vrcp.pop %v3094
        %v4028 = vmul.f32 %v3094, %v4027
        %v4029 = vsub.f32 1.0, %v4028
        %v4030 = vmul.f32 %v4027, %v4029
        %v4031 = vadd.f32 %v4027, %v4030
        %vm4032 = vweird.f32 %v3094
        %vm4033 = vweird.f32 %v4027
        %vm4034 = vmor %vm4032, %vm4033
        %v4035 = vsel %vm4034, %v4027, %v4031
        %v4036 = vand.u32 2147483647, %v3094
        %vm4037 = vcmp.eq.f32.partialorder %v4036, 8.507059e+37
        %v4038 = vand.u32 %v3094, 2147483648
        %v4039 = vor.u32 1.1754944e-38, %v4038
        %v4040 = vsel %vm4037, %v4039, %v4035
        %v4041 = vmul.f32 %v2966, %v4040
        %v4042 = vrcp.pop %v3096
        %v4043 = vmul.f32 %v3096, %v4042
        %v4044 = vsub.f32 1.0, %v4043
        %v4045 = vmul.f32 %v4042, %v4044
        %v4046 = vadd.f32 %v4042, %v4045
        %vm4047 = vweird.f32 %v3096
        %vm4048 = vweird.f32 %v4042
        %vm4049 = vmor %vm4047, %vm4048
        %v4050 = vsel %vm4049, %v4042, %v4046
        %v4051 = vand.u32 2147483647, %v3096
        %vm4052 = vcmp.eq.f32.partialorder %v4051, 8.507059e+37
        %v4053 = vand.u32 %v3096, 2147483648
        %v4054 = vor.u32 1.1754944e-38, %v4053
        %v4055 = vsel %vm4052, %v4054, %v4050
        %v4056 = vmul.f32 %v2968, %v4055
        %v4057 = vsel %vm2584, %v3111, %v2423
        %v4058 = vsel %vm2584, %v3126, %v2425
        %v4059 = vsel %vm2584, %v3141, %v2428
        %v4060 = vsel %vm2584, %v3156, %v2430
        %v4061 = vsel %vm2584, %v3171, %v2433
        %v4062 = vsel %vm2584, %v3186, %v2435
        %v4063 = vsel %vm2584, %v3201, %v2438
        %v4064 = vsel %vm2584, %v3216, %v2440
        %v4065 = vsel %vm2584, %v3231, %v2443
        %v4066 = vsel %vm2584, %v3246, %v2445
        %v4067 = vsel %vm2584, %v3261, %v2448
        %v4068 = vsel %vm2584, %v3276, %v2450
        %v4069 = vsel %vm2584, %v3291, %v2453
        %v4070 = vsel %vm2584, %v3306, %v2455
        %v4071 = vsel %vm2584, %v3321, %v2458
        %v4072 = vsel %vm2584, %v3336, %v2460
        %v4073 = vsel %vm2584, %v3351, %v2463
        %v4074 = vsel %vm2584, %v3366, %v2465
        %v4075 = vsel %vm2584, %v3381, %v2468
        %v4076 = vsel %vm2584, %v3396, %v2470
        %v4077 = vsel %vm2584, %v3411, %v2473
        %v4078 = vsel %vm2584, %v3426, %v2475
        %v4079 = vsel %vm2584, %v3441, %v2478
        %v4080 = vsel %vm2584, %v3456, %v2480
        %v4081 = vsel %vm2584, %v3471, %v2483
        %v4082 = vsel %vm2584, %v3486, %v2485
        %v4083 = vsel %vm2584, %v3501, %v2488
        %v4084 = vsel %vm2584, %v3516, %v2490
        %v4085 = vsel %vm2584, %v3531, %v2493
        %v4086 = vsel %vm2584, %v3546, %v2495
        %v4087 = vsel %vm2584, %v3561, %v2498
        %v4088 = vsel %vm2584, %v3576, %v2500
        %v4089 = vsel %vm2584, %v3591, %v2503
        %v4090 = vsel %vm2584, %v3606, %v2505
        %v4091 = vsel %vm2584, %v3621, %v2508
        %v4092 = vsel %vm2584, %v3636, %v2510
        %v4093 = vsel %vm2584, %v3651, %v2513
        %v4094 = vsel %vm2584, %v3666, %v2515
        %v4095 = vsel %vm2584, %v3681, %v2518
        %v4096 = vsel %vm2584, %v3696, %v2520
        %v4097 = vsel %vm2584, %v3711, %v2523
        %v4098 = vsel %vm2584, %v3726, %v2525
        %v4099 = vsel %vm2584, %v3741, %v2528
        %v4100 = vsel %vm2584, %v3756, %v2530
        %v4101 = vsel %vm2584, %v3771, %v2533
        %v4102 = vsel %vm2584, %v3786, %v2535
        %v4103 = vsel %vm2584, %v3801, %v2538
        %v4104 = vsel %vm2584, %v3816, %v2540
        %v4105 = vsel %vm2584, %v3831, %v2543
        %v4106 = vsel %vm2584, %v3846, %v2545
        %v4107 = vsel %vm2584, %v3861, %v2548
        %v4108 = vsel %vm2584, %v3876, %v2550
        %v4109 = vsel %vm2584, %v3891, %v2553
        %v4110 = vsel %vm2584, %v3906, %v2555
        %v4111 = vsel %vm2584, %v3921, %v2558
        %v4112 = vsel %vm2584, %v3936, %v2560
        %v4113 = vsel %vm2584, %v3951, %v2563
        %v4114 = vsel %vm2584, %v3966, %v2565
        %v4115 = vsel %vm2584, %v3981, %v2568
        %v4116 = vsel %vm2584, %v3996, %v2570
        %v4117 = vsel %vm2584, %v4011, %v2573
        %v4118 = vsel %vm2584, %v4026, %v2575
        %v4119 = vsel %vm2584, %v4041, %v2578
        %v4120 = vsel %vm2584, %v4056, %v2580
        %v4121 = vpack.c.bf16 %v4057, %v4057
        %v4122 = vpack.c.bf16 %v4058, %v4058
        %v4123 = vpack.c.bf16 %v4059, %v4059
        %v4124 = vpack.c.bf16 %v4060, %v4060
        %v4125 = vpack.c.bf16 %v4061, %v4061
        %v4126 = vpack.c.bf16 %v4062, %v4062
        %v4127 = vpack.c.bf16 %v4063, %v4063
        %v4128 = vpack.c.bf16 %v4064, %v4064
        %v4129 = vpack.c.bf16 %v4065, %v4065
        %v4130 = vpack.c.bf16 %v4066, %v4066
        %v4131 = vpack.c.bf16 %v4067, %v4067
        %v4132 = vpack.c.bf16 %v4068, %v4068
        %v4133 = vpack.c.bf16 %v4069, %v4069
        %v4134 = vpack.c.bf16 %v4070, %v4070
        %v4135 = vpack.c.bf16 %v4071, %v4071
        %v4136 = vpack.c.bf16 %v4072, %v4072
        %v4137 = vpack.c.bf16 %v4073, %v4073
        %v4138 = vpack.c.bf16 %v4074, %v4074
        %v4139 = vpack.c.bf16 %v4075, %v4075
        %v4140 = vpack.c.bf16 %v4076, %v4076
        %v4141 = vpack.c.bf16 %v4077, %v4077
        %v4142 = vpack.c.bf16 %v4078, %v4078
        %v4143 = vpack.c.bf16 %v4079, %v4079
        %v4144 = vpack.c.bf16 %v4080, %v4080
        %v4145 = vpack.c.bf16 %v4081, %v4081
        %v4146 = vpack.c.bf16 %v4082, %v4082
        %v4147 = vpack.c.bf16 %v4083, %v4083
        %v4148 = vpack.c.bf16 %v4084, %v4084
        %v4149 = vpack.c.bf16 %v4085, %v4085
        %v4150 = vpack.c.bf16 %v4086, %v4086
        %v4151 = vpack.c.bf16 %v4087, %v4087
        %v4152 = vpack.c.bf16 %v4088, %v4088
        %v4153 = vpack.c.bf16 %v4089, %v4089
        %v4154 = vpack.c.bf16 %v4090, %v4090
        %v4155 = vpack.c.bf16 %v4091, %v4091
        %v4156 = vpack.c.bf16 %v4092, %v4092
        %v4157 = vpack.c.bf16 %v4093, %v4093
        %v4158 = vpack.c.bf16 %v4094, %v4094
        %v4159 = vpack.c.bf16 %v4095, %v4095
        %v4160 = vpack.c.bf16 %v4096, %v4096
        %v4161 = vpack.c.bf16 %v4097, %v4097
        %v4162 = vpack.c.bf16 %v4098, %v4098
        %v4163 = vpack.c.bf16 %v4099, %v4099
        %v4164 = vpack.c.bf16 %v4100, %v4100
        %v4165 = vpack.c.bf16 %v4101, %v4101
        %v4166 = vpack.c.bf16 %v4102, %v4102
        %v4167 = vpack.c.bf16 %v4103, %v4103
        %v4168 = vpack.c.bf16 %v4104, %v4104
        %v4169 = vpack.c.bf16 %v4105, %v4105
        %v4170 = vpack.c.bf16 %v4106, %v4106
        %v4171 = vpack.c.bf16 %v4107, %v4107
        %v4172 = vpack.c.bf16 %v4108, %v4108
        %v4173 = vpack.c.bf16 %v4109, %v4109
        %v4174 = vpack.c.bf16 %v4110, %v4110
        %v4175 = vpack.c.bf16 %v4111, %v4111
        %v4176 = vpack.c.bf16 %v4112, %v4112
        %v4177 = vpack.c.bf16 %v4113, %v4113
        %v4178 = vpack.c.bf16 %v4114, %v4114
        %v4179 = vpack.c.bf16 %v4115, %v4115
        %v4180 = vpack.c.bf16 %v4116, %v4116
        %v4181 = vpack.c.bf16 %v4117, %v4117
        %v4182 = vpack.c.bf16 %v4118, %v4118
        %v4183 = vpack.c.bf16 %v4119, %v4119
        %v4184 = vpack.c.bf16 %v4120, %v4120
        %4185 = vst [vmem:[%s284] sm:$0xf] %v4121
        %4186 = vst [vmem:[%s284 + $0x4] sm:$0xf] %v4122
        %4187 = vst [vmem:[%s284 + $0x8] sm:$0xf] %v4123
        %4188 = vst [vmem:[%s284 + $0xc] sm:$0xf] %v4124
        %4189 = vst [vmem:[%s284 + $0x10] sm:$0xf] %v4125
        %4190 = vst [vmem:[%s284 + $0x14] sm:$0xf] %v4126
        %4191 = vst [vmem:[%s284 + $0x18] sm:$0xf] %v4127
        %4192 = vst [vmem:[%s284 + $0x1c] sm:$0xf] %v4128
        %4193 = vst [vmem:[%s284 + $0x20] sm:$0xf] %v4129
        %4194 = vst [vmem:[%s284 + $0x24] sm:$0xf] %v4130
        %4195 = vst [vmem:[%s284 + $0x28] sm:$0xf] %v4131
        %4196 = vst [vmem:[%s284 + $0x2c] sm:$0xf] %v4132
        %4197 = vst [vmem:[%s284 + $0x30] sm:$0xf] %v4133
        %4198 = vst [vmem:[%s284 + $0x34] sm:$0xf] %v4134
        %4199 = vst [vmem:[%s284 + $0x38] sm:$0xf] %v4135
        %4200 = vst [vmem:[%s284 + $0x3c] sm:$0xf] %v4136
        %4201 = vst [vmem:[%s284 + $0x40] sm:$0xf] %v4137
        %4202 = vst [vmem:[%s284 + $0x44] sm:$0xf] %v4138
        %4203 = vst [vmem:[%s284 + $0x48] sm:$0xf] %v4139
        %4204 = vst [vmem:[%s284 + $0x4c] sm:$0xf] %v4140
        %4205 = vst [vmem:[%s284 + $0x50] sm:$0xf] %v4141
        %4206 = vst [vmem:[%s284 + $0x54] sm:$0xf] %v4142
        %4207 = vst [vmem:[%s284 + $0x58] sm:$0xf] %v4143
        %4208 = vst [vmem:[%s284 + $0x5c] sm:$0xf] %v4144
        %4209 = vst [vmem:[%s284 + $0x60] sm:$0xf] %v4145
        %4210 = vst [vmem:[%s284 + $0x64] sm:$0xf] %v4146
        %4211 = vst [vmem:[%s284 + $0x68] sm:$0xf] %v4147
        %4212 = vst [vmem:[%s284 + $0x6c] sm:$0xf] %v4148
        %4213 = vst [vmem:[%s284 + $0x70] sm:$0xf] %v4149
        %4214 = vst [vmem:[%s284 + $0x74] sm:$0xf] %v4150
        %4215 = vst [vmem:[%s284 + $0x78] sm:$0xf] %v4151
        %4216 = vst [vmem:[%s284 + $0x7c] sm:$0xf] %v4152
        %4217 = vst [vmem:[%s284 + $0x80] sm:$0xf] %v4153
        %4218 = vst [vmem:[%s284 + $0x84] sm:$0xf] %v4154
        %4219 = vst [vmem:[%s284 + $0x88] sm:$0xf] %v4155
        %4220 = vst [vmem:[%s284 + $0x8c] sm:$0xf] %v4156
        %4221 = vst [vmem:[%s284 + $0x90] sm:$0xf] %v4157
        %4222 = vst [vmem:[%s284 + $0x94] sm:$0xf] %v4158
        %4223 = vst [vmem:[%s284 + $0x98] sm:$0xf] %v4159
        %4224 = vst [vmem:[%s284 + $0x9c] sm:$0xf] %v4160
        %4225 = vst [vmem:[%s284 + $0xa0] sm:$0xf] %v4161
        %4226 = vst [vmem:[%s284 + $0xa4] sm:$0xf] %v4162
        %4227 = vst [vmem:[%s284 + $0xa8] sm:$0xf] %v4163
        %4228 = vst [vmem:[%s284 + $0xac] sm:$0xf] %v4164
        %4229 = vst [vmem:[%s284 + $0xb0] sm:$0xf] %v4165
        %4230 = vst [vmem:[%s284 + $0xb4] sm:$0xf] %v4166
        %4231 = vst [vmem:[%s284 + $0xb8] sm:$0xf] %v4167
        %4232 = vst [vmem:[%s284 + $0xbc] sm:$0xf] %v4168
        %4233 = vst [vmem:[%s284 + $0xc0] sm:$0xf] %v4169
        %4234 = vst [vmem:[%s284 + $0xc4] sm:$0xf] %v4170
        %4235 = vst [vmem:[%s284 + $0xc8] sm:$0xf] %v4171
        %4236 = vst [vmem:[%s284 + $0xcc] sm:$0xf] %v4172
        %4237 = vst [vmem:[%s284 + $0xd0] sm:$0xf] %v4173
        %4238 = vst [vmem:[%s284 + $0xd4] sm:$0xf] %v4174
        %4239 = vst [vmem:[%s284 + $0xd8] sm:$0xf] %v4175
        %4240 = vst [vmem:[%s284 + $0xdc] sm:$0xf] %v4176
        %4241 = vst [vmem:[%s284 + $0xe0] sm:$0xf] %v4177
        %4242 = vst [vmem:[%s284 + $0xe4] sm:$0xf] %v4178
        %4243 = vst [vmem:[%s284 + $0xe8] sm:$0xf] %v4179
        %4244 = vst [vmem:[%s284 + $0xec] sm:$0xf] %v4180
        %4245 = vst [vmem:[%s284 + $0xf0] sm:$0xf] %v4181
        %4246 = vst [vmem:[%s284 + $0xf4] sm:$0xf] %v4182
        %4247 = vst [vmem:[%s284 + $0xf8] sm:$0xf] %v4183
        %4248 = vst [vmem:[%s284 + $0xfc] sm:$0xf] %v4184
        %s4249 = sand.u32 %s181, 1
        %s4250 = scalar_lea.sflag [#allocation3], %s4249
        %s4251 = sand.u32 %s181, 1
        %s4252 = smul.addr %s4251, 256
        %s4253 = scalar_lea.vmem [#allocation2], %s4252
        // Predicated region
        $region49: #{tpu_custom_call.1} parent=47 // pred_check
          %p4254 = pneg %p191
        $region50: #{tpu_custom_call.1} parent=47 // pred_check_branch
          %4256 = sbr.rel (%p4254) target = $region52
        $region51: #{tpu_custom_call.1} parent=47 // pred_region
          %s4257 = smul.u32 64, %s21
          %s4258 = ssub.s32 125, %s4257
          %p4259 = scmp.lt.s32.totalorder %s4258, 64
          %s4260 = scalar_select %p4259, %s4258, 64
          %s4261 = smul.u32 4, %s4260
          %s4262 = ssub.s32 256, %s4261
          %s4263 = sshll.u32 %s4262, 4
          %4264 = vsyncadd %s4250, %s4263
          %p4265 = scmp.ne.s32.totalorder 0, %s4261
          %s4266 = smul.addr %s4257, 4
          %s4267 = scalar_lea.hbm %s7, %s4266
          %s4268 = smul.u32 4, %s4260
          %s4269 = sshll.u32 %s4253, 4
          %s4270 = int_to_ptr.vmem [resolvable:$true] %s4269
          %s4271 = sshll.u32 %s4267, 4
          %s4272 = int_to_ptr.hbm [resolvable:$true] %s4271
          %s4273 = sshll.u32 %s4268, 4
          %4277 = dma.vmem_to_hbm [thread:$0]  (%p4265), %s4270, %s4273, %s4272, %s4250, 64, 64, 4
        $region52: #{tpu_custom_call.1} parent=47 // pred_fallthru
          _
      $region48: #{tpu_custom_call.1} parent=5 // pred_fallthru
        _
      %p4278 = scmp.le.s32.totalorder 2, %s16
      // Predicated region
      $region53: #{tpu_custom_call.1} parent=5 // pred_check
        %p4279 = pneg %p4278
      $region54: #{tpu_custom_call.1} parent=5 // pred_check_branch
        %4281 = sbr.rel (%p4279) target = $region56
      $region55: #{tpu_custom_call.1} parent=5 // pred_region
        %s4282 = ssub.s32 %s16, 2
        // Predicated region
        $region57: #{tpu_custom_call.1} parent=55 // pred_check
          %p4283 = pneg %p197
        $region58: #{tpu_custom_call.1} parent=55 // pred_check_branch
          %4285 = sbr.rel (%p4283) target = $region60
        $region59: #{tpu_custom_call.1} parent=55 // pred_region
          %s4286 = sand.u32 %s182, 1
          %s4287 = scalar_lea.sflag [#allocation3], %s4286
          %s4288 = sand.u32 %s182, 1
          %s4289 = smul.addr %s4288, 256
          %s4290 = scalar_lea.vmem [#allocation2], %s4289
          %4292 = dma.done %s4287, 4096
        $region60: #{tpu_custom_call.1} parent=55 // pred_fallthru
          _
      $region56: #{tpu_custom_call.1} parent=5 // pred_fallthru
        _
    $region6: #{tpu_custom_call.1} parent=1 // loop_footer
      %s20 = sadd.s32 1, %s16
    $region7: #{tpu_custom_call.1} parent=1 // loop_footer_branch
      %15 = sbr.rel target = $region3
    $region8: #{tpu_custom_call.1} parent=1 // loop_exit
      _
    %4293 = vsyncpa [#allocation3], 1
    %s4294 = scalar_lea.sflag [#allocation3], 1
    %4295 = vsyncpa %s4294, 1

</llo_original>
